<compile_context>
chip_gen: v7x
topology: tpu7x:2x2x1
jax: 0.10.0
libtpu: 0.0.40
codegen_flags: <defaults>
</compile_context>

<pallas_src>
import functools

import jax
import jax.numpy as jnp
from jax.experimental import pallas as pl
from jax.experimental.pallas import tpu as pltpu

EPS = 1e-5
MATMUL_DTYPE = jnp.float32  # set to jnp.bfloat16 for peak MXU throughput


# --------------------------------------------------------------------------- #
# Kernels
# --------------------------------------------------------------------------- #
def _make_conv_kernel(apply_bn):
    """3x3 'same' conv over one row tile (NHWC layout, channels on lanes).

    refs (apply_bn=False): x, halo, w, h_out, stats_out
    refs (apply_bn=True):  x, halo, w, scale, shift, h_out, stats_out
      x     : (TH, W, Cin)      current row tile
      halo  : (2, W, Cin)       row above / row below the tile (zeros at the
                                image border)
      w     : (3, 3*Cin, Cout)  weights regrouped as w[dx] = concat_dy w[dy,dx]
      scale/shift : (1, 1, Cin) folded BN of the *previous* conv (pass 2 only)
      h_out : (TH, W, Cout)     raw conv output (pre-BN)
      stats_out : (2, Cout)     per-tile [sum, sum^2] over TH*W pixels
    """

    def kernel(*refs):
        if apply_bn:
            x_ref, halo_ref, w_ref, scale_ref, shift_ref, h_ref, stats_ref = refs
        else:
            x_ref, halo_ref, w_ref, h_ref, stats_ref = refs

        TH, W, _ = x_ref.shape
        Cout = w_ref.shape[-1]

        x = x_ref[...]
        top = halo_ref[0:1, :, :]
        bot = halo_ref[1:2, :, :]

        if apply_bn:
            # Fused BN+ReLU of the previous conv's output (one FMA + max).
            scale = scale_ref[...]
            shift = shift_ref[...]
            act = lambda v: jnp.maximum(v * scale + shift, 0.0)
            x = act(x)
            # Halo rows are activated too; image-border halos must remain
            # exactly zero (conv zero padding sits *after* the activation), so
            # re-zero them with a per-tile scalar mask.
            t_id = pl.program_id(1)
            top = act(top) * (t_id > 0).astype(jnp.float32)
            bot = act(bot) * (t_id < pl.num_programs(1) - 1).astype(jnp.float32)

        # dy-shifted row views: cheap leading-axis concats, no padded scratch.
        up = jnp.concatenate([top, x[:TH - 1]], axis=0)    # rows y-1
        down = jnp.concatenate([x[1:], bot], axis=0)       # rows y+1

        # Fold the three dy taps into the contraction: K = 3*Cin.
        x3 = jnp.concatenate([up, x, down], axis=-1)
        x3 = x3.reshape(TH * W, x3.shape[-1]).astype(MATMUL_DTYPE)

        w = w_ref[...].astype(MATMUL_DTYPE)                # single hoisted load

        def tap(dx):
            p = jnp.dot(x3, w[dx], preferred_element_type=jnp.float32)
            return p.reshape(TH, W, Cout)

        acc = tap(1)                                       # dx = 1: no shift
        zcol = jnp.zeros((TH, 1, Cout), jnp.float32)
        # dx = 0 reads column x-1 -> shift the result right, zero at x = 0
        p0 = tap(0)
        acc = acc + jnp.concatenate([zcol, p0[:, :W - 1, :]], axis=1)
        # dx = 2 reads column x+1 -> shift the result left, zero at x = W-1
        p2 = tap(2)
        acc = acc + jnp.concatenate([p2[:, 1:, :], zcol], axis=1)

        h_ref[...] = acc

        # One-pass BN partials: per-channel sum and sum of squares (f32).
        flat = acc.reshape(TH * W, Cout)
        s = jnp.sum(flat, axis=0, keepdims=True)
        ss = jnp.sum(flat * flat, axis=0, keepdims=True)
        stats_ref[...] = jnp.concatenate([s, ss], axis=0)

    return kernel


def _bn_relu_kernel(h_ref, scale_ref, shift_ref, o_ref):
    o_ref[...] = jnp.maximum(h_ref[...] * scale_ref[...] + shift_ref[...], 0.0)


# --------------------------------------------------------------------------- #
# Wrapper helpers
# --------------------------------------------------------------------------- #
def _row_halos(t, tile_h):
    """(N, H, W, C) -> (N, HT, 2, W, C): the row above / below each row tile.

    Image-border entries are zeros (= the conv's zero padding). Interior rows
    are raw; any required activation happens inside the consuming kernel.
    """
    N, H, W, C = t.shape
    HT = H // tile_h
    zero = jnp.zeros((N, 1, W, C), t.dtype)
    if HT == 1:
        top, bot = zero, zero
    else:
        above = t[:, tile_h - 1:H - 1:tile_h]   # row above tiles 1..HT-1
        below = t[:, tile_h::tile_h]            # row below tiles 0..HT-2
        top = jnp.concatenate([zero, above], axis=1)
        bot = jnp.concatenate([below, zero], axis=1)
    return jnp.stack([top, bot], axis=2)


def _conv_pass(inp, w_r, scale, shift, tile_h):
    """One 3x3 'same' conv over NHWC `inp`, tiled over (batch, H/tile_h).

    If scale/shift are given, y = relu(x*scale + shift) (the previous layer's
    folded BN + ReLU) is fused onto the input inside the kernel.
    Returns (raw conv output, per-tile (sum, sum^2) channel stats).
    """
    N, H, W, C = inp.shape
    Cout = w_r.shape[-1]
    HT = H // tile_h
    apply_bn = scale is not None

    halos = _row_halos(inp, tile_h)

    x_spec = pl.BlockSpec((None, tile_h, W, C), lambda n, t: (n, t, 0, 0))
    halo_spec = pl.BlockSpec((None, None, 2, W, C), lambda n, t: (n, t, 0, 0, 0))
    w_spec = pl.BlockSpec(w_r.shape, lambda n, t: (0, 0, 0))
    in_specs = [x_spec, halo_spec, w_spec]
    operands = [inp, halos, w_r]
    if apply_bn:
        cspec = pl.BlockSpec((1, 1, C), lambda n, t: (0, 0, 0))
        in_specs += [cspec, cspec]
        operands += [scale.reshape(1, 1, C), shift.reshape(1, 1, C)]

    h, stats = pl.pallas_call(
        _make_conv_kernel(apply_bn),
        grid=(N, HT),
        in_specs=in_specs,
        out_specs=(
            pl.BlockSpec((None, tile_h, W, Cout), lambda n, t: (n, t, 0, 0)),
            pl.BlockSpec((None, None, 2, Cout), lambda n, t: (n, t, 0, 0)),
        ),
        out_shape=(
            jax.ShapeDtypeStruct((N, H, W, Cout), jnp.float32),
            jax.ShapeDtypeStruct((N, HT, 2, Cout), jnp.float32),
        ),
        compiler_params=pltpu.CompilerParams(
            dimension_semantics=("parallel", "parallel"),
            vmem_limit_bytes=32 * 1024 * 1024,
        ),
    )(*operands)
    return h, stats


def _bn_relu_pass(h, scale, shift, tile_h):
    """Elementwise BN+ReLU, aliased in place onto the conv2 output buffer."""
    N, H, W, C = h.shape
    HT = H // tile_h
    tile_spec = pl.BlockSpec((None, tile_h, W, C), lambda n, t: (n, t, 0, 0))
    cspec = pl.BlockSpec((1, 1, C), lambda n, t: (0, 0, 0))
    return pl.pallas_call(
        _bn_relu_kernel,
        grid=(N, HT),
        in_specs=[tile_spec, cspec, cspec],
        out_specs=tile_spec,
        out_shape=jax.ShapeDtypeStruct((N, H, W, C), jnp.float32),
        input_output_aliases={0: 0},   # reuse h's HBM buffer for the output
        compiler_params=pltpu.CompilerParams(
            dimension_semantics=("parallel", "parallel"),
            vmem_limit_bytes=32 * 1024 * 1024,
        ),
    )(h, scale.reshape(1, 1, C), shift.reshape(1, 1, C))


def _bn_fold(stats, gamma, beta, count):
    """Per-tile (sum, sum^2) -> folded per-channel (scale, shift) for x*scale+shift.

    Matches PyTorch training-mode BatchNorm2d: batch stats over (N, H, W),
    biased variance, eps=1e-5 (one-pass E[x^2] - mean^2 in f32).
    """
    s = jnp.sum(stats[:, :, 0, :], axis=(0, 1))
    ss = jnp.sum(stats[:, :, 1, :], axis=(0, 1))
    mean = s / count
    var = jnp.maximum(ss / count - mean * mean, 0.0)
    scale = gamma * jax.lax.rsqrt(var + EPS)
    shift = beta - mean * scale
    return scale, shift


@functools.partial(jax.jit, static_argnames=("tile_h",))
def double_conv(x_nchw, w1, g1, b1, w2, g2, b2, tile_h=None):
    """x_nchw: (N, Cin, H, W) f32. Weights: (3, 3, cin, cout). Returns (N, Cout, H, W)."""
    N, Cin, H, W = x_nchw.shape
    Cmid = w1.shape[-1]
    Cout = w2.shape[-1]

    if tile_h is None:
        # Row-tile heuristic; biggest tile that keeps VMEM bounded. Re-derive
        # per generation (v7x has 64 MiB VMEM -> roughly half the v6e tile for
        # large channel counts).
        tile_h = H
        for cand in (32, 16, 8):
            if H % cand == 0:
                tile_h = cand
                break
    assert H % tile_h == 0, "H must be divisible by tile_h"

    # Glue: NCHW -> NHWC (channels on lanes) and one-time weight regrouping so
    # the kernel does a single (3*Cin, Cout) matmul per dx tap.
    x = jnp.transpose(x_nchw, (0, 2, 3, 1)).astype(jnp.float32)
    w1r = jnp.transpose(w1, (1, 0, 2, 3)).reshape(3, 3 * Cin, Cmid)
    w2r = jnp.transpose(w2, (1, 0, 2, 3)).reshape(3, 3 * Cmid, Cout)

    count = N * H * W

    h1, st1 = _conv_pass(x, w1r, None, None, tile_h)        # conv1 + stats
    scale1, shift1 = _bn_fold(st1, g1, b1, count)            # fold BN1

    h2, st2 = _conv_pass(h1, w2r, scale1, shift1, tile_h)    # BN1+ReLU fused, conv2 + stats
    scale2, shift2 = _bn_fold(st2, g2, b2, count)            # fold BN2

    y = _bn_relu_pass(h2, scale2, shift2, tile_h)            # BN2 + ReLU (in place)

    return jnp.transpose(y, (0, 3, 1, 2))


# --------------------------------------------------------------------------- #
# Pure-JAX reference (PyTorch DoubleConv training-mode forward)
# --------------------------------------------------------------------------- #
def _reference(x_nchw, w1, g1, b1, w2, g2, b2):
    def conv(x, w):  # w: (kh, kw, cin, cout) -> OIHW
        w_oihw = jnp.transpose(w, (3, 2, 0, 1))
        return jax.lax.conv_general_dilated(
            x, w_oihw, window_strides=(1, 1), padding=((1, 1), (1, 1)),
            dimension_numbers=("NCHW", "OIHW", "NCHW"))

    def bn_relu(h, g, b):
        mean = jnp.mean(h, axis=(0, 2, 3), keepdims=True)
        var = jnp.mean((h - mean) ** 2, axis=(0, 2, 3), keepdims=True)
        y = (h - mean) * jax.lax.rsqrt(var + EPS)
        y = y * g.reshape(1, -1, 1, 1) + b.reshape(1, -1, 1, 1)
        return jnp.maximum(y, 0.0)

    h = bn_relu(conv(x_nchw, w1), g1, b1)
    return bn_relu(conv(h, w2), g2, b2)


if __name__ == "__main__":
    # DoubleConv(in_channels=4, out_channels=8) -> mid_channels = 8
    N, Cin, Cmid, Cout, H, W = 2, 4, 8, 8, 16, 16

    key = jax.random.PRNGKey(0)
    kx, kw1, kw2 = jax.random.split(key, 3)

    x = jax.random.normal(kx, (N, Cin, H, W), dtype=jnp.float32)
    # deterministic synthetic weights (kh, kw, cin, cout); Conv2d has bias=False
    w1 = 0.1 * jax.random.normal(kw1, (3, 3, Cin, Cmid), dtype=jnp.float32)
    w2 = 0.1 * jax.random.normal(kw2, (3, 3, Cmid, Cout), dtype=jnp.float32)
    # BatchNorm affine params at PyTorch default init (gamma=1, beta=0)
    g1 = jnp.ones((Cmid,), jnp.float32)
    b1 = jnp.zeros((Cmid,), jnp.float32)
    g2 = jnp.ones((Cout,), jnp.float32)
    b2 = jnp.zeros((Cout,), jnp.float32)

    # tile_h=8 -> 2 row tiles per image: exercises the halo + pipelined path.
    out = jax.block_until_ready(
        double_conv(x, w1, g1, b1, w2, g2, b2, tile_h=8))

    ref = jax.block_until_ready(_reference(x, w1, g1, b1, w2, g2, b2))
    assert out.shape == (N, Cout, H, W)
    assert jnp.allclose(out, ref, atol=1e-4, rtol=1e-4), float(
        jnp.max(jnp.abs(out - ref)))

    print("KERNEL_OK")
</pallas_src>

<mosaic_0001>
module attributes {stable_mosaic.version = 11 : i64} {
  func.func @kernel(%arg0: i32, %arg1: i32, %arg2: memref<1x8x16x4xf32, #tpu.memory_space<vmem>>, %arg3: memref<1x1x2x16x4xf32, #tpu.memory_space<vmem>>, %arg4: memref<3x12x8xf32, #tpu.memory_space<vmem>>, %arg5: memref<1x8x16x8xf32, #tpu.memory_space<vmem>>, %arg6: memref<1x1x2x8xf32, #tpu.memory_space<vmem>>) attributes {dimension_semantics = [#tpu.dimension_semantics<parallel>, #tpu.dimension_semantics<parallel>], iteration_bounds = array<i64: 2, 2>, scalar_prefetch = 0 : i64, scratch_operands = 0 : i64, tpu.core_type = #tpu.core_type<tc>, window_params = [{transform_indices = @transform_0, window_bounds = array<i64: 1, 8, 16, 4>}, {transform_indices = @transform_1, window_bounds = array<i64: 1, 1, 2, 16, 4>}, {pipeline_mode = #tpu.pipeline_mode<synchronous>, transform_indices = @transform_2, window_bounds = array<i64: 3, 12, 8>}, {transform_indices = @transform_3, window_bounds = array<i64: 1, 8, 16, 8>}, {transform_indices = @transform_4, window_bounds = array<i64: 1, 1, 2, 8>}]} {
    %c0 = arith.constant 0 : index
    %c0_0 = arith.constant 0 : index
    %c0_1 = arith.constant 0 : index
    %c0_2 = arith.constant 0 : index
    %0 = vector.load %arg2[%c0, %c0_0, %c0_1, %c0_2] : memref<1x8x16x4xf32, #tpu.memory_space<vmem>>, vector<1x8x16x4xf32>
    %1 = vector.shape_cast %0 : vector<1x8x16x4xf32> to vector<8x16x4xf32>
    %c0_3 = arith.constant 0 : index
    %c0_4 = arith.constant 0 : index
    %c0_5 = arith.constant 0 : index
    %c0_6 = arith.constant 0 : index
    %c0_7 = arith.constant 0 : index
    %2 = vector.load %arg3[%c0_3, %c0_4, %c0_5, %c0_6, %c0_7] : memref<1x1x2x16x4xf32, #tpu.memory_space<vmem>>, vector<1x1x1x16x4xf32>
    %3 = vector.shape_cast %2 : vector<1x1x1x16x4xf32> to vector<1x16x4xf32>
    %c0_8 = arith.constant 0 : index
    %c0_9 = arith.constant 0 : index
    %c1 = arith.constant 1 : index
    %c0_10 = arith.constant 0 : index
    %c0_11 = arith.constant 0 : index
    %4 = vector.load %arg3[%c0_8, %c0_9, %c1, %c0_10, %c0_11] : memref<1x1x2x16x4xf32, #tpu.memory_space<vmem>>, vector<1x1x1x16x4xf32>
    %5 = vector.shape_cast %4 : vector<1x1x1x16x4xf32> to vector<1x16x4xf32>
    %6 = vector.extract_strided_slice %1 {offsets = [0, 0, 0], sizes = [7, 16, 4], strides = [1, 1, 1]} : vector<8x16x4xf32> to vector<7x16x4xf32>
    %7 = tpu.concatenate %3, %6 in 0 : vector<1x16x4xf32>, vector<7x16x4xf32> -> vector<8x16x4xf32>
    %8 = vector.extract_strided_slice %1 {offsets = [1, 0, 0], sizes = [7, 16, 4], strides = [1, 1, 1]} : vector<8x16x4xf32> to vector<7x16x4xf32>
    %9 = tpu.concatenate %8, %5 in 0 : vector<7x16x4xf32>, vector<1x16x4xf32> -> vector<8x16x4xf32>
    %10 = tpu.concatenate %7, %1, %9 in 2 : vector<8x16x4xf32>, vector<8x16x4xf32>, vector<8x16x4xf32> -> vector<8x16x12xf32>
    %11 = vector.shape_cast %10 : vector<8x16x12xf32> to vector<128x12xf32>
    %c0_12 = arith.constant 0 : index
    %c0_13 = arith.constant 0 : index
    %c0_14 = arith.constant 0 : index
    %12 = vector.load %arg4[%c0_12, %c0_13, %c0_14] : memref<3x12x8xf32, #tpu.memory_space<vmem>>, vector<3x12x8xf32>
    %13 = vector.extract_strided_slice %12 {offsets = [1, 0, 0], sizes = [1, 12, 8], strides = [1, 1, 1]} : vector<3x12x8xf32> to vector<1x12x8xf32>
    %14 = vector.shape_cast %13 : vector<1x12x8xf32> to vector<12x8xf32>
    %cst = arith.constant dense<0.000000e+00> : vector<128x8xf32>
    %15 = tpu.matmul %11, %14, %cst {dimension_numbers = #tpu.dot_dimension_numbers<[1], [0], [0], [1], [0, 0, 1, 1], [], []>} : vector<128x12xf32>, vector<12x8xf32>, vector<128x8xf32> -> vector<128x8xf32>
    %16 = vector.shape_cast %15 : vector<128x8xf32> to vector<8x16x8xf32>
    %cst_15 = arith.constant 0.000000e+00 : f32
    %17 = vector.broadcast %cst_15 : f32 to vector<8x1x8xf32>
    %18 = vector.extract_strided_slice %12 {offsets = [0, 0, 0], sizes = [1, 12, 8], strides = [1, 1, 1]} : vector<3x12x8xf32> to vector<1x12x8xf32>
    %19 = vector.shape_cast %18 : vector<1x12x8xf32> to vector<12x8xf32>
    %cst_16 = arith.constant dense<0.000000e+00> : vector<128x8xf32>
    %20 = tpu.matmul %11, %19, %cst_16 {dimension_numbers = #tpu.dot_dimension_numbers<[1], [0], [0], [1], [0, 0, 1, 1], [], []>} : vector<128x12xf32>, vector<12x8xf32>, vector<128x8xf32> -> vector<128x8xf32>
    %21 = vector.shape_cast %20 : vector<128x8xf32> to vector<8x16x8xf32>
    %22 = vector.extract_strided_slice %21 {offsets = [0, 0, 0], sizes = [8, 15, 8], strides = [1, 1, 1]} : vector<8x16x8xf32> to vector<8x15x8xf32>
    %23 = tpu.concatenate %17, %22 in 1 : vector<8x1x8xf32>, vector<8x15x8xf32> -> vector<8x16x8xf32>
    %24 = arith.addf %16, %23 : vector<8x16x8xf32>
    %25 = vector.extract_strided_slice %12 {offsets = [2, 0, 0], sizes = [1, 12, 8], strides = [1, 1, 1]} : vector<3x12x8xf32> to vector<1x12x8xf32>
    %26 = vector.shape_cast %25 : vector<1x12x8xf32> to vector<12x8xf32>
    %cst_17 = arith.constant dense<0.000000e+00> : vector<128x8xf32>
    %27 = tpu.matmul %11, %26, %cst_17 {dimension_numbers = #tpu.dot_dimension_numbers<[1], [0], [0], [1], [0, 0, 1, 1], [], []>} : vector<128x12xf32>, vector<12x8xf32>, vector<128x8xf32> -> vector<128x8xf32>
    %28 = vector.shape_cast %27 : vector<128x8xf32> to vector<8x16x8xf32>
    %29 = vector.extract_strided_slice %28 {offsets = [0, 1, 0], sizes = [8, 15, 8], strides = [1, 1, 1]} : vector<8x16x8xf32> to vector<8x15x8xf32>
    %30 = tpu.concatenate %29, %17 in 1 : vector<8x15x8xf32>, vector<8x1x8xf32> -> vector<8x16x8xf32>
    %31 = arith.addf %24, %30 : vector<8x16x8xf32>
    %c0_18 = arith.constant 0 : index
    %c0_19 = arith.constant 0 : index
    %c0_20 = arith.constant 0 : index
    %c0_21 = arith.constant 0 : index
    %32 = vector.load %arg5[%c0_18, %c0_19, %c0_20, %c0_21] : memref<1x8x16x8xf32, #tpu.memory_space<vmem>>, vector<1x8x16x8xf32>
    %33 = vector.shape_cast %32 : vector<1x8x16x8xf32> to vector<8x16x8xf32>
    %34 = vector.shape_cast %31 : vector<8x16x8xf32> to vector<1x8x16x8xf32>
    tpu.vector_store %arg5[%c0_18, %c0_19, %c0_20, %c0_21], %34 {strides = array<i32>} : memref<1x8x16x8xf32, #tpu.memory_space<vmem>>, vector<1x8x16x8xf32>,
    %35 = vector.shape_cast %31 : vector<8x16x8xf32> to vector<128x8xf32>
    %cst_22 = arith.constant dense<0.000000e+00> : vector<8xf32>
    %36 = vector.multi_reduction <add>, %35, %cst_22 [0] : vector<128x8xf32> to vector<8xf32>
    %37 = vector.shape_cast %36 : vector<8xf32> to vector<1x8xf32>
    %38 = arith.mulf %35, %35 : vector<128x8xf32>
    %cst_23 = arith.constant dense<0.000000e+00> : vector<8xf32>
    %39 = vector.multi_reduction <add>, %38, %cst_23 [0] : vector<128x8xf32> to vector<8xf32>
    %40 = vector.shape_cast %39 : vector<8xf32> to vector<1x8xf32>
    %41 = tpu.concatenate %37, %40 in 0 : vector<1x8xf32>, vector<1x8xf32> -> vector<2x8xf32>
    %c0_24 = arith.constant 0 : index
    %c0_25 = arith.constant 0 : index
    %c0_26 = arith.constant 0 : index
    %c0_27 = arith.constant 0 : index
    %42 = vector.load %arg6[%c0_24, %c0_25, %c0_26, %c0_27] : memref<1x1x2x8xf32, #tpu.memory_space<vmem>>, vector<1x1x2x8xf32>
    %43 = vector.shape_cast %42 : vector<1x1x2x8xf32> to vector<2x8xf32>
    %44 = vector.shape_cast %41 : vector<2x8xf32> to vector<1x1x2x8xf32>
    tpu.vector_store %arg6[%c0_24, %c0_25, %c0_26, %c0_27], %44 {strides = array<i32>} : memref<1x1x2x8xf32, #tpu.memory_space<vmem>>, vector<1x1x2x8xf32>,
    return
  }
  func.func @transform_0(%arg0: i32, %arg1: i32) -> (i32, i32, i32, i32) {
    %c0_i32 = arith.constant 0 : i32
    %c0_i32_0 = arith.constant 0 : i32
    %c0_i32_1 = arith.constant 0 : i32
    return %arg0, %arg1, %c0_i32, %c0_i32_0 : i32, i32, i32, i32
  }
  func.func @transform_1(%arg0: i32, %arg1: i32) -> (i32, i32, i32, i32, i32) {
    %c0_i32 = arith.constant 0 : i32
    %c0_i32_0 = arith.constant 0 : i32
    %c0_i32_1 = arith.constant 0 : i32
    %c0_i32_2 = arith.constant 0 : i32
    return %arg0, %arg1, %c0_i32, %c0_i32_0, %c0_i32_1 : i32, i32, i32, i32, i32
  }
  func.func @transform_2(%arg0: i32, %arg1: i32) -> (i32, i32, i32) {
    %c0_i32 = arith.constant 0 : i32
    %c0_i32_0 = arith.constant 0 : i32
    %c0_i32_1 = arith.constant 0 : i32
    %c0_i32_2 = arith.constant 0 : i32
    return %c0_i32, %c0_i32_0, %c0_i32_1 : i32, i32, i32
  }
  func.func @transform_3(%arg0: i32, %arg1: i32) -> (i32, i32, i32, i32) {
    %c0_i32 = arith.constant 0 : i32
    %c0_i32_0 = arith.constant 0 : i32
    %c0_i32_1 = arith.constant 0 : i32
    return %arg0, %arg1, %c0_i32, %c0_i32_0 : i32, i32, i32, i32
  }
  func.func @transform_4(%arg0: i32, %arg1: i32) -> (i32, i32, i32, i32) {
    %c0_i32 = arith.constant 0 : i32
    %c0_i32_0 = arith.constant 0 : i32
    %c0_i32_1 = arith.constant 0 : i32
    return %arg0, %arg1, %c0_i32, %c0_i32_0 : i32, i32, i32, i32
  }
}

module attributes {stable_mosaic.version = 11 : i64} {
  func.func @kernel(%arg0: i32, %arg1: i32, %arg2: memref<1x8x16x8xf32, #tpu.memory_space<vmem>>, %arg3: memref<1x1x2x16x8xf32, #tpu.memory_space<vmem>>, %arg4: memref<3x24x8xf32, #tpu.memory_space<vmem>>, %arg5: memref<1x1x8xf32, #tpu.memory_space<vmem>>, %arg6: memref<1x1x8xf32, #tpu.memory_space<vmem>>, %arg7: memref<1x8x16x8xf32, #tpu.memory_space<vmem>>, %arg8: memref<1x1x2x8xf32, #tpu.memory_space<vmem>>) attributes {dimension_semantics = [#tpu.dimension_semantics<parallel>, #tpu.dimension_semantics<parallel>], iteration_bounds = array<i64: 2, 2>, scalar_prefetch = 0 : i64, scratch_operands = 0 : i64, tpu.core_type = #tpu.core_type<tc>, window_params = [{transform_indices = @transform_0, window_bounds = array<i64: 1, 8, 16, 8>}, {transform_indices = @transform_1, window_bounds = array<i64: 1, 1, 2, 16, 8>}, {pipeline_mode = #tpu.pipeline_mode<synchronous>, transform_indices = @transform_2, window_bounds = array<i64: 3, 24, 8>}, {pipeline_mode = #tpu.pipeline_mode<synchronous>, transform_indices = @transform_3, window_bounds = array<i64: 1, 1, 8>}, {pipeline_mode = #tpu.pipeline_mode<synchronous>, transform_indices = @transform_4, window_bounds = array<i64: 1, 1, 8>}, {transform_indices = @transform_5, window_bounds = array<i64: 1, 8, 16, 8>}, {transform_indices = @transform_6, window_bounds = array<i64: 1, 1, 2, 8>}]} {
    %c0 = arith.constant 0 : index
    %c0_0 = arith.constant 0 : index
    %c0_1 = arith.constant 0 : index
    %c0_2 = arith.constant 0 : index
    %0 = vector.load %arg2[%c0, %c0_0, %c0_1, %c0_2] : memref<1x8x16x8xf32, #tpu.memory_space<vmem>>, vector<1x8x16x8xf32>
    %1 = vector.shape_cast %0 : vector<1x8x16x8xf32> to vector<8x16x8xf32>
    %c0_3 = arith.constant 0 : index
    %c0_4 = arith.constant 0 : index
    %c0_5 = arith.constant 0 : index
    %c0_6 = arith.constant 0 : index
    %c0_7 = arith.constant 0 : index
    %2 = vector.load %arg3[%c0_3, %c0_4, %c0_5, %c0_6, %c0_7] : memref<1x1x2x16x8xf32, #tpu.memory_space<vmem>>, vector<1x1x1x16x8xf32>
    %3 = vector.shape_cast %2 : vector<1x1x1x16x8xf32> to vector<1x16x8xf32>
    %c0_8 = arith.constant 0 : index
    %c0_9 = arith.constant 0 : index
    %c1 = arith.constant 1 : index
    %c0_10 = arith.constant 0 : index
    %c0_11 = arith.constant 0 : index
    %4 = vector.load %arg3[%c0_8, %c0_9, %c1, %c0_10, %c0_11] : memref<1x1x2x16x8xf32, #tpu.memory_space<vmem>>, vector<1x1x1x16x8xf32>
    %5 = vector.shape_cast %4 : vector<1x1x1x16x8xf32> to vector<1x16x8xf32>
    %c0_12 = arith.constant 0 : index
    %c0_13 = arith.constant 0 : index
    %c0_14 = arith.constant 0 : index
    %6 = vector.load %arg5[%c0_12, %c0_13, %c0_14] : memref<1x1x8xf32, #tpu.memory_space<vmem>>, vector<1x1x8xf32>
    %c0_15 = arith.constant 0 : index
    %c0_16 = arith.constant 0 : index
    %c0_17 = arith.constant 0 : index
    %7 = vector.load %arg6[%c0_15, %c0_16, %c0_17] : memref<1x1x8xf32, #tpu.memory_space<vmem>>, vector<1x1x8xf32>
    %8 = vector.broadcast %6 : vector<1x1x8xf32> to vector<8x16x8xf32>
    %9 = arith.mulf %1, %8 : vector<8x16x8xf32>
    %10 = vector.broadcast %7 : vector<1x1x8xf32> to vector<8x16x8xf32>
    %11 = arith.addf %9, %10 : vector<8x16x8xf32>
    %cst = arith.constant 0.000000e+00 : f32
    %12 = vector.broadcast %cst : f32 to vector<8x16x8xf32>
    %13 = arith.maximumf %11, %12 : vector<8x16x8xf32>
    %14 = vector.broadcast %6 : vector<1x1x8xf32> to vector<1x16x8xf32>
    %15 = arith.mulf %3, %14 : vector<1x16x8xf32>
    %16 = vector.broadcast %7 : vector<1x1x8xf32> to vector<1x16x8xf32>
    %17 = arith.addf %15, %16 : vector<1x16x8xf32>
    %cst_18 = arith.constant 0.000000e+00 : f32
    %18 = vector.broadcast %cst_18 : f32 to vector<1x16x8xf32>
    %19 = arith.maximumf %17, %18 : vector<1x16x8xf32>
    %c0_i32 = arith.constant 0 : i32
    %20 = arith.cmpi sgt, %arg1, %c0_i32 : i32
    %21 = arith.extui %20 : i1 to i32
    %22 = arith.sitofp %21 : i32 to f32
    %23 = vector.broadcast %22 : f32 to vector<1x16x8xf32>
    %24 = arith.mulf %19, %23 : vector<1x16x8xf32>
    %25 = vector.broadcast %6 : vector<1x1x8xf32> to vector<1x16x8xf32>
    %26 = arith.mulf %5, %25 : vector<1x16x8xf32>
    %27 = vector.broadcast %7 : vector<1x1x8xf32> to vector<1x16x8xf32>
    %28 = arith.addf %26, %27 : vector<1x16x8xf32>
    %cst_19 = arith.constant 0.000000e+00 : f32
    %29 = vector.broadcast %cst_19 : f32 to vector<1x16x8xf32>
    %30 = arith.maximumf %28, %29 : vector<1x16x8xf32>
    %c1_i32 = arith.constant 1 : i32
    %31 = arith.cmpi slt, %arg1, %c1_i32 : i32
    %32 = arith.extui %31 : i1 to i32
    %33 = arith.sitofp %32 : i32 to f32
    %34 = vector.broadcast %33 : f32 to vector<1x16x8xf32>
    %35 = arith.mulf %30, %34 : vector<1x16x8xf32>
    %36 = vector.extract_strided_slice %13 {offsets = [0, 0, 0], sizes = [7, 16, 8], strides = [1, 1, 1]} : vector<8x16x8xf32> to vector<7x16x8xf32>
    %37 = tpu.concatenate %24, %36 in 0 : vector<1x16x8xf32>, vector<7x16x8xf32> -> vector<8x16x8xf32>
    %38 = vector.extract_strided_slice %13 {offsets = [1, 0, 0], sizes = [7, 16, 8], strides = [1, 1, 1]} : vector<8x16x8xf32> to vector<7x16x8xf32>
    %39 = tpu.concatenate %38, %35 in 0 : vector<7x16x8xf32>, vector<1x16x8xf32> -> vector<8x16x8xf32>
    %40 = tpu.concatenate %37, %13, %39 in 2 : vector<8x16x8xf32>, vector<8x16x8xf32>, vector<8x16x8xf32> -> vector<8x16x24xf32>
    %41 = vector.shape_cast %40 : vector<8x16x24xf32> to vector<128x24xf32>
    %c0_20 = arith.constant 0 : index
    %c0_21 = arith.constant 0 : index
    %c0_22 = arith.constant 0 : index
    %42 = vector.load %arg4[%c0_20, %c0_21, %c0_22] : memref<3x24x8xf32, #tpu.memory_space<vmem>>, vector<3x24x8xf32>
    %43 = vector.extract_strided_slice %42 {offsets = [1, 0, 0], sizes = [1, 24, 8], strides = [1, 1, 1]} : vector<3x24x8xf32> to vector<1x24x8xf32>
    %44 = vector.shape_cast %43 : vector<1x24x8xf32> to vector<24x8xf32>
    %cst_23 = arith.constant dense<0.000000e+00> : vector<128x8xf32>
    %45 = tpu.matmul %41, %44, %cst_23 {dimension_numbers = #tpu.dot_dimension_numbers<[1], [0], [0], [1], [0, 0, 1, 1], [], []>} : vector<128x24xf32>, vector<24x8xf32>, vector<128x8xf32> -> vector<128x8xf32>
    %46 = vector.shape_cast %45 : vector<128x8xf32> to vector<8x16x8xf32>
    %cst_24 = arith.constant 0.000000e+00 : f32
    %47 = vector.broadcast %cst_24 : f32 to vector<8x1x8xf32>
    %48 = vector.extract_strided_slice %42 {offsets = [0, 0, 0], sizes = [1, 24, 8], strides = [1, 1, 1]} : vector<3x24x8xf32> to vector<1x24x8xf32>
    %49 = vector.shape_cast %48 : vector<1x24x8xf32> to vector<24x8xf32>
    %cst_25 = arith.constant dense<0.000000e+00> : vector<128x8xf32>
    %50 = tpu.matmul %41, %49, %cst_25 {dimension_numbers = #tpu.dot_dimension_numbers<[1], [0], [0], [1], [0, 0, 1, 1], [], []>} : vector<128x24xf32>, vector<24x8xf32>, vector<128x8xf32> -> vector<128x8xf32>
    %51 = vector.shape_cast %50 : vector<128x8xf32> to vector<8x16x8xf32>
    %52 = vector.extract_strided_slice %51 {offsets = [0, 0, 0], sizes = [8, 15, 8], strides = [1, 1, 1]} : vector<8x16x8xf32> to vector<8x15x8xf32>
    %53 = tpu.concatenate %47, %52 in 1 : vector<8x1x8xf32>, vector<8x15x8xf32> -> vector<8x16x8xf32>
    %54 = arith.addf %46, %53 : vector<8x16x8xf32>
    %55 = vector.extract_strided_slice %42 {offsets = [2, 0, 0], sizes = [1, 24, 8], strides = [1, 1, 1]} : vector<3x24x8xf32> to vector<1x24x8xf32>
    %56 = vector.shape_cast %55 : vector<1x24x8xf32> to vector<24x8xf32>
    %cst_26 = arith.constant dense<0.000000e+00> : vector<128x8xf32>
    %57 = tpu.matmul %41, %56, %cst_26 {dimension_numbers = #tpu.dot_dimension_numbers<[1], [0], [0], [1], [0, 0, 1, 1], [], []>} : vector<128x24xf32>, vector<24x8xf32>, vector<128x8xf32> -> vector<128x8xf32>
    %58 = vector.shape_cast %57 : vector<128x8xf32> to vector<8x16x8xf32>
    %59 = vector.extract_strided_slice %58 {offsets = [0, 1, 0], sizes = [8, 15, 8], strides = [1, 1, 1]} : vector<8x16x8xf32> to vector<8x15x8xf32>
    %60 = tpu.concatenate %59, %47 in 1 : vector<8x15x8xf32>, vector<8x1x8xf32> -> vector<8x16x8xf32>
    %61 = arith.addf %54, %60 : vector<8x16x8xf32>
    %c0_27 = arith.constant 0 : index
    %c0_28 = arith.constant 0 : index
    %c0_29 = arith.constant 0 : index
    %c0_30 = arith.constant 0 : index
    %62 = vector.load %arg7[%c0_27, %c0_28, %c0_29, %c0_30] : memref<1x8x16x8xf32, #tpu.memory_space<vmem>>, vector<1x8x16x8xf32>
    %63 = vector.shape_cast %62 : vector<1x8x16x8xf32> to vector<8x16x8xf32>
    %64 = vector.shape_cast %61 : vector<8x16x8xf32> to vector<1x8x16x8xf32>
    tpu.vector_store %arg7[%c0_27, %c0_28, %c0_29, %c0_30], %64 {strides = array<i32>} : memref<1x8x16x8xf32, #tpu.memory_space<vmem>>, vector<1x8x16x8xf32>,
    %65 = vector.shape_cast %61 : vector<8x16x8xf32> to vector<128x8xf32>
    %cst_31 = arith.constant dense<0.000000e+00> : vector<8xf32>
    %66 = vector.multi_reduction <add>, %65, %cst_31 [0] : vector<128x8xf32> to vector<8xf32>
    %67 = vector.shape_cast %66 : vector<8xf32> to vector<1x8xf32>
    %68 = arith.mulf %65, %65 : vector<128x8xf32>
    %cst_32 = arith.constant dense<0.000000e+00> : vector<8xf32>
    %69 = vector.multi_reduction <add>, %68, %cst_32 [0] : vector<128x8xf32> to vector<8xf32>
    %70 = vector.shape_cast %69 : vector<8xf32> to vector<1x8xf32>
    %71 = tpu.concatenate %67, %70 in 0 : vector<1x8xf32>, vector<1x8xf32> -> vector<2x8xf32>
    %c0_33 = arith.constant 0 : index
    %c0_34 = arith.constant 0 : index
    %c0_35 = arith.constant 0 : index
    %c0_36 = arith.constant 0 : index
    %72 = vector.load %arg8[%c0_33, %c0_34, %c0_35, %c0_36] : memref<1x1x2x8xf32, #tpu.memory_space<vmem>>, vector<1x1x2x8xf32>
    %73 = vector.shape_cast %72 : vector<1x1x2x8xf32> to vector<2x8xf32>
    %74 = vector.shape_cast %71 : vector<2x8xf32> to vector<1x1x2x8xf32>
    tpu.vector_store %arg8[%c0_33, %c0_34, %c0_35, %c0_36], %74 {strides = array<i32>} : memref<1x1x2x8xf32, #tpu.memory_space<vmem>>, vector<1x1x2x8xf32>,
    return
  }
  func.func @transform_0(%arg0: i32, %arg1: i32) -> (i32, i32, i32, i32) {
    %c0_i32 = arith.constant 0 : i32
    %c0_i32_0 = arith.constant 0 : i32
    %c0_i32_1 = arith.constant 0 : i32
    return %arg0, %arg1, %c0_i32, %c0_i32_0 : i32, i32, i32, i32
  }
  func.func @transform_1(%arg0: i32, %arg1: i32) -> (i32, i32, i32, i32, i32) {
    %c0_i32 = arith.constant 0 : i32
    %c0_i32_0 = arith.constant 0 : i32
    %c0_i32_1 = arith.constant 0 : i32
    %c0_i32_2 = arith.constant 0 : i32
    return %arg0, %arg1, %c0_i32, %c0_i32_0, %c0_i32_1 : i32, i32, i32, i32, i32
  }
  func.func @transform_2(%arg0: i32, %arg1: i32) -> (i32, i32, i32) {
    %c0_i32 = arith.constant 0 : i32
    %c0_i32_0 = arith.constant 0 : i32
    %c0_i32_1 = arith.constant 0 : i32
    %c0_i32_2 = arith.constant 0 : i32
    return %c0_i32, %c0_i32_0, %c0_i32_1 : i32, i32, i32
  }
  func.func @transform_3(%arg0: i32, %arg1: i32) -> (i32, i32, i32) {
    %c0_i32 = arith.constant 0 : i32
    %c0_i32_0 = arith.constant 0 : i32
    %c0_i32_1 = arith.constant 0 : i32
    %c0_i32_2 = arith.constant 0 : i32
    return %c0_i32, %c0_i32_0, %c0_i32_1 : i32, i32, i32
  }
  func.func @transform_4(%arg0: i32, %arg1: i32) -> (i32, i32, i32) {
    %c0_i32 = arith.constant 0 : i32
    %c0_i32_0 = arith.constant 0 : i32
    %c0_i32_1 = arith.constant 0 : i32
    %c0_i32_2 = arith.constant 0 : i32
    return %c0_i32, %c0_i32_0, %c0_i32_1 : i32, i32, i32
  }
  func.func @transform_5(%arg0: i32, %arg1: i32) -> (i32, i32, i32, i32) {
    %c0_i32 = arith.constant 0 : i32
    %c0_i32_0 = arith.constant 0 : i32
    %c0_i32_1 = arith.constant 0 : i32
    return %arg0, %arg1, %c0_i32, %c0_i32_0 : i32, i32, i32, i32
  }
  func.func @transform_6(%arg0: i32, %arg1: i32) -> (i32, i32, i32, i32) {
    %c0_i32 = arith.constant 0 : i32
    %c0_i32_0 = arith.constant 0 : i32
    %c0_i32_1 = arith.constant 0 : i32
    return %arg0, %arg1, %c0_i32, %c0_i32_0 : i32, i32, i32, i32
  }
}

module attributes {stable_mosaic.version = 11 : i64} {
  func.func @_bn_relu_kernel(%arg0: i32, %arg1: i32, %arg2: memref<1x8x16x8xf32, #tpu.memory_space<vmem>>, %arg3: memref<1x1x8xf32, #tpu.memory_space<vmem>>, %arg4: memref<1x1x8xf32, #tpu.memory_space<vmem>>, %arg5: memref<1x8x16x8xf32, #tpu.memory_space<vmem>>) attributes {dimension_semantics = [#tpu.dimension_semantics<parallel>, #tpu.dimension_semantics<parallel>], iteration_bounds = array<i64: 2, 2>, scalar_prefetch = 0 : i64, scratch_operands = 0 : i64, tpu.core_type = #tpu.core_type<tc>, window_params = [{transform_indices = @transform_0, window_bounds = array<i64: 1, 8, 16, 8>}, {pipeline_mode = #tpu.pipeline_mode<synchronous>, transform_indices = @transform_1, window_bounds = array<i64: 1, 1, 8>}, {pipeline_mode = #tpu.pipeline_mode<synchronous>, transform_indices = @transform_2, window_bounds = array<i64: 1, 1, 8>}, {transform_indices = @transform_3, window_bounds = array<i64: 1, 8, 16, 8>}]} {
    %c0 = arith.constant 0 : index
    %c0_0 = arith.constant 0 : index
    %c0_1 = arith.constant 0 : index
    %c0_2 = arith.constant 0 : index
    %0 = vector.load %arg2[%c0, %c0_0, %c0_1, %c0_2] : memref<1x8x16x8xf32, #tpu.memory_space<vmem>>, vector<1x8x16x8xf32>
    %1 = vector.shape_cast %0 : vector<1x8x16x8xf32> to vector<8x16x8xf32>
    %c0_3 = arith.constant 0 : index
    %c0_4 = arith.constant 0 : index
    %c0_5 = arith.constant 0 : index
    %2 = vector.load %arg3[%c0_3, %c0_4, %c0_5] : memref<1x1x8xf32, #tpu.memory_space<vmem>>, vector<1x1x8xf32>
    %3 = vector.broadcast %2 : vector<1x1x8xf32> to vector<8x16x8xf32>
    %4 = arith.mulf %1, %3 : vector<8x16x8xf32>
    %c0_6 = arith.constant 0 : index
    %c0_7 = arith.constant 0 : index
    %c0_8 = arith.constant 0 : index
    %5 = vector.load %arg4[%c0_6, %c0_7, %c0_8] : memref<1x1x8xf32, #tpu.memory_space<vmem>>, vector<1x1x8xf32>
    %6 = vector.broadcast %5 : vector<1x1x8xf32> to vector<8x16x8xf32>
    %7 = arith.addf %4, %6 : vector<8x16x8xf32>
    %cst = arith.constant 0.000000e+00 : f32
    %8 = vector.broadcast %cst : f32 to vector<8x16x8xf32>
    %9 = arith.maximumf %7, %8 : vector<8x16x8xf32>
    %c0_9 = arith.constant 0 : index
    %c0_10 = arith.constant 0 : index
    %c0_11 = arith.constant 0 : index
    %c0_12 = arith.constant 0 : index
    %10 = vector.load %arg5[%c0_9, %c0_10, %c0_11, %c0_12] : memref<1x8x16x8xf32, #tpu.memory_space<vmem>>, vector<1x8x16x8xf32>
    %11 = vector.shape_cast %10 : vector<1x8x16x8xf32> to vector<8x16x8xf32>
    %12 = vector.shape_cast %9 : vector<8x16x8xf32> to vector<1x8x16x8xf32>
    tpu.vector_store %arg5[%c0_9, %c0_10, %c0_11, %c0_12], %12 {strides = array<i32>} : memref<1x8x16x8xf32, #tpu.memory_space<vmem>>, vector<1x8x16x8xf32>,
    return
  }
  func.func @transform_0(%arg0: i32, %arg1: i32) -> (i32, i32, i32, i32) {
    %c0_i32 = arith.constant 0 : i32
    %c0_i32_0 = arith.constant 0 : i32
    %c0_i32_1 = arith.constant 0 : i32
    return %arg0, %arg1, %c0_i32, %c0_i32_0 : i32, i32, i32, i32
  }
  func.func @transform_1(%arg0: i32, %arg1: i32) -> (i32, i32, i32) {
    %c0_i32 = arith.constant 0 : i32
    %c0_i32_0 = arith.constant 0 : i32
    %c0_i32_1 = arith.constant 0 : i32
    %c0_i32_2 = arith.constant 0 : i32
    return %c0_i32, %c0_i32_0, %c0_i32_1 : i32, i32, i32
  }
  func.func @transform_2(%arg0: i32, %arg1: i32) -> (i32, i32, i32) {
    %c0_i32 = arith.constant 0 : i32
    %c0_i32_0 = arith.constant 0 : i32
    %c0_i32_1 = arith.constant 0 : i32
    %c0_i32_2 = arith.constant 0 : i32
    return %c0_i32, %c0_i32_0, %c0_i32_1 : i32, i32, i32
  }
  func.func @transform_3(%arg0: i32, %arg1: i32) -> (i32, i32, i32, i32) {
    %c0_i32 = arith.constant 0 : i32
    %c0_i32_0 = arith.constant 0 : i32
    %c0_i32_1 = arith.constant 0 : i32
    return %arg0, %arg1, %c0_i32, %c0_i32_0 : i32, i32, i32, i32
  }
}

</mosaic_0001>

<llo_original>
// kernel: double_conv.5
$region0: #{double_conv.5}
  #allocation0 [shape = 'u32[]', space=smem, size = 0x4, offset = 0x4, fixed_abs, tag = 'smem constant byte address 0x4 - core index']
  #allocation1 [shape = 'u32[144,128]{1,0:T(1,128)}', space=vmem, size = 0x12000, scoped, tag = 'internal scratch']
  %s0 = inlined_call_operand.vmem [shape: f32[2,16,16,8], index: 0, kind: input, shape index: {}, may-alias: {0,3}]
  %s1 = inlined_call_operand.vmem [shape: f32[1,1,8], index: 1, kind: input, shape index: {}]
  %s2 = inlined_call_operand.vmem [shape: f32[1,1,8], index: 2, kind: input, shape index: {}]
  %s3 = inlined_call_operand.vmem [shape: f32[2,16,16,8], index: 3, kind: output, shape index: {}, may-alias: {0,3}]
  %s4 = sld [smem:[#allocation0]]
  $region45: #{double_conv.5} parent=0
    _
  %s6 = ssub.s32 1, %s4
  %s7 = scalar_select 0, %s6, %s4
  loop: start=0, step=1, limit=6
  $region2: #{double_conv.5} parent=0 // loop_pre_header
    _
  $region3: #{double_conv.5} parent=0 // loop_header
    %s9 = sphi 0, %s13
    %p10 = scmp.ge.s32.totalorder %s9, 6
    %s16 = sphi 0, %s28
    %s17 = sphi 0, %s24
    %s18 = sphi 0, %s16
    %s19 = sphi 0, %s17
    %s20 = sphi 0, %s18
    %s21 = sphi 0, %s19
    %s33 = sphi 0, %s35
    %s36 = sphi 0, %s33
    %s37 = sphi 0, %s36
    %s53 = sphi 0, %s37
    %s57 = sphi 0, %s57
    %s59 = sphi 0, %s57
    %s60 = sphi 0, %s59
    %s74 = sphi 0, %s60
    %s78 = sphi 0, %s78
    %s80 = sphi 0, %s78
    %s81 = sphi 0, %s80
    %s95 = sphi 0, %s81
    %s103 = sphi 0, %s105
    %s106 = sphi 0, %s103
    %s107 = sphi 0, %s106
    %s123 = sphi 0, %s107
  $region4: #{double_conv.5} parent=0 // loop_header_branch
    %12 = sbr.rel (%p10) target = $region8
  $region5: #{double_conv.5} parent=0 // loop_body
    %s14 = ssub.s32 %s9, 1
    %s15 = ssub.s32 %s9, 2
    %s22 = sadd.s32 1, %s17
    %p23 = scmp.ge.s32.totalorder %s22, 2
    %s24 = scalar_select %p23, 0, %s22
    %s25 = sadd.s32 1, %s16
    %s26 = scalar_select %p23, %s25, %s16
    %p27 = scmp.ge.s32.totalorder %s26, 2
    %s28 = scalar_select %p27, 0, %s26
    %s29 = ssub.s32 %s16, %s28
    %s30 = ssub.s32 %s17, %s24
    %s31 = sor.u32 %s29, %s30
    %p32 = scmp.eq.s32.totalorder %s31, 0
    %s34 = sadd.s32 %s33, 1
    %s35 = scalar_select %p32, %s33, %s34
    %p38 = pneg %p32
    %p39 = scmp.eq.s32.totalorder %s9, 3
    %p40 = por %p38, %p39
    %p41 = scmp.ne.s32.totalorder %s33, %s36
    %p42 = scmp.eq.s32.totalorder %s9, 0
    %p43 = por %p41, %p42
    %p44 = scmp.ne.s32.totalorder %s33, %s36
    %p45 = scmp.eq.s32.totalorder %s14, 3
    %p46 = por %p44, %p45
    %p47 = scmp.ne.s32.totalorder %s36, %s37
    %p48 = scmp.eq.s32.totalorder %s14, 0
    %p49 = por %p47, %p48
    %p50 = scmp.ne.s32.totalorder %s36, %s37
    %p51 = scmp.eq.s32.totalorder %s15, 3
    %p52 = por %p50, %p51
    %p54 = scmp.ne.s32.totalorder %s37, %s53
    %p55 = scmp.eq.s32.totalorder %s15, 0
    %p56 = por %p54, %p55
    %s58 = sadd.s32 %s57, 1
    %p61 = scmp.eq.s32.totalorder %s9, 3
    %p62 = scmp.ne.s32.totalorder %s57, %s59
    %p63 = scmp.eq.s32.totalorder %s9, 0
    %p64 = por %p62, %p63
    %p65 = scmp.ne.s32.totalorder %s57, %s59
    %p66 = scmp.eq.s32.totalorder %s14, 3
    %p67 = por %p65, %p66
    %p68 = scmp.ne.s32.totalorder %s59, %s60
    %p69 = scmp.eq.s32.totalorder %s14, 0
    %p70 = por %p68, %p69
    %p71 = scmp.ne.s32.totalorder %s59, %s60
    %p72 = scmp.eq.s32.totalorder %s15, 3
    %p73 = por %p71, %p72
    %p75 = scmp.ne.s32.totalorder %s60, %s74
    %p76 = scmp.eq.s32.totalorder %s15, 0
    %p77 = por %p75, %p76
    %s79 = sadd.s32 %s78, 1
    %p82 = scmp.eq.s32.totalorder %s9, 3
    %p83 = scmp.ne.s32.totalorder %s78, %s80
    %p84 = scmp.eq.s32.totalorder %s9, 0
    %p85 = por %p83, %p84
    %p86 = scmp.ne.s32.totalorder %s78, %s80
    %p87 = scmp.eq.s32.totalorder %s14, 3
    %p88 = por %p86, %p87
    %p89 = scmp.ne.s32.totalorder %s80, %s81
    %p90 = scmp.eq.s32.totalorder %s14, 0
    %p91 = por %p89, %p90
    %p92 = scmp.ne.s32.totalorder %s80, %s81
    %p93 = scmp.eq.s32.totalorder %s15, 3
    %p94 = por %p92, %p93
    %p96 = scmp.ne.s32.totalorder %s81, %s95
    %p97 = scmp.eq.s32.totalorder %s15, 0
    %p98 = por %p96, %p97
    %s99 = ssub.s32 %s16, %s28
    %s100 = ssub.s32 %s17, %s24
    %s101 = sor.u32 %s99, %s100
    %p102 = scmp.eq.s32.totalorder %s101, 0
    %s104 = sadd.s32 %s103, 1
    %s105 = scalar_select %p102, %s103, %s104
    %p108 = pneg %p102
    %p109 = scmp.eq.s32.totalorder %s9, 3
    %p110 = por %p108, %p109
    %p111 = scmp.ne.s32.totalorder %s103, %s106
    %p112 = scmp.eq.s32.totalorder %s9, 0
    %p113 = por %p111, %p112
    %p114 = scmp.ne.s32.totalorder %s103, %s106
    %p115 = scmp.eq.s32.totalorder %s14, 3
    %p116 = por %p114, %p115
    %p117 = scmp.ne.s32.totalorder %s106, %s107
    %p118 = scmp.eq.s32.totalorder %s14, 0
    %p119 = por %p117, %p118
    %p120 = scmp.ne.s32.totalorder %s106, %s107
    %p121 = scmp.eq.s32.totalorder %s15, 3
    %p122 = por %p120, %p121
    %p124 = scmp.ne.s32.totalorder %s107, %s123
    %p125 = scmp.eq.s32.totalorder %s15, 0
    %p126 = por %p124, %p125
    %p127 = scmp.le.s32.totalorder 1, %s9
    %p128 = scmp.lt.s32.totalorder %s9, 5
    %p129 = pnand %p127, %p128
    %p130 = pneg %p129
    // Predicated region
    $region9: #{double_conv.5} parent=5 // pred_check
      _
    $region10: #{double_conv.5} parent=5 // pred_check_branch
      %132 = sbr.rel (%p129) target = $region12
    $region11: #{double_conv.5} parent=5 // pred_region
      %s133 = ssub.s32 %s9, 1
      // Predicated region
      $region13: #{double_conv.5} parent=11 // pred_check
        %p134 = pneg %p70
      $region14: #{double_conv.5} parent=11 // pred_check_branch
        %136 = sbr.rel (%p134) target = $region16
      $region15: #{double_conv.5} parent=11 // pred_region
        _
      $region16: #{double_conv.5} parent=11 // pred_fallthru
        _
      // Predicated region
      $region17: #{double_conv.5} parent=11 // pred_check
        %p137 = pneg %p91
      $region18: #{double_conv.5} parent=11 // pred_check_branch
        %139 = sbr.rel (%p137) target = $region20
      $region19: #{double_conv.5} parent=11 // pred_region
        _
      $region20: #{double_conv.5} parent=11 // pred_fallthru
        _
    $region12: #{double_conv.5} parent=5 // pred_fallthru
      _
    %p140 = scmp.lt.s32.totalorder %s9, 4
    // Predicated region
    $region21: #{double_conv.5} parent=5 // pred_check
      %p141 = pneg %p140
    $region22: #{double_conv.5} parent=5 // pred_check_branch
      %143 = sbr.rel (%p141) target = $region24
    $region23: #{double_conv.5} parent=5 // pred_region
      // Predicated region
      $region25: #{double_conv.5} parent=23 // pred_check
        %p144 = pneg %p43
      $region26: #{double_conv.5} parent=23 // pred_check_branch
        %146 = sbr.rel (%p144) target = $region28
      $region27: #{double_conv.5} parent=23 // pred_region
        %s147 = smul.u32 8, %s17
        %p148 = scmp.lt.s32.totalorder %s16, 1
        %s149 = scalar_select %p148, %s16, 1
        %p150 = scmp.lt.s32.totalorder %s147, 15
        %s151 = scalar_select %p150, %s147, 15
        %s152 = smul.addr %s151, 2
        %s153 = smul.addr %s149, 32
        %s154 = sadd.s32 %s152, %s153
        %s155 = smul.addr %s154, 8
        %s156 = scalar_lea.vmem %s0, %s155
        %s157 = smul.u32 8, %s17
      $region28: #{double_conv.5} parent=23 // pred_fallthru
        _
    $region24: #{double_conv.5} parent=5 // pred_fallthru
      _
    %p158 = scmp.le.s32.totalorder 1, %s9
    %p159 = scmp.lt.s32.totalorder %s9, 5
    %p160 = pnand %p158, %p159
    %p161 = pneg %p160
    // Predicated region
    $region29: #{double_conv.5} parent=5 // pred_check
      _
    $region30: #{double_conv.5} parent=5 // pred_check_branch
      %163 = sbr.rel (%p160) target = $region32
    $region31: #{double_conv.5} parent=5 // pred_region
      %s164 = ssub.s32 %s9, 1
      %s165 = smul.u32 8, %s19
      %p166 = scmp.lt.s32.totalorder %s18, 1
      %s167 = scalar_select %p166, %s18, 1
      %p168 = scmp.lt.s32.totalorder %s165, 15
      %s169 = scalar_select %p168, %s165, 15
      %s170 = smul.addr %s169, 2
      %s171 = smul.addr %s167, 32
      %s172 = sadd.s32 %s170, %s171
      %s173 = smul.addr %s172, 8
      %s174 = scalar_lea.vmem %s0, %s173
      %p175 = pneg %p49
      %p176 = pneg %p46
      %p177 = pneg %p70
      %p178 = pneg %p67
      %p179 = pneg %p91
      %p180 = pneg %p88
      %p181 = pneg %p119
      %p182 = pneg %p116
      %s183 = smul.u32 8, %s19
      %p184 = scmp.lt.s32.totalorder %s18, 1
      %s185 = scalar_select %p184, %s18, 1
      %p186 = scmp.lt.s32.totalorder %s183, 15
      %s187 = scalar_select %p186, %s183, 15
      %s188 = smul.addr %s187, 2
      %s189 = smul.addr %s185, 32
      %s190 = sadd.s32 %s188, %s189
      %s191 = smul.addr %s190, 8
      %s192 = scalar_lea.vmem %s3, %s191
      %s193 = smul.u32 8, %s19
      %p194 = scmp.lt.s32.totalorder %s18, 1
      %s195 = scalar_select %p194, %s18, 1
      %p196 = scmp.lt.s32.totalorder %s193, 15
      %s197 = scalar_select %p196, %s193, 15
      %s198 = smul.addr %s197, 2
      %s199 = smul.addr %s195, 32
      %s200 = sadd.s32 %s198, %s199
      %s201 = smul.addr %s200, 8
      %s202 = scalar_lea.vmem %s0, %s201
      %s203 = smul.u32 8, %s19
      %s204 = smul.u32 8, %s19
      %p205 = scmp.lt.s32.totalorder %s18, 1
      %s206 = scalar_select %p205, %s18, 1
      %p207 = scmp.lt.s32.totalorder %s204, 15
      %s208 = scalar_select %p207, %s204, 15
      %s209 = smul.addr %s208, 2
      %s210 = smul.addr %s206, 32
      %s211 = sadd.s32 %s209, %s210
      %s212 = smul.addr %s211, 8
      %s213 = scalar_lea.vmem %s3, %s212
      %s214 = smul.u32 8, %s19
      %v215 = vld [vmem:[%s202] sm:$0xff]
      %v216 = vld [vmem:[%s202 + $0x8] sm:$0xff]
      %v217 = vld [vmem:[%s202 + $0x10] sm:$0xff]
      %v218 = vld [vmem:[%s202 + $0x18] sm:$0xff]
      %v219 = vld [vmem:[%s202 + $0x20] sm:$0xff]
      %v220 = vld [vmem:[%s202 + $0x28] sm:$0xff]
      %v221 = vld [vmem:[%s202 + $0x30] sm:$0xff]
      %v222 = vld [vmem:[%s202 + $0x38] sm:$0xff]
      %v223 = vld [vmem:[%s202 + $0x40] sm:$0xff]
      %v224 = vld [vmem:[%s202 + $0x48] sm:$0xff]
      %v225 = vld [vmem:[%s202 + $0x50] sm:$0xff]
      %v226 = vld [vmem:[%s202 + $0x58] sm:$0xff]
      %v227 = vld [vmem:[%s202 + $0x60] sm:$0xff]
      %v228 = vld [vmem:[%s202 + $0x68] sm:$0xff]
      %v229 = vld [vmem:[%s202 + $0x70] sm:$0xff]
      %v230 = vld [vmem:[%s202 + $0x78] sm:$0xff]
      %v231 = vld [vmem:[%s1] sm:$0x1]
      %v233 = vlaneseq
      %v234 = vshrl.u32 %v233, 7
      %v235 = vsub.s32 0, %v234
      %v236 = vrot.slane %v231, %v235
      %v238 = vmul.f32 %v215, %v236
      %v239 = vmul.f32 %v216, %v236
      %v240 = vmul.f32 %v217, %v236
      %v241 = vmul.f32 %v218, %v236
      %v242 = vmul.f32 %v219, %v236
      %v243 = vmul.f32 %v220, %v236
      %v244 = vmul.f32 %v221, %v236
      %v245 = vmul.f32 %v222, %v236
      %v246 = vmul.f32 %v223, %v236
      %v247 = vmul.f32 %v224, %v236
      %v248 = vmul.f32 %v225, %v236
      %v249 = vmul.f32 %v226, %v236
      %v250 = vmul.f32 %v227, %v236
      %v251 = vmul.f32 %v228, %v236
      %v252 = vmul.f32 %v229, %v236
      %v253 = vmul.f32 %v230, %v236
      %v254 = vld [vmem:[%s2] sm:$0x1]
      %v256 = vlaneseq
      %v257 = vshrl.u32 %v256, 7
      %v258 = vsub.s32 0, %v257
      %v259 = vrot.slane %v254, %v258
      %v261 = vadd.f32 %v238, %v259
      %v262 = vadd.f32 %v239, %v259
      %v263 = vadd.f32 %v240, %v259
      %v264 = vadd.f32 %v241, %v259
      %v265 = vadd.f32 %v242, %v259
      %v266 = vadd.f32 %v243, %v259
      %v267 = vadd.f32 %v244, %v259
      %v268 = vadd.f32 %v245, %v259
      %v269 = vadd.f32 %v246, %v259
      %v270 = vadd.f32 %v247, %v259
      %v271 = vadd.f32 %v248, %v259
      %v272 = vadd.f32 %v249, %v259
      %v273 = vadd.f32 %v250, %v259
      %v274 = vadd.f32 %v251, %v259
      %v275 = vadd.f32 %v252, %v259
      %v276 = vadd.f32 %v253, %v259
      %v277 = vmax.f32 %v261, 0.0
      %v278 = vmax.f32 %v262, 0.0
      %v279 = vmax.f32 %v263, 0.0
      %v280 = vmax.f32 %v264, 0.0
      %v281 = vmax.f32 %v265, 0.0
      %v282 = vmax.f32 %v266, 0.0
      %v283 = vmax.f32 %v267, 0.0
      %v284 = vmax.f32 %v268, 0.0
      %v285 = vmax.f32 %v269, 0.0
      %v286 = vmax.f32 %v270, 0.0
      %v287 = vmax.f32 %v271, 0.0
      %v288 = vmax.f32 %v272, 0.0
      %v289 = vmax.f32 %v273, 0.0
      %v290 = vmax.f32 %v274, 0.0
      %v291 = vmax.f32 %v275, 0.0
      %v292 = vmax.f32 %v276, 0.0
      %vm293 = vcmask 64512
      %294 = vst.msk [vmem:[%s213] sm:$0xff] %vm293, %v277
      %295 = vst.msk [vmem:[%s213 + $0x8] sm:$0xff] %vm293, %v278
      %296 = vst.msk [vmem:[%s213 + $0x10] sm:$0xff] %vm293, %v279
      %297 = vst.msk [vmem:[%s213 + $0x18] sm:$0xff] %vm293, %v280
      %298 = vst.msk [vmem:[%s213 + $0x20] sm:$0xff] %vm293, %v281
      %299 = vst.msk [vmem:[%s213 + $0x28] sm:$0xff] %vm293, %v282
      %300 = vst.msk [vmem:[%s213 + $0x30] sm:$0xff] %vm293, %v283
      %301 = vst.msk [vmem:[%s213 + $0x38] sm:$0xff] %vm293, %v284
      %302 = vst.msk [vmem:[%s213 + $0x40] sm:$0xff] %vm293, %v285
      %303 = vst.msk [vmem:[%s213 + $0x48] sm:$0xff] %vm293, %v286
      %304 = vst.msk [vmem:[%s213 + $0x50] sm:$0xff] %vm293, %v287
      %305 = vst.msk [vmem:[%s213 + $0x58] sm:$0xff] %vm293, %v288
      %306 = vst.msk [vmem:[%s213 + $0x60] sm:$0xff] %vm293, %v289
      %307 = vst.msk [vmem:[%s213 + $0x68] sm:$0xff] %vm293, %v290
      %308 = vst.msk [vmem:[%s213 + $0x70] sm:$0xff] %vm293, %v291
      %309 = vst.msk [vmem:[%s213 + $0x78] sm:$0xff] %vm293, %v292
      %s310 = smul.u32 8, %s19
      %p311 = scmp.lt.s32.totalorder %s18, 1
      %s312 = scalar_select %p311, %s18, 1
      %p313 = scmp.lt.s32.totalorder %s310, 15
      %s314 = scalar_select %p313, %s310, 15
      %s315 = smul.addr %s314, 2
      %s316 = smul.addr %s312, 32
      %s317 = sadd.s32 %s315, %s316
      %s318 = smul.addr %s317, 8
      %s319 = scalar_lea.vmem %s3, %s318
      // Predicated region
      $region33: #{double_conv.5} parent=31 // pred_check
        %p320 = pneg %p116
      $region34: #{double_conv.5} parent=31 // pred_check_branch
        %322 = sbr.rel (%p320) target = $region36
      $region35: #{double_conv.5} parent=31 // pred_region
        %s323 = smul.u32 8, %s19
      $region36: #{double_conv.5} parent=31 // pred_fallthru
        _
    $region32: #{double_conv.5} parent=5 // pred_fallthru
      _
    %p324 = scmp.le.s32.totalorder 2, %s9
    // Predicated region
    $region37: #{double_conv.5} parent=5 // pred_check
      %p325 = pneg %p324
    $region38: #{double_conv.5} parent=5 // pred_check_branch
      %327 = sbr.rel (%p325) target = $region40
    $region39: #{double_conv.5} parent=5 // pred_region
      %s328 = ssub.s32 %s9, 2
      // Predicated region
      $region41: #{double_conv.5} parent=39 // pred_check
        %p329 = pneg %p122
      $region42: #{double_conv.5} parent=39 // pred_check_branch
        %331 = sbr.rel (%p329) target = $region44
      $region43: #{double_conv.5} parent=39 // pred_region
        %s332 = smul.u32 8, %s21
        %p333 = scmp.lt.s32.totalorder %s20, 1
        %s334 = scalar_select %p333, %s20, 1
        %p335 = scmp.lt.s32.totalorder %s332, 15
        %s336 = scalar_select %p335, %s332, 15
        %s337 = smul.addr %s336, 2
        %s338 = smul.addr %s334, 32
        %s339 = sadd.s32 %s337, %s338
        %s340 = smul.addr %s339, 8
        %s341 = scalar_lea.vmem %s3, %s340
      $region44: #{double_conv.5} parent=39 // pred_fallthru
        _
    $region40: #{double_conv.5} parent=5 // pred_fallthru
      _
  $region6: #{double_conv.5} parent=0 // loop_footer
    %s13 = sadd.s32 1, %s9
  $region7: #{double_conv.5} parent=0 // loop_footer_branch
    %8 = sbr.rel target = $region3
  $region8: #{double_conv.5} parent=0 // loop_exit
    _

// kernel: double_conv.3
$region0: #{double_conv.3}
  #allocation0 [shape = 'u32[]', space=smem, size = 0x4, offset = 0x4, fixed_abs, tag = 'smem constant byte address 0x4 - core index']
  #allocation1 [shape = 'u32[144,128]{1,0:T(1,128)}', space=vmem, size = 0x12000, scoped, tag = 'internal scratch']
  %s0 = inlined_call_operand.vmem [shape: f32[2,16,16,4], index: 0, kind: input, shape index: {}]
  %s1 = inlined_call_operand.vmem [shape: f32[2,2,2,16,4], index: 1, kind: input, shape index: {}]
  %s2 = inlined_call_operand.vmem [shape: f32[3,12,8], index: 2, kind: input, shape index: {}]
  %s3 = inlined_call_operand.vmem [shape: f32[2,16,16,8], index: 3, kind: output, shape index: {0}]
  %s4 = inlined_call_operand.vmem [shape: f32[2,2,2,8], index: 4, kind: output, shape index: {1}]
  %5 = xla_tuple %s3, %s4
  %s6 = sld [smem:[#allocation0]]
  $region53: #{double_conv.3} parent=0
    _
  %s8 = ssub.s32 1, %s6
  %s9 = scalar_select 0, %s8, %s6
  loop: start=0, step=1, limit=6
  $region2: #{double_conv.3} parent=0 // loop_pre_header
    _
  $region3: #{double_conv.3} parent=0 // loop_header
    %s11 = sphi 0, %s15
    %p12 = scmp.ge.s32.totalorder %s11, 6
    %s18 = sphi 0, %s30
    %s19 = sphi 0, %s26
    %s20 = sphi 0, %s18
    %s21 = sphi 0, %s19
    %s22 = sphi 0, %s20
    %s23 = sphi 0, %s21
    %s35 = sphi 0, %s37
    %s38 = sphi 0, %s35
    %s39 = sphi 0, %s38
    %s55 = sphi 0, %s39
    %s63 = sphi 0, %s65
    %s66 = sphi 0, %s63
    %s67 = sphi 0, %s66
    %s83 = sphi 0, %s67
    %s87 = sphi 0, %s87
    %s89 = sphi 0, %s87
    %s90 = sphi 0, %s89
    %s104 = sphi 0, %s90
    %s112 = sphi 0, %s114
    %s115 = sphi 0, %s112
    %s116 = sphi 0, %s115
    %s132 = sphi 0, %s116
    %s140 = sphi 0, %s142
    %s143 = sphi 0, %s140
    %s144 = sphi 0, %s143
    %s160 = sphi 0, %s144
  $region4: #{double_conv.3} parent=0 // loop_header_branch
    %14 = sbr.rel (%p12) target = $region8
  $region5: #{double_conv.3} parent=0 // loop_body
    %s16 = ssub.s32 %s11, 1
    %s17 = ssub.s32 %s11, 2
    %s24 = sadd.s32 1, %s19
    %p25 = scmp.ge.s32.totalorder %s24, 2
    %s26 = scalar_select %p25, 0, %s24
    %s27 = sadd.s32 1, %s18
    %s28 = scalar_select %p25, %s27, %s18
    %p29 = scmp.ge.s32.totalorder %s28, 2
    %s30 = scalar_select %p29, 0, %s28
    %s31 = ssub.s32 %s18, %s30
    %s32 = ssub.s32 %s19, %s26
    %s33 = sor.u32 %s31, %s32
    %p34 = scmp.eq.s32.totalorder %s33, 0
    %s36 = sadd.s32 %s35, 1
    %s37 = scalar_select %p34, %s35, %s36
    %p40 = pneg %p34
    %p41 = scmp.eq.s32.totalorder %s11, 3
    %p42 = por %p40, %p41
    %p43 = scmp.ne.s32.totalorder %s35, %s38
    %p44 = scmp.eq.s32.totalorder %s11, 0
    %p45 = por %p43, %p44
    %p46 = scmp.ne.s32.totalorder %s35, %s38
    %p47 = scmp.eq.s32.totalorder %s16, 3
    %p48 = por %p46, %p47
    %p49 = scmp.ne.s32.totalorder %s38, %s39
    %p50 = scmp.eq.s32.totalorder %s16, 0
    %p51 = por %p49, %p50
    %p52 = scmp.ne.s32.totalorder %s38, %s39
    %p53 = scmp.eq.s32.totalorder %s17, 3
    %p54 = por %p52, %p53
    %p56 = scmp.ne.s32.totalorder %s39, %s55
    %p57 = scmp.eq.s32.totalorder %s17, 0
    %p58 = por %p56, %p57
    %s59 = ssub.s32 %s18, %s30
    %s60 = ssub.s32 %s19, %s26
    %s61 = sor.u32 %s59, %s60
    %p62 = scmp.eq.s32.totalorder %s61, 0
    %s64 = sadd.s32 %s63, 1
    %s65 = scalar_select %p62, %s63, %s64
    %p68 = pneg %p62
    %p69 = scmp.eq.s32.totalorder %s11, 3
    %p70 = por %p68, %p69
    %p71 = scmp.ne.s32.totalorder %s63, %s66
    %p72 = scmp.eq.s32.totalorder %s11, 0
    %p73 = por %p71, %p72
    %p74 = scmp.ne.s32.totalorder %s63, %s66
    %p75 = scmp.eq.s32.totalorder %s16, 3
    %p76 = por %p74, %p75
    %p77 = scmp.ne.s32.totalorder %s66, %s67
    %p78 = scmp.eq.s32.totalorder %s16, 0
    %p79 = por %p77, %p78
    %p80 = scmp.ne.s32.totalorder %s66, %s67
    %p81 = scmp.eq.s32.totalorder %s17, 3
    %p82 = por %p80, %p81
    %p84 = scmp.ne.s32.totalorder %s67, %s83
    %p85 = scmp.eq.s32.totalorder %s17, 0
    %p86 = por %p84, %p85
    %s88 = sadd.s32 %s87, 1
    %p91 = scmp.eq.s32.totalorder %s11, 3
    %p92 = scmp.ne.s32.totalorder %s87, %s89
    %p93 = scmp.eq.s32.totalorder %s11, 0
    %p94 = por %p92, %p93
    %p95 = scmp.ne.s32.totalorder %s87, %s89
    %p96 = scmp.eq.s32.totalorder %s16, 3
    %p97 = por %p95, %p96
    %p98 = scmp.ne.s32.totalorder %s89, %s90
    %p99 = scmp.eq.s32.totalorder %s16, 0
    %p100 = por %p98, %p99
    %p101 = scmp.ne.s32.totalorder %s89, %s90
    %p102 = scmp.eq.s32.totalorder %s17, 3
    %p103 = por %p101, %p102
    %p105 = scmp.ne.s32.totalorder %s90, %s104
    %p106 = scmp.eq.s32.totalorder %s17, 0
    %p107 = por %p105, %p106
    %s108 = ssub.s32 %s18, %s30
    %s109 = ssub.s32 %s19, %s26
    %s110 = sor.u32 %s108, %s109
    %p111 = scmp.eq.s32.totalorder %s110, 0
    %s113 = sadd.s32 %s112, 1
    %s114 = scalar_select %p111, %s112, %s113
    %p117 = pneg %p111
    %p118 = scmp.eq.s32.totalorder %s11, 3
    %p119 = por %p117, %p118
    %p120 = scmp.ne.s32.totalorder %s112, %s115
    %p121 = scmp.eq.s32.totalorder %s11, 0
    %p122 = por %p120, %p121
    %p123 = scmp.ne.s32.totalorder %s112, %s115
    %p124 = scmp.eq.s32.totalorder %s16, 3
    %p125 = por %p123, %p124
    %p126 = scmp.ne.s32.totalorder %s115, %s116
    %p127 = scmp.eq.s32.totalorder %s16, 0
    %p128 = por %p126, %p127
    %p129 = scmp.ne.s32.totalorder %s115, %s116
    %p130 = scmp.eq.s32.totalorder %s17, 3
    %p131 = por %p129, %p130
    %p133 = scmp.ne.s32.totalorder %s116, %s132
    %p134 = scmp.eq.s32.totalorder %s17, 0
    %p135 = por %p133, %p134
    %s136 = ssub.s32 %s18, %s30
    %s137 = ssub.s32 %s19, %s26
    %s138 = sor.u32 %s136, %s137
    %p139 = scmp.eq.s32.totalorder %s138, 0
    %s141 = sadd.s32 %s140, 1
    %s142 = scalar_select %p139, %s140, %s141
    %p145 = pneg %p139
    %p146 = scmp.eq.s32.totalorder %s11, 3
    %p147 = por %p145, %p146
    %p148 = scmp.ne.s32.totalorder %s140, %s143
    %p149 = scmp.eq.s32.totalorder %s11, 0
    %p150 = por %p148, %p149
    %p151 = scmp.ne.s32.totalorder %s140, %s143
    %p152 = scmp.eq.s32.totalorder %s16, 3
    %p153 = por %p151, %p152
    %p154 = scmp.ne.s32.totalorder %s143, %s144
    %p155 = scmp.eq.s32.totalorder %s16, 0
    %p156 = por %p154, %p155
    %p157 = scmp.ne.s32.totalorder %s143, %s144
    %p158 = scmp.eq.s32.totalorder %s17, 3
    %p159 = por %p157, %p158
    %p161 = scmp.ne.s32.totalorder %s144, %s160
    %p162 = scmp.eq.s32.totalorder %s17, 0
    %p163 = por %p161, %p162
    %p164 = scmp.le.s32.totalorder 1, %s11
    %p165 = scmp.lt.s32.totalorder %s11, 5
    %p166 = pnand %p164, %p165
    %p167 = pneg %p166
    // Predicated region
    $region9: #{double_conv.3} parent=5 // pred_check
      _
    $region10: #{double_conv.3} parent=5 // pred_check_branch
      %169 = sbr.rel (%p166) target = $region12
    $region11: #{double_conv.3} parent=5 // pred_region
      %s170 = ssub.s32 %s11, 1
      // Predicated region
      $region13: #{double_conv.3} parent=11 // pred_check
        %p171 = pneg %p100
      $region14: #{double_conv.3} parent=11 // pred_check_branch
        %173 = sbr.rel (%p171) target = $region16
      $region15: #{double_conv.3} parent=11 // pred_region
        _
      $region16: #{double_conv.3} parent=11 // pred_fallthru
        _
    $region12: #{double_conv.3} parent=5 // pred_fallthru
      _
    %p174 = scmp.lt.s32.totalorder %s11, 4
    // Predicated region
    $region17: #{double_conv.3} parent=5 // pred_check
      %p175 = pneg %p174
    $region18: #{double_conv.3} parent=5 // pred_check_branch
      %177 = sbr.rel (%p175) target = $region20
    $region19: #{double_conv.3} parent=5 // pred_region
      // Predicated region
      $region21: #{double_conv.3} parent=19 // pred_check
        %p178 = pneg %p45
      $region22: #{double_conv.3} parent=19 // pred_check_branch
        %180 = sbr.rel (%p178) target = $region24
      $region23: #{double_conv.3} parent=19 // pred_region
        %s181 = smul.u32 8, %s19
        %p182 = scmp.lt.s32.totalorder %s18, 1
        %s183 = scalar_select %p182, %s18, 1
        %p184 = scmp.lt.s32.totalorder %s181, 15
        %s185 = scalar_select %p184, %s181, 15
        %s186 = smul.addr %s185, 2
        %s187 = smul.addr %s183, 32
        %s188 = sadd.s32 %s186, %s187
        %s189 = smul.addr %s188, 8
        %s190 = scalar_lea.vmem %s0, %s189
        %s191 = smul.u32 8, %s19
      $region24: #{double_conv.3} parent=19 // pred_fallthru
        _
      // Predicated region
      $region25: #{double_conv.3} parent=19 // pred_check
        %p192 = pneg %p73
      $region26: #{double_conv.3} parent=19 // pred_check_branch
        %194 = sbr.rel (%p192) target = $region28
      $region27: #{double_conv.3} parent=19 // pred_region
        %p195 = scmp.lt.s32.totalorder %s18, 1
        %s196 = scalar_select %p195, %s18, 1
        %p197 = scmp.lt.s32.totalorder %s19, 1
        %s198 = scalar_select %p197, %s19, 1
        %s199 = smul.addr %s198, 4
        %s200 = smul.addr %s196, 8
        %s201 = sadd.s32 %s199, %s200
        %s202 = smul.addr %s201, 8
        %s203 = scalar_lea.vmem %s1, %s202
      $region28: #{double_conv.3} parent=19 // pred_fallthru
        _
    $region20: #{double_conv.3} parent=5 // pred_fallthru
      _
    %p204 = scmp.le.s32.totalorder 1, %s11
    %p205 = scmp.lt.s32.totalorder %s11, 5
    %p206 = pnand %p204, %p205
    %p207 = pneg %p206
    // Predicated region
    $region29: #{double_conv.3} parent=5 // pred_check
      _
    $region30: #{double_conv.3} parent=5 // pred_check_branch
      %209 = sbr.rel (%p206) target = $region32
    $region31: #{double_conv.3} parent=5 // pred_region
      %s210 = ssub.s32 %s11, 1
      %s211 = smul.u32 8, %s21
      %p212 = scmp.lt.s32.totalorder %s20, 1
      %s213 = scalar_select %p212, %s20, 1
      %p214 = scmp.lt.s32.totalorder %s211, 15
      %s215 = scalar_select %p214, %s211, 15
      %s216 = smul.addr %s215, 2
      %s217 = smul.addr %s213, 32
      %s218 = sadd.s32 %s216, %s217
      %s219 = smul.addr %s218, 8
      %s220 = scalar_lea.vmem %s0, %s219
      %p221 = pneg %p51
      %p222 = pneg %p48
      %p223 = scmp.lt.s32.totalorder %s20, 1
      %s224 = scalar_select %p223, %s20, 1
      %p225 = scmp.lt.s32.totalorder %s21, 1
      %s226 = scalar_select %p225, %s21, 1
      %s227 = smul.addr %s226, 4
      %s228 = smul.addr %s224, 8
      %s229 = sadd.s32 %s227, %s228
      %s230 = smul.addr %s229, 8
      %s231 = scalar_lea.vmem %s1, %s230
      %p232 = pneg %p79
      %p233 = pneg %p76
      %p234 = pneg %p100
      %p235 = pneg %p97
      %p236 = pneg %p128
      %p237 = pneg %p125
      %s238 = smul.u32 8, %s21
      %p239 = scmp.lt.s32.totalorder %s20, 1
      %s240 = scalar_select %p239, %s20, 1
      %p241 = scmp.lt.s32.totalorder %s238, 15
      %s242 = scalar_select %p241, %s238, 15
      %s243 = smul.addr %s242, 2
      %s244 = smul.addr %s240, 32
      %s245 = sadd.s32 %s243, %s244
      %s246 = smul.addr %s245, 8
      %s247 = scalar_lea.vmem %s3, %s246
      %p248 = pneg %p156
      %p249 = pneg %p153
      %p250 = scmp.lt.s32.totalorder %s20, 1
      %s251 = scalar_select %p250, %s20, 1
      %p252 = scmp.lt.s32.totalorder %s21, 1
      %s253 = scalar_select %p252, %s21, 1
      %s254 = smul.addr %s251, 2
      %s255 = sadd.s32 %s253, %s254
      %s256 = smul.addr %s255, 2
      %s257 = scalar_lea.vmem %s4, %s256
      %s258 = smul.u32 8, %s21
      %p259 = scmp.lt.s32.totalorder %s20, 1
      %s260 = scalar_select %p259, %s20, 1
      %p261 = scmp.lt.s32.totalorder %s258, 15
      %s262 = scalar_select %p261, %s258, 15
      %s263 = smul.addr %s262, 2
      %s264 = smul.addr %s260, 32
      %s265 = sadd.s32 %s263, %s264
      %s266 = smul.addr %s265, 8
      %s267 = scalar_lea.vmem %s0, %s266
      %s268 = smul.u32 8, %s21
      %p269 = scmp.lt.s32.totalorder %s20, 1
      %s270 = scalar_select %p269, %s20, 1
      %p271 = scmp.lt.s32.totalorder %s21, 1
      %s272 = scalar_select %p271, %s21, 1
      %s273 = smul.addr %s272, 4
      %s274 = smul.addr %s270, 8
      %s275 = sadd.s32 %s273, %s274
      %s276 = smul.addr %s275, 8
      %s277 = scalar_lea.vmem %s1, %s276
      %s278 = smul.u32 8, %s21
      %p279 = scmp.lt.s32.totalorder %s20, 1
      %s280 = scalar_select %p279, %s20, 1
      %p281 = scmp.lt.s32.totalorder %s278, 15
      %s282 = scalar_select %p281, %s278, 15
      %s283 = smul.addr %s282, 2
      %s284 = smul.addr %s280, 32
      %s285 = sadd.s32 %s283, %s284
      %s286 = smul.addr %s285, 8
      %s287 = scalar_lea.vmem %s3, %s286
      %s288 = smul.u32 8, %s21
      %p289 = scmp.lt.s32.totalorder %s20, 1
      %s290 = scalar_select %p289, %s20, 1
      %p291 = scmp.lt.s32.totalorder %s21, 1
      %s292 = scalar_select %p291, %s21, 1
      %s293 = smul.addr %s290, 2
      %s294 = sadd.s32 %s292, %s293
      %s295 = smul.addr %s294, 2
      %s296 = scalar_lea.vmem %s4, %s295
      %v297 = vld [vmem:[%s267] sm:$0xff]
      %v298 = vld [vmem:[%s267 + $0x8] sm:$0xff]
      %v299 = vld [vmem:[%s267 + $0x10] sm:$0xff]
      %v300 = vld [vmem:[%s267 + $0x18] sm:$0xff]
      %v301 = vld [vmem:[%s267 + $0x20] sm:$0xff]
      %v302 = vld [vmem:[%s267 + $0x28] sm:$0xff]
      %v303 = vld [vmem:[%s267 + $0x30] sm:$0xff]
      %v304 = vld [vmem:[%s267 + $0x38] sm:$0xff]
      %v305 = vld [vmem:[%s267 + $0x40] sm:$0xff]
      %v306 = vld [vmem:[%s267 + $0x48] sm:$0xff]
      %v307 = vld [vmem:[%s267 + $0x50] sm:$0xff]
      %v308 = vld [vmem:[%s267 + $0x58] sm:$0xff]
      %v309 = vld [vmem:[%s267 + $0x60] sm:$0xff]
      %v310 = vld [vmem:[%s267 + $0x68] sm:$0xff]
      %v311 = vld [vmem:[%s267 + $0x70] sm:$0xff]
      %v312 = vld [vmem:[%s267 + $0x78] sm:$0xff]
      %v313 = vld [vmem:[%s277] sm:$0xff]
      %v314 = vld [vmem:[%s277 + $0x8] sm:$0xff]
      %s315 = scalar_lea.vmem %s277, 16
      %v316 = vld [vmem:[%s315] sm:$0xff]
      %v317 = vld [vmem:[%s315 + $0x8] sm:$0xff]
      %334 = vrot.lane.b32.xlu0 %v297, 4
      %v335 = vpop.permute.xlu0 %334
      %336 = vrot.lane.b32.xlu0 %v298, 4
      %v337 = vpop.permute.xlu0 %336
      %338 = vrot.lane.b32.xlu0 %v299, 4
      %v339 = vpop.permute.xlu0 %338
      %340 = vrot.lane.b32.xlu0 %v300, 4
      %v341 = vpop.permute.xlu0 %340
      %342 = vrot.lane.b32.xlu0 %v301, 4
      %v343 = vpop.permute.xlu0 %342
      %344 = vrot.lane.b32.xlu0 %v302, 4
      %v345 = vpop.permute.xlu0 %344
      %346 = vrot.lane.b32.xlu0 %v303, 4
      %v347 = vpop.permute.xlu0 %346
      %348 = vrot.lane.b32.xlu0 %v304, 4
      %v349 = vpop.permute.xlu0 %348
      %350 = vrot.lane.b32.xlu0 %v305, 4
      %v351 = vpop.permute.xlu0 %350
      %352 = vrot.lane.b32.xlu0 %v306, 4
      %v353 = vpop.permute.xlu0 %352
      %354 = vrot.lane.b32.xlu0 %v307, 4
      %v355 = vpop.permute.xlu0 %354
      %356 = vrot.lane.b32.xlu0 %v308, 4
      %v357 = vpop.permute.xlu0 %356
      %358 = vrot.lane.b32.xlu0 %v309, 4
      %v359 = vpop.permute.xlu0 %358
      %360 = vrot.lane.b32.xlu0 %v310, 4
      %v361 = vpop.permute.xlu0 %360
      %362 = vrot.lane.b32.xlu0 %v311, 4
      %v363 = vpop.permute.xlu0 %362
      %364 = vrot.lane.b32.xlu0 %v312, 4
      %v365 = vpop.permute.xlu0 %364
      %384 = vrot.lane.b32.xlu0 %v299, 8
      %v385 = vpop.permute.xlu0 %384
      %386 = vrot.lane.b32.xlu0 %v300, 8
      %v387 = vpop.permute.xlu0 %386
      %388 = vrot.lane.b32.xlu0 %v301, 8
      %v389 = vpop.permute.xlu0 %388
      %390 = vrot.lane.b32.xlu0 %v302, 8
      %v391 = vpop.permute.xlu0 %390
      %392 = vrot.lane.b32.xlu0 %v303, 8
      %v393 = vpop.permute.xlu0 %392
      %394 = vrot.lane.b32.xlu0 %v304, 8
      %v395 = vpop.permute.xlu0 %394
      %396 = vrot.lane.b32.xlu0 %v305, 8
      %v397 = vpop.permute.xlu0 %396
      %398 = vrot.lane.b32.xlu0 %v306, 8
      %v399 = vpop.permute.xlu0 %398
      %400 = vrot.lane.b32.xlu0 %v307, 8
      %v401 = vpop.permute.xlu0 %400
      %402 = vrot.lane.b32.xlu0 %v308, 8
      %v403 = vpop.permute.xlu0 %402
      %404 = vrot.lane.b32.xlu0 %v309, 8
      %v405 = vpop.permute.xlu0 %404
      %406 = vrot.lane.b32.xlu0 %v310, 8
      %v407 = vpop.permute.xlu0 %406
      %408 = vrot.lane.b32.xlu0 %v311, 8
      %v409 = vpop.permute.xlu0 %408
      %410 = vrot.lane.b32.xlu0 %v312, 8
      %v411 = vpop.permute.xlu0 %410
      %412 = vrot.lane.b32.xlu0 %v316, 8
      %v413 = vpop.permute.xlu0 %412
      %414 = vrot.lane.b32.xlu0 %v317, 8
      %v415 = vpop.permute.xlu0 %414
      %vm432 = vcmask 31744
      %v433 = vsel %vm432, %v313, %v335
      %v434 = vsel %vm432, %v314, %v337
      %v435 = vsel %vm432, %v297, %v339
      %v436 = vsel %vm432, %v298, %v341
      %v437 = vsel %vm432, %v299, %v343
      %v438 = vsel %vm432, %v300, %v345
      %v439 = vsel %vm432, %v301, %v347
      %v440 = vsel %vm432, %v302, %v349
      %v441 = vsel %vm432, %v303, %v351
      %v442 = vsel %vm432, %v304, %v353
      %v443 = vsel %vm432, %v305, %v355
      %v444 = vsel %vm432, %v306, %v357
      %v445 = vsel %vm432, %v307, %v359
      %v446 = vsel %vm432, %v308, %v361
      %v447 = vsel %vm432, %v309, %v363
      %v448 = vsel %vm432, %v310, %v365
      %vm449 = vcmask 64512
      %v450 = vsel %vm449, %v433, %v385
      %v451 = vsel %vm449, %v434, %v387
      %v452 = vsel %vm449, %v435, %v389
      %v453 = vsel %vm449, %v436, %v391
      %v454 = vsel %vm449, %v437, %v393
      %v455 = vsel %vm449, %v438, %v395
      %v456 = vsel %vm449, %v439, %v397
      %v457 = vsel %vm449, %v440, %v399
      %v458 = vsel %vm449, %v441, %v401
      %v459 = vsel %vm449, %v442, %v403
      %v460 = vsel %vm449, %v443, %v405
      %v461 = vsel %vm449, %v444, %v407
      %v462 = vsel %vm449, %v445, %v409
      %v463 = vsel %vm449, %v446, %v411
      %v464 = vsel %vm449, %v447, %v413
      %v465 = vsel %vm449, %v448, %v415
      %v466 = vld [vmem:[%s2] sm:$0xff]
      %v467 = vld [vmem:[%s2 + $0x8] sm:$0xf]
      %v468 = vld [vmem:[%s2 + $0x10] sm:$0xff]
      %v469 = vld [vmem:[%s2 + $0x18] sm:$0xf]
      %v470 = vld [vmem:[%s2 + $0x20] sm:$0xff]
      %v471 = vld [vmem:[%s2 + $0x28] sm:$0xf]
      %vm472 = vcmask 97280
      %v474 = vsel %vm472, %v450, 0
      %v477 = vsel %vm472, %v451, 0
      %v480 = vsel %vm472, %v452, 0
      %v483 = vsel %vm472, %v453, 0
      %v486 = vsel %vm472, %v454, 0
      %v489 = vsel %vm472, %v455, 0
      %v492 = vsel %vm472, %v456, 0
      %v495 = vsel %vm472, %v457, 0
      %v498 = vsel %vm472, %v458, 0
      %v501 = vsel %vm472, %v459, 0
      %v504 = vsel %vm472, %v460, 0
      %v507 = vsel %vm472, %v461, 0
      %v510 = vsel %vm472, %v462, 0
      %v513 = vsel %vm472, %v463, 0
      %v516 = vsel %vm472, %v464, 0
      %v519 = vsel %vm472, %v465, 0
      %vm521 = vcmask 1043456
      %v523 = vsel %vm521, %v469, 0
      %525 = vmatprep.subr.mxu0 0.0
      %526 = vmatpush1.msra.mxu0 %v468
      %527 = vmatprep.subr.mxu0 0.0
      %528 = vmatpush1.msra.mxu0 %v523
      %529 = vmatprep.subr.mxu0 0.0
      %530 = vmatpush1.msra.mxu0 0.0
      %531 = vmatprep.subr.mxu0 0.0
      %532 = vmatpush1.msra.mxu0 0.0
      %533 = vmatprep.subr.mxu0 0.0
      %534 = vmatpush1.msra.mxu0 0.0
      %535 = vmatprep.subr.mxu0 0.0
      %536 = vmatpush1.msra.mxu0 0.0
      %537 = vmatprep.subr.mxu0 0.0
      %538 = vmatpush1.msra.mxu0 0.0
      %539 = vmatprep.subr.mxu0 0.0
      %540 = vmatpush1.msra.mxu0 0.0
      %541 = vmatprep.subr.mxu0 0.0
      %542 = vmatpush1.msra.mxu0 0.0
      %543 = vmatprep.subr.mxu0 0.0
      %544 = vmatpush1.msra.mxu0 0.0
      %545 = vmatprep.subr.mxu0 0.0
      %546 = vmatpush1.msra.mxu0 0.0
      %547 = vmatprep.subr.mxu0 0.0
      %548 = vmatpush1.msra.mxu0 0.0
      %549 = vmatprep.subr.mxu0 0.0
      %550 = vmatpush1.msra.mxu0 0.0
      %551 = vmatprep.subr.mxu0 0.0
      %552 = vmatpush1.msra.mxu0 0.0
      %553 = vmatprep.subr.mxu0 0.0
      %554 = vmatpush1.msra.mxu0 0.0
      %555 = vmatprep.subr.mxu0 0.0
      %556 = vmatpush1.msra.mxu0 0.0
      %557 = vmatprep.subr.mxu0 0.0
      %558 = vmatpush1.msra.mxu0 0.0
      %559 = vmatprep.subr.mxu0 0.0
      %560 = vmatpush1.msra.mxu0 0.0
      %561 = vmatprep.subr.mxu0 0.0
      %562 = vmatpush1.msra.mxu0 0.0
      %563 = vmatprep.subr.mxu0 0.0
      %564 = vmatpush1.msra.mxu0 0.0
      %565 = vmatprep.subr.mxu0 0.0
      %566 = vmatpush1.msra.mxu0 0.0
      %567 = vmatprep.subr.mxu0 0.0
      %568 = vmatpush1.msra.mxu0 0.0
      %569 = vmatprep.subr.mxu0 0.0
      %570 = vmatpush1.msra.mxu0 0.0
      %571 = vmatprep.subr.mxu0 0.0
      %572 = vmatpush1.msra.mxu0 0.0
      %573 = vmatprep.subr.mxu0 0.0
      %574 = vmatpush1.msra.mxu0 0.0
      %575 = vmatprep.subr.mxu0 0.0
      %576 = vmatpush1.msra.mxu0 0.0
      %577 = vmatprep.subr.mxu0 0.0
      %578 = vmatpush1.msra.mxu0 0.0
      %579 = vmatprep.subr.mxu0 0.0
      %580 = vmatpush1.msra.mxu0 0.0
      %581 = vmatprep.subr.mxu0 0.0
      %582 = vmatpush1.msra.mxu0 0.0
      %583 = vmatprep.subr.mxu0 0.0
      %584 = vmatpush1.msra.mxu0 0.0
      %585 = vmatprep.subr.mxu0 0.0
      %586 = vmatpush1.msra.mxu0 0.0
      %587 = vmatprep.subr.mxu0 0.0
      %588 = vmatpush1.msra.mxu0 0.0
      %589 = vmatprep.mubr.f32.mxu0 0.0
      %590 = vmatmul.mubr.f32.gmra.mrb[0].mxu0 %v474
      %v591 = vpop.f32.mrb[0].mxu0
      %v592 = vadd.f32 0.0, %v591
      %v593 = vpop.f32.mrb[0].mxu0
      %594 = vmatprep.mubr.f32.mxu0 0.0
      %595 = vmatmul.mubr.f32.gmra.mrb[0].mxu0 %v477
      %v596 = vpop.f32.mrb[0].mxu0
      %v597 = vadd.f32 0.0, %v596
      %v598 = vpop.f32.mrb[0].mxu0
      %599 = vmatprep.mubr.f32.mxu0 0.0
      %600 = vmatmul.mubr.f32.gmra.mrb[0].mxu0 %v480
      %v601 = vpop.f32.mrb[0].mxu0
      %v602 = vadd.f32 0.0, %v601
      %v603 = vpop.f32.mrb[0].mxu0
      %604 = vmatprep.mubr.f32.mxu0 0.0
      %605 = vmatmul.mubr.f32.gmra.mrb[0].mxu0 %v483
      %v606 = vpop.f32.mrb[0].mxu0
      %v607 = vadd.f32 0.0, %v606
      %v608 = vpop.f32.mrb[0].mxu0
      %609 = vmatprep.mubr.f32.mxu0 0.0
      %610 = vmatmul.mubr.f32.gmra.mrb[0].mxu0 %v486
      %v611 = vpop.f32.mrb[0].mxu0
      %v612 = vadd.f32 0.0, %v611
      %v613 = vpop.f32.mrb[0].mxu0
      %614 = vmatprep.mubr.f32.mxu0 0.0
      %615 = vmatmul.mubr.f32.gmra.mrb[0].mxu0 %v489
      %v616 = vpop.f32.mrb[0].mxu0
      %v617 = vadd.f32 0.0, %v616
      %v618 = vpop.f32.mrb[0].mxu0
      %619 = vmatprep.mubr.f32.mxu0 0.0
      %620 = vmatmul.mubr.f32.gmra.mrb[0].mxu0 %v492
      %v621 = vpop.f32.mrb[0].mxu0
      %v622 = vadd.f32 0.0, %v621
      %v623 = vpop.f32.mrb[0].mxu0
      %624 = vmatprep.mubr.f32.mxu0 0.0
      %625 = vmatmul.mubr.f32.gmra.mrb[0].mxu0 %v495
      %v626 = vpop.f32.mrb[0].mxu0
      %v627 = vadd.f32 0.0, %v626
      %v628 = vpop.f32.mrb[0].mxu0
      %629 = vmatprep.mubr.f32.mxu0 0.0
      %630 = vmatmul.mubr.f32.gmra.mrb[0].mxu0 %v498
      %v631 = vpop.f32.mrb[0].mxu0
      %v632 = vadd.f32 0.0, %v631
      %v633 = vpop.f32.mrb[0].mxu0
      %634 = vmatprep.mubr.f32.mxu0 0.0
      %635 = vmatmul.mubr.f32.gmra.mrb[0].mxu0 %v501
      %v636 = vpop.f32.mrb[0].mxu0
      %v637 = vadd.f32 0.0, %v636
      %v638 = vpop.f32.mrb[0].mxu0
      %639 = vmatprep.mubr.f32.mxu0 0.0
      %640 = vmatmul.mubr.f32.gmra.mrb[0].mxu0 %v504
      %v641 = vpop.f32.mrb[0].mxu0
      %v642 = vadd.f32 0.0, %v641
      %v643 = vpop.f32.mrb[0].mxu0
      %644 = vmatprep.mubr.f32.mxu0 0.0
      %645 = vmatmul.mubr.f32.gmra.mrb[0].mxu0 %v507
      %v646 = vpop.f32.mrb[0].mxu0
      %v647 = vadd.f32 0.0, %v646
      %v648 = vpop.f32.mrb[0].mxu0
      %649 = vmatprep.mubr.f32.mxu0 0.0
      %650 = vmatmul.mubr.f32.gmra.mrb[0].mxu0 %v510
      %v651 = vpop.f32.mrb[0].mxu0
      %v652 = vadd.f32 0.0, %v651
      %v653 = vpop.f32.mrb[0].mxu0
      %654 = vmatprep.mubr.f32.mxu0 0.0
      %655 = vmatmul.mubr.f32.gmra.mrb[0].mxu0 %v513
      %v656 = vpop.f32.mrb[0].mxu0
      %v657 = vadd.f32 0.0, %v656
      %v658 = vpop.f32.mrb[0].mxu0
      %659 = vmatprep.mubr.f32.mxu0 0.0
      %660 = vmatmul.mubr.f32.gmra.mrb[0].mxu0 %v516
      %v661 = vpop.f32.mrb[0].mxu0
      %v662 = vadd.f32 0.0, %v661
      %v663 = vpop.f32.mrb[0].mxu0
      %664 = vmatprep.mubr.f32.mxu0 0.0
      %665 = vmatmul.mubr.f32.gmra.mrb[0].mxu0 %v519
      %v666 = vpop.f32.mrb[0].mxu0
      %v667 = vadd.f32 0.0, %v666
      %v668 = vpop.f32.mrb[0].mxu0
      %669 = vdwg.mxu0
      %v671 = vsel %vm521, %v467, 0
      %673 = vmatprep.subr.mxu0 0.0
      %674 = vmatpush1.msra.mxu0 %v466
      %675 = vmatprep.subr.mxu0 0.0
      %676 = vmatpush1.msra.mxu0 %v671
      %677 = vmatprep.subr.mxu0 0.0
      %678 = vmatpush1.msra.mxu0 0.0
      %679 = vmatprep.subr.mxu0 0.0
      %680 = vmatpush1.msra.mxu0 0.0
      %681 = vmatprep.subr.mxu0 0.0
      %682 = vmatpush1.msra.mxu0 0.0
      %683 = vmatprep.subr.mxu0 0.0
      %684 = vmatpush1.msra.mxu0 0.0
      %685 = vmatprep.subr.mxu0 0.0
      %686 = vmatpush1.msra.mxu0 0.0
      %687 = vmatprep.subr.mxu0 0.0
      %688 = vmatpush1.msra.mxu0 0.0
      %689 = vmatprep.subr.mxu0 0.0
      %690 = vmatpush1.msra.mxu0 0.0
      %691 = vmatprep.subr.mxu0 0.0
      %692 = vmatpush1.msra.mxu0 0.0
      %693 = vmatprep.subr.mxu0 0.0
      %694 = vmatpush1.msra.mxu0 0.0
      %695 = vmatprep.subr.mxu0 0.0
      %696 = vmatpush1.msra.mxu0 0.0
      %697 = vmatprep.subr.mxu0 0.0
      %698 = vmatpush1.msra.mxu0 0.0
      %699 = vmatprep.subr.mxu0 0.0
      %700 = vmatpush1.msra.mxu0 0.0
      %701 = vmatprep.subr.mxu0 0.0
      %702 = vmatpush1.msra.mxu0 0.0
      %703 = vmatprep.subr.mxu0 0.0
      %704 = vmatpush1.msra.mxu0 0.0
      %705 = vmatprep.subr.mxu0 0.0
      %706 = vmatpush1.msra.mxu0 0.0
      %707 = vmatprep.subr.mxu0 0.0
      %708 = vmatpush1.msra.mxu0 0.0
      %709 = vmatprep.subr.mxu0 0.0
      %710 = vmatpush1.msra.mxu0 0.0
      %711 = vmatprep.subr.mxu0 0.0
      %712 = vmatpush1.msra.mxu0 0.0
      %713 = vmatprep.subr.mxu0 0.0
      %714 = vmatpush1.msra.mxu0 0.0
      %715 = vmatprep.subr.mxu0 0.0
      %716 = vmatpush1.msra.mxu0 0.0
      %717 = vmatprep.subr.mxu0 0.0
      %718 = vmatpush1.msra.mxu0 0.0
      %719 = vmatprep.subr.mxu0 0.0
      %720 = vmatpush1.msra.mxu0 0.0
      %721 = vmatprep.subr.mxu0 0.0
      %722 = vmatpush1.msra.mxu0 0.0
      %723 = vmatprep.subr.mxu0 0.0
      %724 = vmatpush1.msra.mxu0 0.0
      %725 = vmatprep.subr.mxu0 0.0
      %726 = vmatpush1.msra.mxu0 0.0
      %727 = vmatprep.subr.mxu0 0.0
      %728 = vmatpush1.msra.mxu0 0.0
      %729 = vmatprep.subr.mxu0 0.0
      %730 = vmatpush1.msra.mxu0 0.0
      %731 = vmatprep.subr.mxu0 0.0
      %732 = vmatpush1.msra.mxu0 0.0
      %733 = vmatprep.subr.mxu0 0.0
      %734 = vmatpush1.msra.mxu0 0.0
      %735 = vmatprep.subr.mxu0 0.0
      %736 = vmatpush1.msra.mxu0 0.0
      %737 = vmatprep.mubr.f32.mxu0 0.0
      %738 = vmatmul.mubr.f32.gmra.mrb[0].mxu0 %v474
      %v739 = vpop.f32.mrb[0].mxu0
      %v740 = vadd.f32 0.0, %v739
      %v741 = vpop.f32.mrb[0].mxu0
      %742 = vmatprep.mubr.f32.mxu0 0.0
      %743 = vmatmul.mubr.f32.gmra.mrb[0].mxu0 %v477
      %v744 = vpop.f32.mrb[0].mxu0
      %v745 = vadd.f32 0.0, %v744
      %v746 = vpop.f32.mrb[0].mxu0
      %747 = vmatprep.mubr.f32.mxu0 0.0
      %748 = vmatmul.mubr.f32.gmra.mrb[0].mxu0 %v480
      %v749 = vpop.f32.mrb[0].mxu0
      %v750 = vadd.f32 0.0, %v749
      %v751 = vpop.f32.mrb[0].mxu0
      %752 = vmatprep.mubr.f32.mxu0 0.0
      %753 = vmatmul.mubr.f32.gmra.mrb[0].mxu0 %v483
      %v754 = vpop.f32.mrb[0].mxu0
      %v755 = vadd.f32 0.0, %v754
      %v756 = vpop.f32.mrb[0].mxu0
      %757 = vmatprep.mubr.f32.mxu0 0.0
      %758 = vmatmul.mubr.f32.gmra.mrb[0].mxu0 %v486
      %v759 = vpop.f32.mrb[0].mxu0
      %v760 = vadd.f32 0.0, %v759
      %v761 = vpop.f32.mrb[0].mxu0
      %762 = vmatprep.mubr.f32.mxu0 0.0
      %763 = vmatmul.mubr.f32.gmra.mrb[0].mxu0 %v489
      %v764 = vpop.f32.mrb[0].mxu0
      %v765 = vadd.f32 0.0, %v764
      %v766 = vpop.f32.mrb[0].mxu0
      %767 = vmatprep.mubr.f32.mxu0 0.0
      %768 = vmatmul.mubr.f32.gmra.mrb[0].mxu0 %v492
      %v769 = vpop.f32.mrb[0].mxu0
      %v770 = vadd.f32 0.0, %v769
      %v771 = vpop.f32.mrb[0].mxu0
      %772 = vmatprep.mubr.f32.mxu0 0.0
      %773 = vmatmul.mubr.f32.gmra.mrb[0].mxu0 %v495
      %v774 = vpop.f32.mrb[0].mxu0
      %v775 = vadd.f32 0.0, %v774
      %v776 = vpop.f32.mrb[0].mxu0
      %777 = vmatprep.mubr.f32.mxu0 0.0
      %778 = vmatmul.mubr.f32.gmra.mrb[0].mxu0 %v498
      %v779 = vpop.f32.mrb[0].mxu0
      %v780 = vadd.f32 0.0, %v779
      %v781 = vpop.f32.mrb[0].mxu0
      %782 = vmatprep.mubr.f32.mxu0 0.0
      %783 = vmatmul.mubr.f32.gmra.mrb[0].mxu0 %v501
      %v784 = vpop.f32.mrb[0].mxu0
      %v785 = vadd.f32 0.0, %v784
      %v786 = vpop.f32.mrb[0].mxu0
      %787 = vmatprep.mubr.f32.mxu0 0.0
      %788 = vmatmul.mubr.f32.gmra.mrb[0].mxu0 %v504
      %v789 = vpop.f32.mrb[0].mxu0
      %v790 = vadd.f32 0.0, %v789
      %v791 = vpop.f32.mrb[0].mxu0
      %792 = vmatprep.mubr.f32.mxu0 0.0
      %793 = vmatmul.mubr.f32.gmra.mrb[0].mxu0 %v507
      %v794 = vpop.f32.mrb[0].mxu0
      %v795 = vadd.f32 0.0, %v794
      %v796 = vpop.f32.mrb[0].mxu0
      %797 = vmatprep.mubr.f32.mxu0 0.0
      %798 = vmatmul.mubr.f32.gmra.mrb[0].mxu0 %v510
      %v799 = vpop.f32.mrb[0].mxu0
      %v800 = vadd.f32 0.0, %v799
      %v801 = vpop.f32.mrb[0].mxu0
      %802 = vmatprep.mubr.f32.mxu0 0.0
      %803 = vmatmul.mubr.f32.gmra.mrb[0].mxu0 %v513
      %v804 = vpop.f32.mrb[0].mxu0
      %v805 = vadd.f32 0.0, %v804
      %v806 = vpop.f32.mrb[0].mxu0
      %807 = vmatprep.mubr.f32.mxu0 0.0
      %808 = vmatmul.mubr.f32.gmra.mrb[0].mxu0 %v516
      %v809 = vpop.f32.mrb[0].mxu0
      %v810 = vadd.f32 0.0, %v809
      %v811 = vpop.f32.mrb[0].mxu0
      %812 = vmatprep.mubr.f32.mxu0 0.0
      %813 = vmatmul.mubr.f32.gmra.mrb[0].mxu0 %v519
      %v814 = vpop.f32.mrb[0].mxu0
      %v815 = vadd.f32 0.0, %v814
      %v816 = vpop.f32.mrb[0].mxu0
      %817 = vdwg.mxu0
      %vm834 = vcmask 1040384
      %v835 = vrot.slane %v740, 7
      %v836 = vrot.slane %v745, 7
      %v837 = vsel %vm834, %v835, %v836
      %v838 = vrot.slane %v750, 7
      %v839 = vrot.slane %v755, 7
      %v840 = vsel %vm834, %v838, %v839
      %v841 = vrot.slane %v760, 7
      %v842 = vrot.slane %v765, 7
      %v843 = vsel %vm834, %v841, %v842
      %v844 = vrot.slane %v770, 7
      %v845 = vrot.slane %v775, 7
      %v846 = vsel %vm834, %v844, %v845
      %v847 = vrot.slane %v780, 7
      %v848 = vrot.slane %v785, 7
      %v849 = vsel %vm834, %v847, %v848
      %v850 = vrot.slane %v790, 7
      %v851 = vrot.slane %v795, 7
      %v852 = vsel %vm834, %v850, %v851
      %v853 = vrot.slane %v800, 7
      %v854 = vrot.slane %v805, 7
      %v855 = vsel %vm834, %v853, %v854
      %v856 = vrot.slane %v810, 7
      %v857 = vrot.slane %v815, 7
      %v858 = vsel %vm834, %v856, %v857
      %v875 = vsel %vm834, 0.0, %v835
      %v876 = vsel %vm834, 0.0, %v838
      %v877 = vsel %vm834, 0.0, %v841
      %v878 = vsel %vm834, 0.0, %v844
      %v879 = vsel %vm834, 0.0, %v847
      %v880 = vsel %vm834, 0.0, %v850
      %v881 = vsel %vm834, 0.0, %v853
      %v882 = vsel %vm834, 0.0, %v856
      %v883 = vadd.f32 %v592, %v875
      %v884 = vadd.f32 %v597, %v837
      %v885 = vadd.f32 %v602, %v876
      %v886 = vadd.f32 %v607, %v840
      %v887 = vadd.f32 %v612, %v877
      %v888 = vadd.f32 %v617, %v843
      %v889 = vadd.f32 %v622, %v878
      %v890 = vadd.f32 %v627, %v846
      %v891 = vadd.f32 %v632, %v879
      %v892 = vadd.f32 %v637, %v849
      %v893 = vadd.f32 %v642, %v880
      %v894 = vadd.f32 %v647, %v852
      %v895 = vadd.f32 %v652, %v881
      %v896 = vadd.f32 %v657, %v855
      %v897 = vadd.f32 %v662, %v882
      %v898 = vadd.f32 %v667, %v858
      %v900 = vsel %vm521, %v471, 0
      %902 = vmatprep.subr.mxu0 0.0
      %903 = vmatpush1.msra.mxu0 %v470
      %904 = vmatprep.subr.mxu0 0.0
      %905 = vmatpush1.msra.mxu0 %v900
      %906 = vmatprep.subr.mxu0 0.0
      %907 = vmatpush1.msra.mxu0 0.0
      %908 = vmatprep.subr.mxu0 0.0
      %909 = vmatpush1.msra.mxu0 0.0
      %910 = vmatprep.subr.mxu0 0.0
      %911 = vmatpush1.msra.mxu0 0.0
      %912 = vmatprep.subr.mxu0 0.0
      %913 = vmatpush1.msra.mxu0 0.0
      %914 = vmatprep.subr.mxu0 0.0
      %915 = vmatpush1.msra.mxu0 0.0
      %916 = vmatprep.subr.mxu0 0.0
      %917 = vmatpush1.msra.mxu0 0.0
      %918 = vmatprep.subr.mxu0 0.0
      %919 = vmatpush1.msra.mxu0 0.0
      %920 = vmatprep.subr.mxu0 0.0
      %921 = vmatpush1.msra.mxu0 0.0
      %922 = vmatprep.subr.mxu0 0.0
      %923 = vmatpush1.msra.mxu0 0.0
      %924 = vmatprep.subr.mxu0 0.0
      %925 = vmatpush1.msra.mxu0 0.0
      %926 = vmatprep.subr.mxu0 0.0
      %927 = vmatpush1.msra.mxu0 0.0
      %928 = vmatprep.subr.mxu0 0.0
      %929 = vmatpush1.msra.mxu0 0.0
      %930 = vmatprep.subr.mxu0 0.0
      %931 = vmatpush1.msra.mxu0 0.0
      %932 = vmatprep.subr.mxu0 0.0
      %933 = vmatpush1.msra.mxu0 0.0
      %934 = vmatprep.subr.mxu0 0.0
      %935 = vmatpush1.msra.mxu0 0.0
      %936 = vmatprep.subr.mxu0 0.0
      %937 = vmatpush1.msra.mxu0 0.0
      %938 = vmatprep.subr.mxu0 0.0
      %939 = vmatpush1.msra.mxu0 0.0
      %940 = vmatprep.subr.mxu0 0.0
      %941 = vmatpush1.msra.mxu0 0.0
      %942 = vmatprep.subr.mxu0 0.0
      %943 = vmatpush1.msra.mxu0 0.0
      %944 = vmatprep.subr.mxu0 0.0
      %945 = vmatpush1.msra.mxu0 0.0
      %946 = vmatprep.subr.mxu0 0.0
      %947 = vmatpush1.msra.mxu0 0.0
      %948 = vmatprep.subr.mxu0 0.0
      %949 = vmatpush1.msra.mxu0 0.0
      %950 = vmatprep.subr.mxu0 0.0
      %951 = vmatpush1.msra.mxu0 0.0
      %952 = vmatprep.subr.mxu0 0.0
      %953 = vmatpush1.msra.mxu0 0.0
      %954 = vmatprep.subr.mxu0 0.0
      %955 = vmatpush1.msra.mxu0 0.0
      %956 = vmatprep.subr.mxu0 0.0
      %957 = vmatpush1.msra.mxu0 0.0
      %958 = vmatprep.subr.mxu0 0.0
      %959 = vmatpush1.msra.mxu0 0.0
      %960 = vmatprep.subr.mxu0 0.0
      %961 = vmatpush1.msra.mxu0 0.0
      %962 = vmatprep.subr.mxu0 0.0
      %963 = vmatpush1.msra.mxu0 0.0
      %964 = vmatprep.subr.mxu0 0.0
      %965 = vmatpush1.msra.mxu0 0.0
      %966 = vmatprep.mubr.f32.mxu0 0.0
      %967 = vmatmul.mubr.f32.gmra.mrb[0].mxu0 %v474
      %v968 = vpop.f32.mrb[0].mxu0
      %v969 = vadd.f32 0.0, %v968
      %v970 = vpop.f32.mrb[0].mxu0
      %971 = vmatprep.mubr.f32.mxu0 0.0
      %972 = vmatmul.mubr.f32.gmra.mrb[0].mxu0 %v477
      %v973 = vpop.f32.mrb[0].mxu0
      %v974 = vadd.f32 0.0, %v973
      %v975 = vpop.f32.mrb[0].mxu0
      %976 = vmatprep.mubr.f32.mxu0 0.0
      %977 = vmatmul.mubr.f32.gmra.mrb[0].mxu0 %v480
      %v978 = vpop.f32.mrb[0].mxu0
      %v979 = vadd.f32 0.0, %v978
      %v980 = vpop.f32.mrb[0].mxu0
      %981 = vmatprep.mubr.f32.mxu0 0.0
      %982 = vmatmul.mubr.f32.gmra.mrb[0].mxu0 %v483
      %v983 = vpop.f32.mrb[0].mxu0
      %v984 = vadd.f32 0.0, %v983
      %v985 = vpop.f32.mrb[0].mxu0
      %986 = vmatprep.mubr.f32.mxu0 0.0
      %987 = vmatmul.mubr.f32.gmra.mrb[0].mxu0 %v486
      %v988 = vpop.f32.mrb[0].mxu0
      %v989 = vadd.f32 0.0, %v988
      %v990 = vpop.f32.mrb[0].mxu0
      %991 = vmatprep.mubr.f32.mxu0 0.0
      %992 = vmatmul.mubr.f32.gmra.mrb[0].mxu0 %v489
      %v993 = vpop.f32.mrb[0].mxu0
      %v994 = vadd.f32 0.0, %v993
      %v995 = vpop.f32.mrb[0].mxu0
      %996 = vmatprep.mubr.f32.mxu0 0.0
      %997 = vmatmul.mubr.f32.gmra.mrb[0].mxu0 %v492
      %v998 = vpop.f32.mrb[0].mxu0
      %v999 = vadd.f32 0.0, %v998
      %v1000 = vpop.f32.mrb[0].mxu0
      %1001 = vmatprep.mubr.f32.mxu0 0.0
      %1002 = vmatmul.mubr.f32.gmra.mrb[0].mxu0 %v495
      %v1003 = vpop.f32.mrb[0].mxu0
      %v1004 = vadd.f32 0.0, %v1003
      %v1005 = vpop.f32.mrb[0].mxu0
      %1006 = vmatprep.mubr.f32.mxu0 0.0
      %1007 = vmatmul.mubr.f32.gmra.mrb[0].mxu0 %v498
      %v1008 = vpop.f32.mrb[0].mxu0
      %v1009 = vadd.f32 0.0, %v1008
      %v1010 = vpop.f32.mrb[0].mxu0
      %1011 = vmatprep.mubr.f32.mxu0 0.0
      %1012 = vmatmul.mubr.f32.gmra.mrb[0].mxu0 %v501
      %v1013 = vpop.f32.mrb[0].mxu0
      %v1014 = vadd.f32 0.0, %v1013
      %v1015 = vpop.f32.mrb[0].mxu0
      %1016 = vmatprep.mubr.f32.mxu0 0.0
      %1017 = vmatmul.mubr.f32.gmra.mrb[0].mxu0 %v504
      %v1018 = vpop.f32.mrb[0].mxu0
      %v1019 = vadd.f32 0.0, %v1018
      %v1020 = vpop.f32.mrb[0].mxu0
      %1021 = vmatprep.mubr.f32.mxu0 0.0
      %1022 = vmatmul.mubr.f32.gmra.mrb[0].mxu0 %v507
      %v1023 = vpop.f32.mrb[0].mxu0
      %v1024 = vadd.f32 0.0, %v1023
      %v1025 = vpop.f32.mrb[0].mxu0
      %1026 = vmatprep.mubr.f32.mxu0 0.0
      %1027 = vmatmul.mubr.f32.gmra.mrb[0].mxu0 %v510
      %v1028 = vpop.f32.mrb[0].mxu0
      %v1029 = vadd.f32 0.0, %v1028
      %v1030 = vpop.f32.mrb[0].mxu0
      %1031 = vmatprep.mubr.f32.mxu0 0.0
      %1032 = vmatmul.mubr.f32.gmra.mrb[0].mxu0 %v513
      %v1033 = vpop.f32.mrb[0].mxu0
      %v1034 = vadd.f32 0.0, %v1033
      %v1035 = vpop.f32.mrb[0].mxu0
      %1036 = vmatprep.mubr.f32.mxu0 0.0
      %1037 = vmatmul.mubr.f32.gmra.mrb[0].mxu0 %v516
      %v1038 = vpop.f32.mrb[0].mxu0
      %v1039 = vadd.f32 0.0, %v1038
      %v1040 = vpop.f32.mrb[0].mxu0
      %1041 = vmatprep.mubr.f32.mxu0 0.0
      %1042 = vmatmul.mubr.f32.gmra.mrb[0].mxu0 %v519
      %v1043 = vpop.f32.mrb[0].mxu0
      %v1044 = vadd.f32 0.0, %v1043
      %v1045 = vpop.f32.mrb[0].mxu0
      %1046 = vdwg.mxu0
      %vm1063 = vcmask 1046528
      %v1064 = vrot.slane %v969, 1
      %v1065 = vrot.slane %v974, 1
      %v1066 = vsel %vm1063, %v1064, %v1065
      %v1067 = vrot.slane %v979, 1
      %v1068 = vrot.slane %v984, 1
      %v1069 = vsel %vm1063, %v1067, %v1068
      %v1070 = vrot.slane %v989, 1
      %v1071 = vrot.slane %v994, 1
      %v1072 = vsel %vm1063, %v1070, %v1071
      %v1073 = vrot.slane %v999, 1
      %v1074 = vrot.slane %v1004, 1
      %v1075 = vsel %vm1063, %v1073, %v1074
      %v1076 = vrot.slane %v1009, 1
      %v1077 = vrot.slane %v1014, 1
      %v1078 = vsel %vm1063, %v1076, %v1077
      %v1079 = vrot.slane %v1019, 1
      %v1080 = vrot.slane %v1024, 1
      %v1081 = vsel %vm1063, %v1079, %v1080
      %v1082 = vrot.slane %v1029, 1
      %v1083 = vrot.slane %v1034, 1
      %v1084 = vsel %vm1063, %v1082, %v1083
      %v1085 = vrot.slane %v1039, 1
      %v1086 = vrot.slane %v1044, 1
      %v1087 = vsel %vm1063, %v1085, %v1086
      %v1104 = vsel %vm1063, %v1065, 0.0
      %v1105 = vsel %vm1063, %v1068, 0.0
      %v1106 = vsel %vm1063, %v1071, 0.0
      %v1107 = vsel %vm1063, %v1074, 0.0
      %v1108 = vsel %vm1063, %v1077, 0.0
      %v1109 = vsel %vm1063, %v1080, 0.0
      %v1110 = vsel %vm1063, %v1083, 0.0
      %v1111 = vsel %vm1063, %v1086, 0.0
      %v1112 = vadd.f32 %v883, %v1066
      %v1113 = vadd.f32 %v884, %v1104
      %v1114 = vadd.f32 %v885, %v1069
      %v1115 = vadd.f32 %v886, %v1105
      %v1116 = vadd.f32 %v887, %v1072
      %v1117 = vadd.f32 %v888, %v1106
      %v1118 = vadd.f32 %v889, %v1075
      %v1119 = vadd.f32 %v890, %v1107
      %v1120 = vadd.f32 %v891, %v1078
      %v1121 = vadd.f32 %v892, %v1108
      %v1122 = vadd.f32 %v893, %v1081
      %v1123 = vadd.f32 %v894, %v1109
      %v1124 = vadd.f32 %v895, %v1084
      %v1125 = vadd.f32 %v896, %v1110
      %v1126 = vadd.f32 %v897, %v1087
      %v1127 = vadd.f32 %v898, %v1111
      %1128 = vst.msk [vmem:[%s287] sm:$0xff] %vm449, %v1112
      %1129 = vst.msk [vmem:[%s287 + $0x8] sm:$0xff] %vm449, %v1113
      %1130 = vst.msk [vmem:[%s287 + $0x10] sm:$0xff] %vm449, %v1114
      %1131 = vst.msk [vmem:[%s287 + $0x18] sm:$0xff] %vm449, %v1115
      %1132 = vst.msk [vmem:[%s287 + $0x20] sm:$0xff] %vm449, %v1116
      %1133 = vst.msk [vmem:[%s287 + $0x28] sm:$0xff] %vm449, %v1117
      %1134 = vst.msk [vmem:[%s287 + $0x30] sm:$0xff] %vm449, %v1118
      %1135 = vst.msk [vmem:[%s287 + $0x38] sm:$0xff] %vm449, %v1119
      %1136 = vst.msk [vmem:[%s287 + $0x40] sm:$0xff] %vm449, %v1120
      %1137 = vst.msk [vmem:[%s287 + $0x48] sm:$0xff] %vm449, %v1121
      %1138 = vst.msk [vmem:[%s287 + $0x50] sm:$0xff] %vm449, %v1122
      %1139 = vst.msk [vmem:[%s287 + $0x58] sm:$0xff] %vm449, %v1123
      %1140 = vst.msk [vmem:[%s287 + $0x60] sm:$0xff] %vm449, %v1124
      %1141 = vst.msk [vmem:[%s287 + $0x68] sm:$0xff] %vm449, %v1125
      %1142 = vst.msk [vmem:[%s287 + $0x70] sm:$0xff] %vm449, %v1126
      %1143 = vst.msk [vmem:[%s287 + $0x78] sm:$0xff] %vm449, %v1127
      %v1144 = vsel %vm449, %v1112, 0.0
      %v1145 = vsel %vm449, %v1113, 0.0
      %v1146 = vadd.f32 %v1144, %v1145
      %v1147 = vsel %vm449, %v1114, 0.0
      %v1148 = vadd.f32 %v1146, %v1147
      %v1149 = vsel %vm449, %v1115, 0.0
      %v1150 = vadd.f32 %v1148, %v1149
      %v1151 = vsel %vm449, %v1116, 0.0
      %v1152 = vadd.f32 %v1150, %v1151
      %v1153 = vsel %vm449, %v1117, 0.0
      %v1154 = vadd.f32 %v1152, %v1153
      %v1155 = vsel %vm449, %v1118, 0.0
      %v1156 = vadd.f32 %v1154, %v1155
      %v1157 = vsel %vm449, %v1119, 0.0
      %v1158 = vadd.f32 %v1156, %v1157
      %v1159 = vsel %vm449, %v1120, 0.0
      %v1160 = vadd.f32 %v1158, %v1159
      %v1161 = vsel %vm449, %v1121, 0.0
      %v1162 = vadd.f32 %v1160, %v1161
      %v1163 = vsel %vm449, %v1122, 0.0
      %v1164 = vadd.f32 %v1162, %v1163
      %v1165 = vsel %vm449, %v1123, 0.0
      %v1166 = vadd.f32 %v1164, %v1165
      %v1167 = vsel %vm449, %v1124, 0.0
      %v1168 = vadd.f32 %v1166, %v1167
      %v1169 = vsel %vm449, %v1125, 0.0
      %v1170 = vadd.f32 %v1168, %v1169
      %v1171 = vsel %vm449, %v1126, 0.0
      %v1172 = vadd.f32 %v1170, %v1171
      %v1173 = vsel %vm449, %v1127, 0.0
      %v1174 = vadd.f32 %v1172, %v1173
      %v1175 = vrot.slane %v1174, 4
      %v1176 = vadd.f32 %v1174, %v1175
      %v1177 = vrot.slane %v1176, 2
      %v1178 = vadd.f32 %v1176, %v1177
      %v1179 = vrot.slane %v1178, 1
      %v1180 = vadd.f32 %v1178, %v1179
      %v1181 = vmul.f32 %v1112, %v1112
      %v1182 = vmul.f32 %v1113, %v1113
      %v1183 = vmul.f32 %v1114, %v1114
      %v1184 = vmul.f32 %v1115, %v1115
      %v1185 = vmul.f32 %v1116, %v1116
      %v1186 = vmul.f32 %v1117, %v1117
      %v1187 = vmul.f32 %v1118, %v1118
      %v1188 = vmul.f32 %v1119, %v1119
      %v1189 = vmul.f32 %v1120, %v1120
      %v1190 = vmul.f32 %v1121, %v1121
      %v1191 = vmul.f32 %v1122, %v1122
      %v1192 = vmul.f32 %v1123, %v1123
      %v1193 = vmul.f32 %v1124, %v1124
      %v1194 = vmul.f32 %v1125, %v1125
      %v1195 = vmul.f32 %v1126, %v1126
      %v1196 = vmul.f32 %v1127, %v1127
      %v1197 = vsel %vm449, %v1181, 0.0
      %v1198 = vsel %vm449, %v1182, 0.0
      %v1199 = vadd.f32 %v1197, %v1198
      %v1200 = vsel %vm449, %v1183, 0.0
      %v1201 = vadd.f32 %v1199, %v1200
      %v1202 = vsel %vm449, %v1184, 0.0
      %v1203 = vadd.f32 %v1201, %v1202
      %v1204 = vsel %vm449, %v1185, 0.0
      %v1205 = vadd.f32 %v1203, %v1204
      %v1206 = vsel %vm449, %v1186, 0.0
      %v1207 = vadd.f32 %v1205, %v1206
      %v1208 = vsel %vm449, %v1187, 0.0
      %v1209 = vadd.f32 %v1207, %v1208
      %v1210 = vsel %vm449, %v1188, 0.0
      %v1211 = vadd.f32 %v1209, %v1210
      %v1212 = vsel %vm449, %v1189, 0.0
      %v1213 = vadd.f32 %v1211, %v1212
      %v1214 = vsel %vm449, %v1190, 0.0
      %v1215 = vadd.f32 %v1213, %v1214
      %v1216 = vsel %vm449, %v1191, 0.0
      %v1217 = vadd.f32 %v1215, %v1216
      %v1218 = vsel %vm449, %v1192, 0.0
      %v1219 = vadd.f32 %v1217, %v1218
      %v1220 = vsel %vm449, %v1193, 0.0
      %v1221 = vadd.f32 %v1219, %v1220
      %v1222 = vsel %vm449, %v1194, 0.0
      %v1223 = vadd.f32 %v1221, %v1222
      %v1224 = vsel %vm449, %v1195, 0.0
      %v1225 = vadd.f32 %v1223, %v1224
      %v1226 = vsel %vm449, %v1196, 0.0
      %v1227 = vadd.f32 %v1225, %v1226
      %v1228 = vrot.slane %v1227, 4
      %v1229 = vadd.f32 %v1227, %v1228
      %v1230 = vrot.slane %v1229, 2
      %v1231 = vadd.f32 %v1229, %v1230
      %v1232 = vrot.slane %v1231, 1
      %v1233 = vadd.f32 %v1231, %v1232
      %v1234 = vsel %vm834, %v1180, %v1233
      %vm1235 = vcmask 58368
      %1236 = vst.msk [vmem:[%s296] sm:$0x3] %vm1235, %v1234
      %s1237 = smul.u32 8, %s21
      %p1238 = scmp.lt.s32.totalorder %s20, 1
      %s1239 = scalar_select %p1238, %s20, 1
      %p1240 = scmp.lt.s32.totalorder %s1237, 15
      %s1241 = scalar_select %p1240, %s1237, 15
      %s1242 = smul.addr %s1241, 2
      %s1243 = smul.addr %s1239, 32
      %s1244 = sadd.s32 %s1242, %s1243
      %s1245 = smul.addr %s1244, 8
      %s1246 = scalar_lea.vmem %s3, %s1245
      %p1247 = scmp.lt.s32.totalorder %s20, 1
      %s1248 = scalar_select %p1247, %s20, 1
      %p1249 = scmp.lt.s32.totalorder %s21, 1
      %s1250 = scalar_select %p1249, %s21, 1
      %s1251 = smul.addr %s1248, 2
      %s1252 = sadd.s32 %s1250, %s1251
      %s1253 = smul.addr %s1252, 2
      %s1254 = scalar_lea.vmem %s4, %s1253
      // Predicated region
      $region33: #{double_conv.3} parent=31 // pred_check
        %p1255 = pneg %p125
      $region34: #{double_conv.3} parent=31 // pred_check_branch
        %1257 = sbr.rel (%p1255) target = $region36
      $region35: #{double_conv.3} parent=31 // pred_region
        %s1258 = smul.u32 8, %s21
      $region36: #{double_conv.3} parent=31 // pred_fallthru
        _
      // Predicated region
      $region37: #{double_conv.3} parent=31 // pred_check
        %p1259 = pneg %p153
      $region38: #{double_conv.3} parent=31 // pred_check_branch
        %1261 = sbr.rel (%p1259) target = $region40
      $region39: #{double_conv.3} parent=31 // pred_region
        _
      $region40: #{double_conv.3} parent=31 // pred_fallthru
        _
    $region32: #{double_conv.3} parent=5 // pred_fallthru
      _
    %p1262 = scmp.le.s32.totalorder 2, %s11
    // Predicated region
    $region41: #{double_conv.3} parent=5 // pred_check
      %p1263 = pneg %p1262
    $region42: #{double_conv.3} parent=5 // pred_check_branch
      %1265 = sbr.rel (%p1263) target = $region44
    $region43: #{double_conv.3} parent=5 // pred_region
      %s1266 = ssub.s32 %s11, 2
      // Predicated region
      $region45: #{double_conv.3} parent=43 // pred_check
        %p1267 = pneg %p131
      $region46: #{double_conv.3} parent=43 // pred_check_branch
        %1269 = sbr.rel (%p1267) target = $region48
      $region47: #{double_conv.3} parent=43 // pred_region
        %s1270 = smul.u32 8, %s23
        %p1271 = scmp.lt.s32.totalorder %s22, 1
        %s1272 = scalar_select %p1271, %s22, 1
        %p1273 = scmp.lt.s32.totalorder %s1270, 15
        %s1274 = scalar_select %p1273, %s1270, 15
        %s1275 = smul.addr %s1274, 2
        %s1276 = smul.addr %s1272, 32
        %s1277 = sadd.s32 %s1275, %s1276
        %s1278 = smul.addr %s1277, 8
        %s1279 = scalar_lea.vmem %s3, %s1278
      $region48: #{double_conv.3} parent=43 // pred_fallthru
        _
      // Predicated region
      $region49: #{double_conv.3} parent=43 // pred_check
        %p1280 = pneg %p159
      $region50: #{double_conv.3} parent=43 // pred_check_branch
        %1282 = sbr.rel (%p1280) target = $region52
      $region51: #{double_conv.3} parent=43 // pred_region
        %p1283 = scmp.lt.s32.totalorder %s22, 1
        %s1284 = scalar_select %p1283, %s22, 1
        %p1285 = scmp.lt.s32.totalorder %s23, 1
        %s1286 = scalar_select %p1285, %s23, 1
        %s1287 = smul.addr %s1284, 2
        %s1288 = sadd.s32 %s1286, %s1287
        %s1289 = smul.addr %s1288, 2
        %s1290 = scalar_lea.vmem %s4, %s1289
      $region52: #{double_conv.3} parent=43 // pred_fallthru
        _
    $region44: #{double_conv.3} parent=5 // pred_fallthru
      _
  $region6: #{double_conv.3} parent=0 // loop_footer
    %s15 = sadd.s32 1, %s11
  $region7: #{double_conv.3} parent=0 // loop_footer_branch
    %10 = sbr.rel target = $region3
  $region8: #{double_conv.3} parent=0 // loop_exit
    _

// kernel: double_conv.4
$region0: #{double_conv.4}
  #allocation0 [shape = 'u32[]', space=smem, size = 0x4, offset = 0x4, fixed_abs, tag = 'smem constant byte address 0x4 - core index']
  #allocation1 [shape = 'u32[144,128]{1,0:T(1,128)}', space=vmem, size = 0x12000, scoped, tag = 'internal scratch']
  %s0 = inlined_call_operand.vmem [shape: f32[2,16,16,8], index: 0, kind: input, shape index: {}]
  %s1 = inlined_call_operand.vmem [shape: f32[2,2,2,16,8], index: 1, kind: input, shape index: {}]
  %s2 = inlined_call_operand.vmem [shape: f32[3,24,8], index: 2, kind: input, shape index: {}]
  %s3 = inlined_call_operand.vmem [shape: f32[1,1,8], index: 3, kind: input, shape index: {}]
  %s4 = inlined_call_operand.vmem [shape: f32[1,1,8], index: 4, kind: input, shape index: {}]
  %s5 = inlined_call_operand.vmem [shape: f32[2,16,16,8], index: 5, kind: output, shape index: {0}]
  %s6 = inlined_call_operand.vmem [shape: f32[2,2,2,8], index: 6, kind: output, shape index: {1}]
  %7 = xla_tuple %s5, %s6
  %s8 = sld [smem:[#allocation0]]
  $region61: #{double_conv.4} parent=0
    _
  %s10 = ssub.s32 1, %s8
  %s11 = scalar_select 0, %s10, %s8
  loop: start=0, step=1, limit=6
  $region2: #{double_conv.4} parent=0 // loop_pre_header
    _
  $region3: #{double_conv.4} parent=0 // loop_header
    %s13 = sphi 0, %s17
    %p14 = scmp.ge.s32.totalorder %s13, 6
    %s20 = sphi 0, %s32
    %s21 = sphi 0, %s28
    %s22 = sphi 0, %s20
    %s23 = sphi 0, %s21
    %s24 = sphi 0, %s22
    %s25 = sphi 0, %s23
    %s37 = sphi 0, %s39
    %s40 = sphi 0, %s37
    %s41 = sphi 0, %s40
    %s57 = sphi 0, %s41
    %s65 = sphi 0, %s67
    %s68 = sphi 0, %s65
    %s69 = sphi 0, %s68
    %s85 = sphi 0, %s69
    %s89 = sphi 0, %s89
    %s91 = sphi 0, %s89
    %s92 = sphi 0, %s91
    %s106 = sphi 0, %s92
    %s110 = sphi 0, %s110
    %s112 = sphi 0, %s110
    %s113 = sphi 0, %s112
    %s127 = sphi 0, %s113
    %s131 = sphi 0, %s131
    %s133 = sphi 0, %s131
    %s134 = sphi 0, %s133
    %s148 = sphi 0, %s134
    %s156 = sphi 0, %s158
    %s159 = sphi 0, %s156
    %s160 = sphi 0, %s159
    %s176 = sphi 0, %s160
    %s184 = sphi 0, %s186
    %s187 = sphi 0, %s184
    %s188 = sphi 0, %s187
    %s204 = sphi 0, %s188
  $region4: #{double_conv.4} parent=0 // loop_header_branch
    %16 = sbr.rel (%p14) target = $region8
  $region5: #{double_conv.4} parent=0 // loop_body
    %s18 = ssub.s32 %s13, 1
    %s19 = ssub.s32 %s13, 2
    %s26 = sadd.s32 1, %s21
    %p27 = scmp.ge.s32.totalorder %s26, 2
    %s28 = scalar_select %p27, 0, %s26
    %s29 = sadd.s32 1, %s20
    %s30 = scalar_select %p27, %s29, %s20
    %p31 = scmp.ge.s32.totalorder %s30, 2
    %s32 = scalar_select %p31, 0, %s30
    %s33 = ssub.s32 %s20, %s32
    %s34 = ssub.s32 %s21, %s28
    %s35 = sor.u32 %s33, %s34
    %p36 = scmp.eq.s32.totalorder %s35, 0
    %s38 = sadd.s32 %s37, 1
    %s39 = scalar_select %p36, %s37, %s38
    %p42 = pneg %p36
    %p43 = scmp.eq.s32.totalorder %s13, 3
    %p44 = por %p42, %p43
    %p45 = scmp.ne.s32.totalorder %s37, %s40
    %p46 = scmp.eq.s32.totalorder %s13, 0
    %p47 = por %p45, %p46
    %p48 = scmp.ne.s32.totalorder %s37, %s40
    %p49 = scmp.eq.s32.totalorder %s18, 3
    %p50 = por %p48, %p49
    %p51 = scmp.ne.s32.totalorder %s40, %s41
    %p52 = scmp.eq.s32.totalorder %s18, 0
    %p53 = por %p51, %p52
    %p54 = scmp.ne.s32.totalorder %s40, %s41
    %p55 = scmp.eq.s32.totalorder %s19, 3
    %p56 = por %p54, %p55
    %p58 = scmp.ne.s32.totalorder %s41, %s57
    %p59 = scmp.eq.s32.totalorder %s19, 0
    %p60 = por %p58, %p59
    %s61 = ssub.s32 %s20, %s32
    %s62 = ssub.s32 %s21, %s28
    %s63 = sor.u32 %s61, %s62
    %p64 = scmp.eq.s32.totalorder %s63, 0
    %s66 = sadd.s32 %s65, 1
    %s67 = scalar_select %p64, %s65, %s66
    %p70 = pneg %p64
    %p71 = scmp.eq.s32.totalorder %s13, 3
    %p72 = por %p70, %p71
    %p73 = scmp.ne.s32.totalorder %s65, %s68
    %p74 = scmp.eq.s32.totalorder %s13, 0
    %p75 = por %p73, %p74
    %p76 = scmp.ne.s32.totalorder %s65, %s68
    %p77 = scmp.eq.s32.totalorder %s18, 3
    %p78 = por %p76, %p77
    %p79 = scmp.ne.s32.totalorder %s68, %s69
    %p80 = scmp.eq.s32.totalorder %s18, 0
    %p81 = por %p79, %p80
    %p82 = scmp.ne.s32.totalorder %s68, %s69
    %p83 = scmp.eq.s32.totalorder %s19, 3
    %p84 = por %p82, %p83
    %p86 = scmp.ne.s32.totalorder %s69, %s85
    %p87 = scmp.eq.s32.totalorder %s19, 0
    %p88 = por %p86, %p87
    %s90 = sadd.s32 %s89, 1
    %p93 = scmp.eq.s32.totalorder %s13, 3
    %p94 = scmp.ne.s32.totalorder %s89, %s91
    %p95 = scmp.eq.s32.totalorder %s13, 0
    %p96 = por %p94, %p95
    %p97 = scmp.ne.s32.totalorder %s89, %s91
    %p98 = scmp.eq.s32.totalorder %s18, 3
    %p99 = por %p97, %p98
    %p100 = scmp.ne.s32.totalorder %s91, %s92
    %p101 = scmp.eq.s32.totalorder %s18, 0
    %p102 = por %p100, %p101
    %p103 = scmp.ne.s32.totalorder %s91, %s92
    %p104 = scmp.eq.s32.totalorder %s19, 3
    %p105 = por %p103, %p104
    %p107 = scmp.ne.s32.totalorder %s92, %s106
    %p108 = scmp.eq.s32.totalorder %s19, 0
    %p109 = por %p107, %p108
    %s111 = sadd.s32 %s110, 1
    %p114 = scmp.eq.s32.totalorder %s13, 3
    %p115 = scmp.ne.s32.totalorder %s110, %s112
    %p116 = scmp.eq.s32.totalorder %s13, 0
    %p117 = por %p115, %p116
    %p118 = scmp.ne.s32.totalorder %s110, %s112
    %p119 = scmp.eq.s32.totalorder %s18, 3
    %p120 = por %p118, %p119
    %p121 = scmp.ne.s32.totalorder %s112, %s113
    %p122 = scmp.eq.s32.totalorder %s18, 0
    %p123 = por %p121, %p122
    %p124 = scmp.ne.s32.totalorder %s112, %s113
    %p125 = scmp.eq.s32.totalorder %s19, 3
    %p126 = por %p124, %p125
    %p128 = scmp.ne.s32.totalorder %s113, %s127
    %p129 = scmp.eq.s32.totalorder %s19, 0
    %p130 = por %p128, %p129
    %s132 = sadd.s32 %s131, 1
    %p135 = scmp.eq.s32.totalorder %s13, 3
    %p136 = scmp.ne.s32.totalorder %s131, %s133
    %p137 = scmp.eq.s32.totalorder %s13, 0
    %p138 = por %p136, %p137
    %p139 = scmp.ne.s32.totalorder %s131, %s133
    %p140 = scmp.eq.s32.totalorder %s18, 3
    %p141 = por %p139, %p140
    %p142 = scmp.ne.s32.totalorder %s133, %s134
    %p143 = scmp.eq.s32.totalorder %s18, 0
    %p144 = por %p142, %p143
    %p145 = scmp.ne.s32.totalorder %s133, %s134
    %p146 = scmp.eq.s32.totalorder %s19, 3
    %p147 = por %p145, %p146
    %p149 = scmp.ne.s32.totalorder %s134, %s148
    %p150 = scmp.eq.s32.totalorder %s19, 0
    %p151 = por %p149, %p150
    %s152 = ssub.s32 %s20, %s32
    %s153 = ssub.s32 %s21, %s28
    %s154 = sor.u32 %s152, %s153
    %p155 = scmp.eq.s32.totalorder %s154, 0
    %s157 = sadd.s32 %s156, 1
    %s158 = scalar_select %p155, %s156, %s157
    %p161 = pneg %p155
    %p162 = scmp.eq.s32.totalorder %s13, 3
    %p163 = por %p161, %p162
    %p164 = scmp.ne.s32.totalorder %s156, %s159
    %p165 = scmp.eq.s32.totalorder %s13, 0
    %p166 = por %p164, %p165
    %p167 = scmp.ne.s32.totalorder %s156, %s159
    %p168 = scmp.eq.s32.totalorder %s18, 3
    %p169 = por %p167, %p168
    %p170 = scmp.ne.s32.totalorder %s159, %s160
    %p171 = scmp.eq.s32.totalorder %s18, 0
    %p172 = por %p170, %p171
    %p173 = scmp.ne.s32.totalorder %s159, %s160
    %p174 = scmp.eq.s32.totalorder %s19, 3
    %p175 = por %p173, %p174
    %p177 = scmp.ne.s32.totalorder %s160, %s176
    %p178 = scmp.eq.s32.totalorder %s19, 0
    %p179 = por %p177, %p178
    %s180 = ssub.s32 %s20, %s32
    %s181 = ssub.s32 %s21, %s28
    %s182 = sor.u32 %s180, %s181
    %p183 = scmp.eq.s32.totalorder %s182, 0
    %s185 = sadd.s32 %s184, 1
    %s186 = scalar_select %p183, %s184, %s185
    %p189 = pneg %p183
    %p190 = scmp.eq.s32.totalorder %s13, 3
    %p191 = por %p189, %p190
    %p192 = scmp.ne.s32.totalorder %s184, %s187
    %p193 = scmp.eq.s32.totalorder %s13, 0
    %p194 = por %p192, %p193
    %p195 = scmp.ne.s32.totalorder %s184, %s187
    %p196 = scmp.eq.s32.totalorder %s18, 3
    %p197 = por %p195, %p196
    %p198 = scmp.ne.s32.totalorder %s187, %s188
    %p199 = scmp.eq.s32.totalorder %s18, 0
    %p200 = por %p198, %p199
    %p201 = scmp.ne.s32.totalorder %s187, %s188
    %p202 = scmp.eq.s32.totalorder %s19, 3
    %p203 = por %p201, %p202
    %p205 = scmp.ne.s32.totalorder %s188, %s204
    %p206 = scmp.eq.s32.totalorder %s19, 0
    %p207 = por %p205, %p206
    %p208 = scmp.le.s32.totalorder 1, %s13
    %p209 = scmp.lt.s32.totalorder %s13, 5
    %p210 = pnand %p208, %p209
    %p211 = pneg %p210
    // Predicated region
    $region9: #{double_conv.4} parent=5 // pred_check
      _
    $region10: #{double_conv.4} parent=5 // pred_check_branch
      %213 = sbr.rel (%p210) target = $region12
    $region11: #{double_conv.4} parent=5 // pred_region
      %s214 = ssub.s32 %s13, 1
      // Predicated region
      $region13: #{double_conv.4} parent=11 // pred_check
        %p215 = pneg %p102
      $region14: #{double_conv.4} parent=11 // pred_check_branch
        %217 = sbr.rel (%p215) target = $region16
      $region15: #{double_conv.4} parent=11 // pred_region
        _
      $region16: #{double_conv.4} parent=11 // pred_fallthru
        _
      // Predicated region
      $region17: #{double_conv.4} parent=11 // pred_check
        %p218 = pneg %p123
      $region18: #{double_conv.4} parent=11 // pred_check_branch
        %220 = sbr.rel (%p218) target = $region20
      $region19: #{double_conv.4} parent=11 // pred_region
        _
      $region20: #{double_conv.4} parent=11 // pred_fallthru
        _
      // Predicated region
      $region21: #{double_conv.4} parent=11 // pred_check
        %p221 = pneg %p144
      $region22: #{double_conv.4} parent=11 // pred_check_branch
        %223 = sbr.rel (%p221) target = $region24
      $region23: #{double_conv.4} parent=11 // pred_region
        _
      $region24: #{double_conv.4} parent=11 // pred_fallthru
        _
    $region12: #{double_conv.4} parent=5 // pred_fallthru
      _
    %p224 = scmp.lt.s32.totalorder %s13, 4
    // Predicated region
    $region25: #{double_conv.4} parent=5 // pred_check
      %p225 = pneg %p224
    $region26: #{double_conv.4} parent=5 // pred_check_branch
      %227 = sbr.rel (%p225) target = $region28
    $region27: #{double_conv.4} parent=5 // pred_region
      // Predicated region
      $region29: #{double_conv.4} parent=27 // pred_check
        %p228 = pneg %p47
      $region30: #{double_conv.4} parent=27 // pred_check_branch
        %230 = sbr.rel (%p228) target = $region32
      $region31: #{double_conv.4} parent=27 // pred_region
        %s231 = smul.u32 8, %s21
        %p232 = scmp.lt.s32.totalorder %s20, 1
        %s233 = scalar_select %p232, %s20, 1
        %p234 = scmp.lt.s32.totalorder %s231, 15
        %s235 = scalar_select %p234, %s231, 15
        %s236 = smul.addr %s235, 2
        %s237 = smul.addr %s233, 32
        %s238 = sadd.s32 %s236, %s237
        %s239 = smul.addr %s238, 8
        %s240 = scalar_lea.vmem %s0, %s239
        %s241 = smul.u32 8, %s21
      $region32: #{double_conv.4} parent=27 // pred_fallthru
        _
      // Predicated region
      $region33: #{double_conv.4} parent=27 // pred_check
        %p242 = pneg %p75
      $region34: #{double_conv.4} parent=27 // pred_check_branch
        %244 = sbr.rel (%p242) target = $region36
      $region35: #{double_conv.4} parent=27 // pred_region
        %p245 = scmp.lt.s32.totalorder %s20, 1
        %s246 = scalar_select %p245, %s20, 1
        %p247 = scmp.lt.s32.totalorder %s21, 1
        %s248 = scalar_select %p247, %s21, 1
        %s249 = smul.addr %s248, 4
        %s250 = smul.addr %s246, 8
        %s251 = sadd.s32 %s249, %s250
        %s252 = smul.addr %s251, 8
        %s253 = scalar_lea.vmem %s1, %s252
      $region36: #{double_conv.4} parent=27 // pred_fallthru
        _
    $region28: #{double_conv.4} parent=5 // pred_fallthru
      _
    %p254 = scmp.le.s32.totalorder 1, %s13
    %p255 = scmp.lt.s32.totalorder %s13, 5
    %p256 = pnand %p254, %p255
    %p257 = pneg %p256
    // Predicated region
    $region37: #{double_conv.4} parent=5 // pred_check
      _
    $region38: #{double_conv.4} parent=5 // pred_check_branch
      %259 = sbr.rel (%p256) target = $region40
    $region39: #{double_conv.4} parent=5 // pred_region
      %s260 = ssub.s32 %s13, 1
      %s261 = smul.u32 8, %s23
      %p262 = scmp.lt.s32.totalorder %s22, 1
      %s263 = scalar_select %p262, %s22, 1
      %p264 = scmp.lt.s32.totalorder %s261, 15
      %s265 = scalar_select %p264, %s261, 15
      %s266 = smul.addr %s265, 2
      %s267 = smul.addr %s263, 32
      %s268 = sadd.s32 %s266, %s267
      %s269 = smul.addr %s268, 8
      %s270 = scalar_lea.vmem %s0, %s269
      %p271 = pneg %p53
      %p272 = pneg %p50
      %p273 = scmp.lt.s32.totalorder %s22, 1
      %s274 = scalar_select %p273, %s22, 1
      %p275 = scmp.lt.s32.totalorder %s23, 1
      %s276 = scalar_select %p275, %s23, 1
      %s277 = smul.addr %s276, 4
      %s278 = smul.addr %s274, 8
      %s279 = sadd.s32 %s277, %s278
      %s280 = smul.addr %s279, 8
      %s281 = scalar_lea.vmem %s1, %s280
      %p282 = pneg %p81
      %p283 = pneg %p78
      %p284 = pneg %p102
      %p285 = pneg %p99
      %p286 = pneg %p123
      %p287 = pneg %p120
      %p288 = pneg %p144
      %p289 = pneg %p141
      %p290 = pneg %p172
      %p291 = pneg %p169
      %s292 = smul.u32 8, %s23
      %p293 = scmp.lt.s32.totalorder %s22, 1
      %s294 = scalar_select %p293, %s22, 1
      %p295 = scmp.lt.s32.totalorder %s292, 15
      %s296 = scalar_select %p295, %s292, 15
      %s297 = smul.addr %s296, 2
      %s298 = smul.addr %s294, 32
      %s299 = sadd.s32 %s297, %s298
      %s300 = smul.addr %s299, 8
      %s301 = scalar_lea.vmem %s5, %s300
      %p302 = pneg %p200
      %p303 = pneg %p197
      %p304 = scmp.lt.s32.totalorder %s22, 1
      %s305 = scalar_select %p304, %s22, 1
      %p306 = scmp.lt.s32.totalorder %s23, 1
      %s307 = scalar_select %p306, %s23, 1
      %s308 = smul.addr %s305, 2
      %s309 = sadd.s32 %s307, %s308
      %s310 = smul.addr %s309, 2
      %s311 = scalar_lea.vmem %s6, %s310
      %s312 = smul.u32 8, %s23
      %p313 = scmp.lt.s32.totalorder %s22, 1
      %s314 = scalar_select %p313, %s22, 1
      %p315 = scmp.lt.s32.totalorder %s312, 15
      %s316 = scalar_select %p315, %s312, 15
      %s317 = smul.addr %s316, 2
      %s318 = smul.addr %s314, 32
      %s319 = sadd.s32 %s317, %s318
      %s320 = smul.addr %s319, 8
      %s321 = scalar_lea.vmem %s0, %s320
      %s322 = smul.u32 8, %s23
      %p323 = scmp.lt.s32.totalorder %s22, 1
      %s324 = scalar_select %p323, %s22, 1
      %p325 = scmp.lt.s32.totalorder %s23, 1
      %s326 = scalar_select %p325, %s23, 1
      %s327 = smul.addr %s326, 4
      %s328 = smul.addr %s324, 8
      %s329 = sadd.s32 %s327, %s328
      %s330 = smul.addr %s329, 8
      %s331 = scalar_lea.vmem %s1, %s330
      %s332 = smul.u32 8, %s23
      %p333 = scmp.lt.s32.totalorder %s22, 1
      %s334 = scalar_select %p333, %s22, 1
      %p335 = scmp.lt.s32.totalorder %s332, 15
      %s336 = scalar_select %p335, %s332, 15
      %s337 = smul.addr %s336, 2
      %s338 = smul.addr %s334, 32
      %s339 = sadd.s32 %s337, %s338
      %s340 = smul.addr %s339, 8
      %s341 = scalar_lea.vmem %s5, %s340
      %s342 = smul.u32 8, %s23
      %p343 = scmp.lt.s32.totalorder %s22, 1
      %s344 = scalar_select %p343, %s22, 1
      %p345 = scmp.lt.s32.totalorder %s23, 1
      %s346 = scalar_select %p345, %s23, 1
      %s347 = smul.addr %s344, 2
      %s348 = sadd.s32 %s346, %s347
      %s349 = smul.addr %s348, 2
      %s350 = scalar_lea.vmem %s6, %s349
      %v351 = vld [vmem:[%s321] sm:$0xff]
      %v352 = vld [vmem:[%s321 + $0x8] sm:$0xff]
      %v353 = vld [vmem:[%s321 + $0x10] sm:$0xff]
      %v354 = vld [vmem:[%s321 + $0x18] sm:$0xff]
      %v355 = vld [vmem:[%s321 + $0x20] sm:$0xff]
      %v356 = vld [vmem:[%s321 + $0x28] sm:$0xff]
      %v357 = vld [vmem:[%s321 + $0x30] sm:$0xff]
      %v358 = vld [vmem:[%s321 + $0x38] sm:$0xff]
      %v359 = vld [vmem:[%s321 + $0x40] sm:$0xff]
      %v360 = vld [vmem:[%s321 + $0x48] sm:$0xff]
      %v361 = vld [vmem:[%s321 + $0x50] sm:$0xff]
      %v362 = vld [vmem:[%s321 + $0x58] sm:$0xff]
      %v363 = vld [vmem:[%s321 + $0x60] sm:$0xff]
      %v364 = vld [vmem:[%s321 + $0x68] sm:$0xff]
      %v365 = vld [vmem:[%s321 + $0x70] sm:$0xff]
      %v366 = vld [vmem:[%s321 + $0x78] sm:$0xff]
      %v367 = vld [vmem:[%s331] sm:$0xff]
      %v368 = vld [vmem:[%s331 + $0x8] sm:$0xff]
      %s369 = scalar_lea.vmem %s331, 16
      %v370 = vld [vmem:[%s369] sm:$0xff]
      %v371 = vld [vmem:[%s369 + $0x8] sm:$0xff]
      %v372 = vld [vmem:[%s3] sm:$0x1]
      %v373 = vld [vmem:[%s4] sm:$0x1]
      %v375 = vlaneseq
      %v376 = vshrl.u32 %v375, 7
      %v377 = vsub.s32 0, %v376
      %v378 = vrot.slane %v372, %v377
      %v380 = vmul.f32 %v351, %v378
      %v381 = vmul.f32 %v352, %v378
      %v382 = vmul.f32 %v353, %v378
      %v383 = vmul.f32 %v354, %v378
      %v384 = vmul.f32 %v355, %v378
      %v385 = vmul.f32 %v356, %v378
      %v386 = vmul.f32 %v357, %v378
      %v387 = vmul.f32 %v358, %v378
      %v388 = vmul.f32 %v359, %v378
      %v389 = vmul.f32 %v360, %v378
      %v390 = vmul.f32 %v361, %v378
      %v391 = vmul.f32 %v362, %v378
      %v392 = vmul.f32 %v363, %v378
      %v393 = vmul.f32 %v364, %v378
      %v394 = vmul.f32 %v365, %v378
      %v395 = vmul.f32 %v366, %v378
      %v397 = vlaneseq
      %v398 = vshrl.u32 %v397, 7
      %v399 = vsub.s32 0, %v398
      %v400 = vrot.slane %v373, %v399
      %v402 = vadd.f32 %v380, %v400
      %v403 = vadd.f32 %v381, %v400
      %v404 = vadd.f32 %v382, %v400
      %v405 = vadd.f32 %v383, %v400
      %v406 = vadd.f32 %v384, %v400
      %v407 = vadd.f32 %v385, %v400
      %v408 = vadd.f32 %v386, %v400
      %v409 = vadd.f32 %v387, %v400
      %v410 = vadd.f32 %v388, %v400
      %v411 = vadd.f32 %v389, %v400
      %v412 = vadd.f32 %v390, %v400
      %v413 = vadd.f32 %v391, %v400
      %v414 = vadd.f32 %v392, %v400
      %v415 = vadd.f32 %v393, %v400
      %v416 = vadd.f32 %v394, %v400
      %v417 = vadd.f32 %v395, %v400
      %v418 = vmax.f32 %v402, 0.0
      %v419 = vmax.f32 %v403, 0.0
      %v420 = vmax.f32 %v404, 0.0
      %v421 = vmax.f32 %v405, 0.0
      %v422 = vmax.f32 %v406, 0.0
      %v423 = vmax.f32 %v407, 0.0
      %v424 = vmax.f32 %v408, 0.0
      %v425 = vmax.f32 %v409, 0.0
      %v426 = vmax.f32 %v410, 0.0
      %v427 = vmax.f32 %v411, 0.0
      %v428 = vmax.f32 %v412, 0.0
      %v429 = vmax.f32 %v413, 0.0
      %v430 = vmax.f32 %v414, 0.0
      %v431 = vmax.f32 %v415, 0.0
      %v432 = vmax.f32 %v416, 0.0
      %v433 = vmax.f32 %v417, 0.0
      %v434 = vmul.f32 %v367, %v378
      %v435 = vmul.f32 %v368, %v378
      %v436 = vadd.f32 %v434, %v400
      %v437 = vadd.f32 %v435, %v400
      %v438 = vmax.f32 %v436, 0.0
      %v439 = vmax.f32 %v437, 0.0
      %p440 = scmp.gt.s32.totalorder %s23, 0
      %s441 = scalar_select %p440, 1, 0
      %s442 = scvt.s32.f32 %s441
      %v443 = vstv %s442
      %v444 = vmul.f32 %v438, %v443
      %v445 = vmul.f32 %v439, %v443
      %v446 = vmul.f32 %v370, %v378
      %v447 = vmul.f32 %v371, %v378
      %v448 = vadd.f32 %v446, %v400
      %v449 = vadd.f32 %v447, %v400
      %v450 = vmax.f32 %v448, 0.0
      %v451 = vmax.f32 %v449, 0.0
      %p452 = scmp.lt.s32.totalorder %s23, 1
      %s453 = scalar_select %p452, 1, 0
      %s454 = scvt.s32.f32 %s453
      %v455 = vstv %s454
      %v456 = vmul.f32 %v450, %v455
      %v457 = vmul.f32 %v451, %v455
      %474 = vrot.lane.b32.xlu0 %v418, 8
      %v475 = vpop.permute.xlu0 %474
      %476 = vrot.lane.b32.xlu0 %v419, 8
      %v477 = vpop.permute.xlu0 %476
      %478 = vrot.lane.b32.xlu0 %v420, 8
      %v479 = vpop.permute.xlu0 %478
      %480 = vrot.lane.b32.xlu0 %v421, 8
      %v481 = vpop.permute.xlu0 %480
      %482 = vrot.lane.b32.xlu0 %v422, 8
      %v483 = vpop.permute.xlu0 %482
      %484 = vrot.lane.b32.xlu0 %v423, 8
      %v485 = vpop.permute.xlu0 %484
      %486 = vrot.lane.b32.xlu0 %v424, 8
      %v487 = vpop.permute.xlu0 %486
      %488 = vrot.lane.b32.xlu0 %v425, 8
      %v489 = vpop.permute.xlu0 %488
      %490 = vrot.lane.b32.xlu0 %v426, 8
      %v491 = vpop.permute.xlu0 %490
      %492 = vrot.lane.b32.xlu0 %v427, 8
      %v493 = vpop.permute.xlu0 %492
      %494 = vrot.lane.b32.xlu0 %v428, 8
      %v495 = vpop.permute.xlu0 %494
      %496 = vrot.lane.b32.xlu0 %v429, 8
      %v497 = vpop.permute.xlu0 %496
      %498 = vrot.lane.b32.xlu0 %v430, 8
      %v499 = vpop.permute.xlu0 %498
      %500 = vrot.lane.b32.xlu0 %v431, 8
      %v501 = vpop.permute.xlu0 %500
      %502 = vrot.lane.b32.xlu0 %v432, 8
      %v503 = vpop.permute.xlu0 %502
      %504 = vrot.lane.b32.xlu0 %v433, 8
      %v505 = vpop.permute.xlu0 %504
      %524 = vrot.lane.b32.xlu0 %v420, 16
      %v525 = vpop.permute.xlu0 %524
      %526 = vrot.lane.b32.xlu0 %v421, 16
      %v527 = vpop.permute.xlu0 %526
      %528 = vrot.lane.b32.xlu0 %v422, 16
      %v529 = vpop.permute.xlu0 %528
      %530 = vrot.lane.b32.xlu0 %v423, 16
      %v531 = vpop.permute.xlu0 %530
      %532 = vrot.lane.b32.xlu0 %v424, 16
      %v533 = vpop.permute.xlu0 %532
      %534 = vrot.lane.b32.xlu0 %v425, 16
      %v535 = vpop.permute.xlu0 %534
      %536 = vrot.lane.b32.xlu0 %v426, 16
      %v537 = vpop.permute.xlu0 %536
      %538 = vrot.lane.b32.xlu0 %v427, 16
      %v539 = vpop.permute.xlu0 %538
      %540 = vrot.lane.b32.xlu0 %v428, 16
      %v541 = vpop.permute.xlu0 %540
      %542 = vrot.lane.b32.xlu0 %v429, 16
      %v543 = vpop.permute.xlu0 %542
      %544 = vrot.lane.b32.xlu0 %v430, 16
      %v545 = vpop.permute.xlu0 %544
      %546 = vrot.lane.b32.xlu0 %v431, 16
      %v547 = vpop.permute.xlu0 %546
      %548 = vrot.lane.b32.xlu0 %v432, 16
      %v549 = vpop.permute.xlu0 %548
      %550 = vrot.lane.b32.xlu0 %v433, 16
      %v551 = vpop.permute.xlu0 %550
      %552 = vrot.lane.b32.xlu0 %v456, 16
      %v553 = vpop.permute.xlu0 %552
      %554 = vrot.lane.b32.xlu0 %v457, 16
      %v555 = vpop.permute.xlu0 %554
      %vm572 = vcmask 64512
      %v573 = vsel %vm572, %v444, %v475
      %v574 = vsel %vm572, %v445, %v477
      %v575 = vsel %vm572, %v418, %v479
      %v576 = vsel %vm572, %v419, %v481
      %v577 = vsel %vm572, %v420, %v483
      %v578 = vsel %vm572, %v421, %v485
      %v579 = vsel %vm572, %v422, %v487
      %v580 = vsel %vm572, %v423, %v489
      %v581 = vsel %vm572, %v424, %v491
      %v582 = vsel %vm572, %v425, %v493
      %v583 = vsel %vm572, %v426, %v495
      %v584 = vsel %vm572, %v427, %v497
      %v585 = vsel %vm572, %v428, %v499
      %v586 = vsel %vm572, %v429, %v501
      %v587 = vsel %vm572, %v430, %v503
      %v588 = vsel %vm572, %v431, %v505
      %vm589 = vcmask 130048
      %v590 = vsel %vm589, %v573, %v525
      %v591 = vsel %vm589, %v574, %v527
      %v592 = vsel %vm589, %v575, %v529
      %v593 = vsel %vm589, %v576, %v531
      %v594 = vsel %vm589, %v577, %v533
      %v595 = vsel %vm589, %v578, %v535
      %v596 = vsel %vm589, %v579, %v537
      %v597 = vsel %vm589, %v580, %v539
      %v598 = vsel %vm589, %v581, %v541
      %v599 = vsel %vm589, %v582, %v543
      %v600 = vsel %vm589, %v583, %v545
      %v601 = vsel %vm589, %v584, %v547
      %v602 = vsel %vm589, %v585, %v549
      %v603 = vsel %vm589, %v586, %v551
      %v604 = vsel %vm589, %v587, %v553
      %v605 = vsel %vm589, %v588, %v555
      %v606 = vld [vmem:[%s2] sm:$0xff]
      %v607 = vld [vmem:[%s2 + $0x8] sm:$0xff]
      %v608 = vld [vmem:[%s2 + $0x10] sm:$0xff]
      %v609 = vld [vmem:[%s2 + $0x18] sm:$0xff]
      %v610 = vld [vmem:[%s2 + $0x20] sm:$0xff]
      %v611 = vld [vmem:[%s2 + $0x28] sm:$0xff]
      %v612 = vld [vmem:[%s2 + $0x30] sm:$0xff]
      %v613 = vld [vmem:[%s2 + $0x38] sm:$0xff]
      %v614 = vld [vmem:[%s2 + $0x40] sm:$0xff]
      %vm615 = vcmask 195584
      %v617 = vsel %vm615, %v590, 0
      %v620 = vsel %vm615, %v591, 0
      %v623 = vsel %vm615, %v592, 0
      %v626 = vsel %vm615, %v593, 0
      %v629 = vsel %vm615, %v594, 0
      %v632 = vsel %vm615, %v595, 0
      %v635 = vsel %vm615, %v596, 0
      %v638 = vsel %vm615, %v597, 0
      %v641 = vsel %vm615, %v598, 0
      %v644 = vsel %vm615, %v599, 0
      %v647 = vsel %vm615, %v600, 0
      %v650 = vsel %vm615, %v601, 0
      %v653 = vsel %vm615, %v602, 0
      %v656 = vsel %vm615, %v603, 0
      %v659 = vsel %vm615, %v604, 0
      %v662 = vsel %vm615, %v605, 0
      %664 = vmatprep.subr.mxu0 0.0
      %665 = vmatpush1.msra.mxu0 %v609
      %666 = vmatprep.subr.mxu0 0.0
      %667 = vmatpush1.msra.mxu0 %v610
      %668 = vmatprep.subr.mxu0 0.0
      %669 = vmatpush1.msra.mxu0 %v611
      %670 = vmatprep.subr.mxu0 0.0
      %671 = vmatpush1.msra.mxu0 0.0
      %672 = vmatprep.subr.mxu0 0.0
      %673 = vmatpush1.msra.mxu0 0.0
      %674 = vmatprep.subr.mxu0 0.0
      %675 = vmatpush1.msra.mxu0 0.0
      %676 = vmatprep.subr.mxu0 0.0
      %677 = vmatpush1.msra.mxu0 0.0
      %678 = vmatprep.subr.mxu0 0.0
      %679 = vmatpush1.msra.mxu0 0.0
      %680 = vmatprep.subr.mxu0 0.0
      %681 = vmatpush1.msra.mxu0 0.0
      %682 = vmatprep.subr.mxu0 0.0
      %683 = vmatpush1.msra.mxu0 0.0
      %684 = vmatprep.subr.mxu0 0.0
      %685 = vmatpush1.msra.mxu0 0.0
      %686 = vmatprep.subr.mxu0 0.0
      %687 = vmatpush1.msra.mxu0 0.0
      %688 = vmatprep.subr.mxu0 0.0
      %689 = vmatpush1.msra.mxu0 0.0
      %690 = vmatprep.subr.mxu0 0.0
      %691 = vmatpush1.msra.mxu0 0.0
      %692 = vmatprep.subr.mxu0 0.0
      %693 = vmatpush1.msra.mxu0 0.0
      %694 = vmatprep.subr.mxu0 0.0
      %695 = vmatpush1.msra.mxu0 0.0
      %696 = vmatprep.subr.mxu0 0.0
      %697 = vmatpush1.msra.mxu0 0.0
      %698 = vmatprep.subr.mxu0 0.0
      %699 = vmatpush1.msra.mxu0 0.0
      %700 = vmatprep.subr.mxu0 0.0
      %701 = vmatpush1.msra.mxu0 0.0
      %702 = vmatprep.subr.mxu0 0.0
      %703 = vmatpush1.msra.mxu0 0.0
      %704 = vmatprep.subr.mxu0 0.0
      %705 = vmatpush1.msra.mxu0 0.0
      %706 = vmatprep.subr.mxu0 0.0
      %707 = vmatpush1.msra.mxu0 0.0
      %708 = vmatprep.subr.mxu0 0.0
      %709 = vmatpush1.msra.mxu0 0.0
      %710 = vmatprep.subr.mxu0 0.0
      %711 = vmatpush1.msra.mxu0 0.0
      %712 = vmatprep.subr.mxu0 0.0
      %713 = vmatpush1.msra.mxu0 0.0
      %714 = vmatprep.subr.mxu0 0.0
      %715 = vmatpush1.msra.mxu0 0.0
      %716 = vmatprep.subr.mxu0 0.0
      %717 = vmatpush1.msra.mxu0 0.0
      %718 = vmatprep.subr.mxu0 0.0
      %719 = vmatpush1.msra.mxu0 0.0
      %720 = vmatprep.subr.mxu0 0.0
      %721 = vmatpush1.msra.mxu0 0.0
      %722 = vmatprep.subr.mxu0 0.0
      %723 = vmatpush1.msra.mxu0 0.0
      %724 = vmatprep.subr.mxu0 0.0
      %725 = vmatpush1.msra.mxu0 0.0
      %726 = vmatprep.subr.mxu0 0.0
      %727 = vmatpush1.msra.mxu0 0.0
      %728 = vmatprep.mubr.f32.mxu0 0.0
      %729 = vmatmul.mubr.f32.gmra.mrb[0].mxu0 %v617
      %v730 = vpop.f32.mrb[0].mxu0
      %v731 = vadd.f32 0.0, %v730
      %v732 = vpop.f32.mrb[0].mxu0
      %733 = vmatprep.mubr.f32.mxu0 0.0
      %734 = vmatmul.mubr.f32.gmra.mrb[0].mxu0 %v620
      %v735 = vpop.f32.mrb[0].mxu0
      %v736 = vadd.f32 0.0, %v735
      %v737 = vpop.f32.mrb[0].mxu0
      %738 = vmatprep.mubr.f32.mxu0 0.0
      %739 = vmatmul.mubr.f32.gmra.mrb[0].mxu0 %v623
      %v740 = vpop.f32.mrb[0].mxu0
      %v741 = vadd.f32 0.0, %v740
      %v742 = vpop.f32.mrb[0].mxu0
      %743 = vmatprep.mubr.f32.mxu0 0.0
      %744 = vmatmul.mubr.f32.gmra.mrb[0].mxu0 %v626
      %v745 = vpop.f32.mrb[0].mxu0
      %v746 = vadd.f32 0.0, %v745
      %v747 = vpop.f32.mrb[0].mxu0
      %748 = vmatprep.mubr.f32.mxu0 0.0
      %749 = vmatmul.mubr.f32.gmra.mrb[0].mxu0 %v629
      %v750 = vpop.f32.mrb[0].mxu0
      %v751 = vadd.f32 0.0, %v750
      %v752 = vpop.f32.mrb[0].mxu0
      %753 = vmatprep.mubr.f32.mxu0 0.0
      %754 = vmatmul.mubr.f32.gmra.mrb[0].mxu0 %v632
      %v755 = vpop.f32.mrb[0].mxu0
      %v756 = vadd.f32 0.0, %v755
      %v757 = vpop.f32.mrb[0].mxu0
      %758 = vmatprep.mubr.f32.mxu0 0.0
      %759 = vmatmul.mubr.f32.gmra.mrb[0].mxu0 %v635
      %v760 = vpop.f32.mrb[0].mxu0
      %v761 = vadd.f32 0.0, %v760
      %v762 = vpop.f32.mrb[0].mxu0
      %763 = vmatprep.mubr.f32.mxu0 0.0
      %764 = vmatmul.mubr.f32.gmra.mrb[0].mxu0 %v638
      %v765 = vpop.f32.mrb[0].mxu0
      %v766 = vadd.f32 0.0, %v765
      %v767 = vpop.f32.mrb[0].mxu0
      %768 = vmatprep.mubr.f32.mxu0 0.0
      %769 = vmatmul.mubr.f32.gmra.mrb[0].mxu0 %v641
      %v770 = vpop.f32.mrb[0].mxu0
      %v771 = vadd.f32 0.0, %v770
      %v772 = vpop.f32.mrb[0].mxu0
      %773 = vmatprep.mubr.f32.mxu0 0.0
      %774 = vmatmul.mubr.f32.gmra.mrb[0].mxu0 %v644
      %v775 = vpop.f32.mrb[0].mxu0
      %v776 = vadd.f32 0.0, %v775
      %v777 = vpop.f32.mrb[0].mxu0
      %778 = vmatprep.mubr.f32.mxu0 0.0
      %779 = vmatmul.mubr.f32.gmra.mrb[0].mxu0 %v647
      %v780 = vpop.f32.mrb[0].mxu0
      %v781 = vadd.f32 0.0, %v780
      %v782 = vpop.f32.mrb[0].mxu0
      %783 = vmatprep.mubr.f32.mxu0 0.0
      %784 = vmatmul.mubr.f32.gmra.mrb[0].mxu0 %v650
      %v785 = vpop.f32.mrb[0].mxu0
      %v786 = vadd.f32 0.0, %v785
      %v787 = vpop.f32.mrb[0].mxu0
      %788 = vmatprep.mubr.f32.mxu0 0.0
      %789 = vmatmul.mubr.f32.gmra.mrb[0].mxu0 %v653
      %v790 = vpop.f32.mrb[0].mxu0
      %v791 = vadd.f32 0.0, %v790
      %v792 = vpop.f32.mrb[0].mxu0
      %793 = vmatprep.mubr.f32.mxu0 0.0
      %794 = vmatmul.mubr.f32.gmra.mrb[0].mxu0 %v656
      %v795 = vpop.f32.mrb[0].mxu0
      %v796 = vadd.f32 0.0, %v795
      %v797 = vpop.f32.mrb[0].mxu0
      %798 = vmatprep.mubr.f32.mxu0 0.0
      %799 = vmatmul.mubr.f32.gmra.mrb[0].mxu0 %v659
      %v800 = vpop.f32.mrb[0].mxu0
      %v801 = vadd.f32 0.0, %v800
      %v802 = vpop.f32.mrb[0].mxu0
      %803 = vmatprep.mubr.f32.mxu0 0.0
      %804 = vmatmul.mubr.f32.gmra.mrb[0].mxu0 %v662
      %v805 = vpop.f32.mrb[0].mxu0
      %v806 = vadd.f32 0.0, %v805
      %v807 = vpop.f32.mrb[0].mxu0
      %808 = vdwg.mxu0
      %809 = vmatprep.subr.mxu0 0.0
      %810 = vmatpush1.msra.mxu0 %v606
      %811 = vmatprep.subr.mxu0 0.0
      %812 = vmatpush1.msra.mxu0 %v607
      %813 = vmatprep.subr.mxu0 0.0
      %814 = vmatpush1.msra.mxu0 %v608
      %815 = vmatprep.subr.mxu0 0.0
      %816 = vmatpush1.msra.mxu0 0.0
      %817 = vmatprep.subr.mxu0 0.0
      %818 = vmatpush1.msra.mxu0 0.0
      %819 = vmatprep.subr.mxu0 0.0
      %820 = vmatpush1.msra.mxu0 0.0
      %821 = vmatprep.subr.mxu0 0.0
      %822 = vmatpush1.msra.mxu0 0.0
      %823 = vmatprep.subr.mxu0 0.0
      %824 = vmatpush1.msra.mxu0 0.0
      %825 = vmatprep.subr.mxu0 0.0
      %826 = vmatpush1.msra.mxu0 0.0
      %827 = vmatprep.subr.mxu0 0.0
      %828 = vmatpush1.msra.mxu0 0.0
      %829 = vmatprep.subr.mxu0 0.0
      %830 = vmatpush1.msra.mxu0 0.0
      %831 = vmatprep.subr.mxu0 0.0
      %832 = vmatpush1.msra.mxu0 0.0
      %833 = vmatprep.subr.mxu0 0.0
      %834 = vmatpush1.msra.mxu0 0.0
      %835 = vmatprep.subr.mxu0 0.0
      %836 = vmatpush1.msra.mxu0 0.0
      %837 = vmatprep.subr.mxu0 0.0
      %838 = vmatpush1.msra.mxu0 0.0
      %839 = vmatprep.subr.mxu0 0.0
      %840 = vmatpush1.msra.mxu0 0.0
      %841 = vmatprep.subr.mxu0 0.0
      %842 = vmatpush1.msra.mxu0 0.0
      %843 = vmatprep.subr.mxu0 0.0
      %844 = vmatpush1.msra.mxu0 0.0
      %845 = vmatprep.subr.mxu0 0.0
      %846 = vmatpush1.msra.mxu0 0.0
      %847 = vmatprep.subr.mxu0 0.0
      %848 = vmatpush1.msra.mxu0 0.0
      %849 = vmatprep.subr.mxu0 0.0
      %850 = vmatpush1.msra.mxu0 0.0
      %851 = vmatprep.subr.mxu0 0.0
      %852 = vmatpush1.msra.mxu0 0.0
      %853 = vmatprep.subr.mxu0 0.0
      %854 = vmatpush1.msra.mxu0 0.0
      %855 = vmatprep.subr.mxu0 0.0
      %856 = vmatpush1.msra.mxu0 0.0
      %857 = vmatprep.subr.mxu0 0.0
      %858 = vmatpush1.msra.mxu0 0.0
      %859 = vmatprep.subr.mxu0 0.0
      %860 = vmatpush1.msra.mxu0 0.0
      %861 = vmatprep.subr.mxu0 0.0
      %862 = vmatpush1.msra.mxu0 0.0
      %863 = vmatprep.subr.mxu0 0.0
      %864 = vmatpush1.msra.mxu0 0.0
      %865 = vmatprep.subr.mxu0 0.0
      %866 = vmatpush1.msra.mxu0 0.0
      %867 = vmatprep.subr.mxu0 0.0
      %868 = vmatpush1.msra.mxu0 0.0
      %869 = vmatprep.subr.mxu0 0.0
      %870 = vmatpush1.msra.mxu0 0.0
      %871 = vmatprep.subr.mxu0 0.0
      %872 = vmatpush1.msra.mxu0 0.0
      %873 = vmatprep.mubr.f32.mxu0 0.0
      %874 = vmatmul.mubr.f32.gmra.mrb[0].mxu0 %v617
      %v875 = vpop.f32.mrb[0].mxu0
      %v876 = vadd.f32 0.0, %v875
      %v877 = vpop.f32.mrb[0].mxu0
      %878 = vmatprep.mubr.f32.mxu0 0.0
      %879 = vmatmul.mubr.f32.gmra.mrb[0].mxu0 %v620
      %v880 = vpop.f32.mrb[0].mxu0
      %v881 = vadd.f32 0.0, %v880
      %v882 = vpop.f32.mrb[0].mxu0
      %883 = vmatprep.mubr.f32.mxu0 0.0
      %884 = vmatmul.mubr.f32.gmra.mrb[0].mxu0 %v623
      %v885 = vpop.f32.mrb[0].mxu0
      %v886 = vadd.f32 0.0, %v885
      %v887 = vpop.f32.mrb[0].mxu0
      %888 = vmatprep.mubr.f32.mxu0 0.0
      %889 = vmatmul.mubr.f32.gmra.mrb[0].mxu0 %v626
      %v890 = vpop.f32.mrb[0].mxu0
      %v891 = vadd.f32 0.0, %v890
      %v892 = vpop.f32.mrb[0].mxu0
      %893 = vmatprep.mubr.f32.mxu0 0.0
      %894 = vmatmul.mubr.f32.gmra.mrb[0].mxu0 %v629
      %v895 = vpop.f32.mrb[0].mxu0
      %v896 = vadd.f32 0.0, %v895
      %v897 = vpop.f32.mrb[0].mxu0
      %898 = vmatprep.mubr.f32.mxu0 0.0
      %899 = vmatmul.mubr.f32.gmra.mrb[0].mxu0 %v632
      %v900 = vpop.f32.mrb[0].mxu0
      %v901 = vadd.f32 0.0, %v900
      %v902 = vpop.f32.mrb[0].mxu0
      %903 = vmatprep.mubr.f32.mxu0 0.0
      %904 = vmatmul.mubr.f32.gmra.mrb[0].mxu0 %v635
      %v905 = vpop.f32.mrb[0].mxu0
      %v906 = vadd.f32 0.0, %v905
      %v907 = vpop.f32.mrb[0].mxu0
      %908 = vmatprep.mubr.f32.mxu0 0.0
      %909 = vmatmul.mubr.f32.gmra.mrb[0].mxu0 %v638
      %v910 = vpop.f32.mrb[0].mxu0
      %v911 = vadd.f32 0.0, %v910
      %v912 = vpop.f32.mrb[0].mxu0
      %913 = vmatprep.mubr.f32.mxu0 0.0
      %914 = vmatmul.mubr.f32.gmra.mrb[0].mxu0 %v641
      %v915 = vpop.f32.mrb[0].mxu0
      %v916 = vadd.f32 0.0, %v915
      %v917 = vpop.f32.mrb[0].mxu0
      %918 = vmatprep.mubr.f32.mxu0 0.0
      %919 = vmatmul.mubr.f32.gmra.mrb[0].mxu0 %v644
      %v920 = vpop.f32.mrb[0].mxu0
      %v921 = vadd.f32 0.0, %v920
      %v922 = vpop.f32.mrb[0].mxu0
      %923 = vmatprep.mubr.f32.mxu0 0.0
      %924 = vmatmul.mubr.f32.gmra.mrb[0].mxu0 %v647
      %v925 = vpop.f32.mrb[0].mxu0
      %v926 = vadd.f32 0.0, %v925
      %v927 = vpop.f32.mrb[0].mxu0
      %928 = vmatprep.mubr.f32.mxu0 0.0
      %929 = vmatmul.mubr.f32.gmra.mrb[0].mxu0 %v650
      %v930 = vpop.f32.mrb[0].mxu0
      %v931 = vadd.f32 0.0, %v930
      %v932 = vpop.f32.mrb[0].mxu0
      %933 = vmatprep.mubr.f32.mxu0 0.0
      %934 = vmatmul.mubr.f32.gmra.mrb[0].mxu0 %v653
      %v935 = vpop.f32.mrb[0].mxu0
      %v936 = vadd.f32 0.0, %v935
      %v937 = vpop.f32.mrb[0].mxu0
      %938 = vmatprep.mubr.f32.mxu0 0.0
      %939 = vmatmul.mubr.f32.gmra.mrb[0].mxu0 %v656
      %v940 = vpop.f32.mrb[0].mxu0
      %v941 = vadd.f32 0.0, %v940
      %v942 = vpop.f32.mrb[0].mxu0
      %943 = vmatprep.mubr.f32.mxu0 0.0
      %944 = vmatmul.mubr.f32.gmra.mrb[0].mxu0 %v659
      %v945 = vpop.f32.mrb[0].mxu0
      %v946 = vadd.f32 0.0, %v945
      %v947 = vpop.f32.mrb[0].mxu0
      %948 = vmatprep.mubr.f32.mxu0 0.0
      %949 = vmatmul.mubr.f32.gmra.mrb[0].mxu0 %v662
      %v950 = vpop.f32.mrb[0].mxu0
      %v951 = vadd.f32 0.0, %v950
      %v952 = vpop.f32.mrb[0].mxu0
      %953 = vdwg.mxu0
      %vm970 = vcmask 1040384
      %v971 = vrot.slane %v876, 7
      %v972 = vrot.slane %v881, 7
      %v973 = vsel %vm970, %v971, %v972
      %v974 = vrot.slane %v886, 7
      %v975 = vrot.slane %v891, 7
      %v976 = vsel %vm970, %v974, %v975
      %v977 = vrot.slane %v896, 7
      %v978 = vrot.slane %v901, 7
      %v979 = vsel %vm970, %v977, %v978
      %v980 = vrot.slane %v906, 7
      %v981 = vrot.slane %v911, 7
      %v982 = vsel %vm970, %v980, %v981
      %v983 = vrot.slane %v916, 7
      %v984 = vrot.slane %v921, 7
      %v985 = vsel %vm970, %v983, %v984
      %v986 = vrot.slane %v926, 7
      %v987 = vrot.slane %v931, 7
      %v988 = vsel %vm970, %v986, %v987
      %v989 = vrot.slane %v936, 7
      %v990 = vrot.slane %v941, 7
      %v991 = vsel %vm970, %v989, %v990
      %v992 = vrot.slane %v946, 7
      %v993 = vrot.slane %v951, 7
      %v994 = vsel %vm970, %v992, %v993
      %v1011 = vsel %vm970, 0.0, %v971
      %v1012 = vsel %vm970, 0.0, %v974
      %v1013 = vsel %vm970, 0.0, %v977
      %v1014 = vsel %vm970, 0.0, %v980
      %v1015 = vsel %vm970, 0.0, %v983
      %v1016 = vsel %vm970, 0.0, %v986
      %v1017 = vsel %vm970, 0.0, %v989
      %v1018 = vsel %vm970, 0.0, %v992
      %v1019 = vadd.f32 %v731, %v1011
      %v1020 = vadd.f32 %v736, %v973
      %v1021 = vadd.f32 %v741, %v1012
      %v1022 = vadd.f32 %v746, %v976
      %v1023 = vadd.f32 %v751, %v1013
      %v1024 = vadd.f32 %v756, %v979
      %v1025 = vadd.f32 %v761, %v1014
      %v1026 = vadd.f32 %v766, %v982
      %v1027 = vadd.f32 %v771, %v1015
      %v1028 = vadd.f32 %v776, %v985
      %v1029 = vadd.f32 %v781, %v1016
      %v1030 = vadd.f32 %v786, %v988
      %v1031 = vadd.f32 %v791, %v1017
      %v1032 = vadd.f32 %v796, %v991
      %v1033 = vadd.f32 %v801, %v1018
      %v1034 = vadd.f32 %v806, %v994
      %1035 = vmatprep.subr.mxu0 0.0
      %1036 = vmatpush1.msra.mxu0 %v612
      %1037 = vmatprep.subr.mxu0 0.0
      %1038 = vmatpush1.msra.mxu0 %v613
      %1039 = vmatprep.subr.mxu0 0.0
      %1040 = vmatpush1.msra.mxu0 %v614
      %1041 = vmatprep.subr.mxu0 0.0
      %1042 = vmatpush1.msra.mxu0 0.0
      %1043 = vmatprep.subr.mxu0 0.0
      %1044 = vmatpush1.msra.mxu0 0.0
      %1045 = vmatprep.subr.mxu0 0.0
      %1046 = vmatpush1.msra.mxu0 0.0
      %1047 = vmatprep.subr.mxu0 0.0
      %1048 = vmatpush1.msra.mxu0 0.0
      %1049 = vmatprep.subr.mxu0 0.0
      %1050 = vmatpush1.msra.mxu0 0.0
      %1051 = vmatprep.subr.mxu0 0.0
      %1052 = vmatpush1.msra.mxu0 0.0
      %1053 = vmatprep.subr.mxu0 0.0
      %1054 = vmatpush1.msra.mxu0 0.0
      %1055 = vmatprep.subr.mxu0 0.0
      %1056 = vmatpush1.msra.mxu0 0.0
      %1057 = vmatprep.subr.mxu0 0.0
      %1058 = vmatpush1.msra.mxu0 0.0
      %1059 = vmatprep.subr.mxu0 0.0
      %1060 = vmatpush1.msra.mxu0 0.0
      %1061 = vmatprep.subr.mxu0 0.0
      %1062 = vmatpush1.msra.mxu0 0.0
      %1063 = vmatprep.subr.mxu0 0.0
      %1064 = vmatpush1.msra.mxu0 0.0
      %1065 = vmatprep.subr.mxu0 0.0
      %1066 = vmatpush1.msra.mxu0 0.0
      %1067 = vmatprep.subr.mxu0 0.0
      %1068 = vmatpush1.msra.mxu0 0.0
      %1069 = vmatprep.subr.mxu0 0.0
      %1070 = vmatpush1.msra.mxu0 0.0
      %1071 = vmatprep.subr.mxu0 0.0
      %1072 = vmatpush1.msra.mxu0 0.0
      %1073 = vmatprep.subr.mxu0 0.0
      %1074 = vmatpush1.msra.mxu0 0.0
      %1075 = vmatprep.subr.mxu0 0.0
      %1076 = vmatpush1.msra.mxu0 0.0
      %1077 = vmatprep.subr.mxu0 0.0
      %1078 = vmatpush1.msra.mxu0 0.0
      %1079 = vmatprep.subr.mxu0 0.0
      %1080 = vmatpush1.msra.mxu0 0.0
      %1081 = vmatprep.subr.mxu0 0.0
      %1082 = vmatpush1.msra.mxu0 0.0
      %1083 = vmatprep.subr.mxu0 0.0
      %1084 = vmatpush1.msra.mxu0 0.0
      %1085 = vmatprep.subr.mxu0 0.0
      %1086 = vmatpush1.msra.mxu0 0.0
      %1087 = vmatprep.subr.mxu0 0.0
      %1088 = vmatpush1.msra.mxu0 0.0
      %1089 = vmatprep.subr.mxu0 0.0
      %1090 = vmatpush1.msra.mxu0 0.0
      %1091 = vmatprep.subr.mxu0 0.0
      %1092 = vmatpush1.msra.mxu0 0.0
      %1093 = vmatprep.subr.mxu0 0.0
      %1094 = vmatpush1.msra.mxu0 0.0
      %1095 = vmatprep.subr.mxu0 0.0
      %1096 = vmatpush1.msra.mxu0 0.0
      %1097 = vmatprep.subr.mxu0 0.0
      %1098 = vmatpush1.msra.mxu0 0.0
      %1099 = vmatprep.mubr.f32.mxu0 0.0
      %1100 = vmatmul.mubr.f32.gmra.mrb[0].mxu0 %v617
      %v1101 = vpop.f32.mrb[0].mxu0
      %v1102 = vadd.f32 0.0, %v1101
      %v1103 = vpop.f32.mrb[0].mxu0
      %1104 = vmatprep.mubr.f32.mxu0 0.0
      %1105 = vmatmul.mubr.f32.gmra.mrb[0].mxu0 %v620
      %v1106 = vpop.f32.mrb[0].mxu0
      %v1107 = vadd.f32 0.0, %v1106
      %v1108 = vpop.f32.mrb[0].mxu0
      %1109 = vmatprep.mubr.f32.mxu0 0.0
      %1110 = vmatmul.mubr.f32.gmra.mrb[0].mxu0 %v623
      %v1111 = vpop.f32.mrb[0].mxu0
      %v1112 = vadd.f32 0.0, %v1111
      %v1113 = vpop.f32.mrb[0].mxu0
      %1114 = vmatprep.mubr.f32.mxu0 0.0
      %1115 = vmatmul.mubr.f32.gmra.mrb[0].mxu0 %v626
      %v1116 = vpop.f32.mrb[0].mxu0
      %v1117 = vadd.f32 0.0, %v1116
      %v1118 = vpop.f32.mrb[0].mxu0
      %1119 = vmatprep.mubr.f32.mxu0 0.0
      %1120 = vmatmul.mubr.f32.gmra.mrb[0].mxu0 %v629
      %v1121 = vpop.f32.mrb[0].mxu0
      %v1122 = vadd.f32 0.0, %v1121
      %v1123 = vpop.f32.mrb[0].mxu0
      %1124 = vmatprep.mubr.f32.mxu0 0.0
      %1125 = vmatmul.mubr.f32.gmra.mrb[0].mxu0 %v632
      %v1126 = vpop.f32.mrb[0].mxu0
      %v1127 = vadd.f32 0.0, %v1126
      %v1128 = vpop.f32.mrb[0].mxu0
      %1129 = vmatprep.mubr.f32.mxu0 0.0
      %1130 = vmatmul.mubr.f32.gmra.mrb[0].mxu0 %v635
      %v1131 = vpop.f32.mrb[0].mxu0
      %v1132 = vadd.f32 0.0, %v1131
      %v1133 = vpop.f32.mrb[0].mxu0
      %1134 = vmatprep.mubr.f32.mxu0 0.0
      %1135 = vmatmul.mubr.f32.gmra.mrb[0].mxu0 %v638
      %v1136 = vpop.f32.mrb[0].mxu0
      %v1137 = vadd.f32 0.0, %v1136
      %v1138 = vpop.f32.mrb[0].mxu0
      %1139 = vmatprep.mubr.f32.mxu0 0.0
      %1140 = vmatmul.mubr.f32.gmra.mrb[0].mxu0 %v641
      %v1141 = vpop.f32.mrb[0].mxu0
      %v1142 = vadd.f32 0.0, %v1141
      %v1143 = vpop.f32.mrb[0].mxu0
      %1144 = vmatprep.mubr.f32.mxu0 0.0
      %1145 = vmatmul.mubr.f32.gmra.mrb[0].mxu0 %v644
      %v1146 = vpop.f32.mrb[0].mxu0
      %v1147 = vadd.f32 0.0, %v1146
      %v1148 = vpop.f32.mrb[0].mxu0
      %1149 = vmatprep.mubr.f32.mxu0 0.0
      %1150 = vmatmul.mubr.f32.gmra.mrb[0].mxu0 %v647
      %v1151 = vpop.f32.mrb[0].mxu0
      %v1152 = vadd.f32 0.0, %v1151
      %v1153 = vpop.f32.mrb[0].mxu0
      %1154 = vmatprep.mubr.f32.mxu0 0.0
      %1155 = vmatmul.mubr.f32.gmra.mrb[0].mxu0 %v650
      %v1156 = vpop.f32.mrb[0].mxu0
      %v1157 = vadd.f32 0.0, %v1156
      %v1158 = vpop.f32.mrb[0].mxu0
      %1159 = vmatprep.mubr.f32.mxu0 0.0
      %1160 = vmatmul.mubr.f32.gmra.mrb[0].mxu0 %v653
      %v1161 = vpop.f32.mrb[0].mxu0
      %v1162 = vadd.f32 0.0, %v1161
      %v1163 = vpop.f32.mrb[0].mxu0
      %1164 = vmatprep.mubr.f32.mxu0 0.0
      %1165 = vmatmul.mubr.f32.gmra.mrb[0].mxu0 %v656
      %v1166 = vpop.f32.mrb[0].mxu0
      %v1167 = vadd.f32 0.0, %v1166
      %v1168 = vpop.f32.mrb[0].mxu0
      %1169 = vmatprep.mubr.f32.mxu0 0.0
      %1170 = vmatmul.mubr.f32.gmra.mrb[0].mxu0 %v659
      %v1171 = vpop.f32.mrb[0].mxu0
      %v1172 = vadd.f32 0.0, %v1171
      %v1173 = vpop.f32.mrb[0].mxu0
      %1174 = vmatprep.mubr.f32.mxu0 0.0
      %1175 = vmatmul.mubr.f32.gmra.mrb[0].mxu0 %v662
      %v1176 = vpop.f32.mrb[0].mxu0
      %v1177 = vadd.f32 0.0, %v1176
      %v1178 = vpop.f32.mrb[0].mxu0
      %1179 = vdwg.mxu0
      %vm1196 = vcmask 1046528
      %v1197 = vrot.slane %v1102, 1
      %v1198 = vrot.slane %v1107, 1
      %v1199 = vsel %vm1196, %v1197, %v1198
      %v1200 = vrot.slane %v1112, 1
      %v1201 = vrot.slane %v1117, 1
      %v1202 = vsel %vm1196, %v1200, %v1201
      %v1203 = vrot.slane %v1122, 1
      %v1204 = vrot.slane %v1127, 1
      %v1205 = vsel %vm1196, %v1203, %v1204
      %v1206 = vrot.slane %v1132, 1
      %v1207 = vrot.slane %v1137, 1
      %v1208 = vsel %vm1196, %v1206, %v1207
      %v1209 = vrot.slane %v1142, 1
      %v1210 = vrot.slane %v1147, 1
      %v1211 = vsel %vm1196, %v1209, %v1210
      %v1212 = vrot.slane %v1152, 1
      %v1213 = vrot.slane %v1157, 1
      %v1214 = vsel %vm1196, %v1212, %v1213
      %v1215 = vrot.slane %v1162, 1
      %v1216 = vrot.slane %v1167, 1
      %v1217 = vsel %vm1196, %v1215, %v1216
      %v1218 = vrot.slane %v1172, 1
      %v1219 = vrot.slane %v1177, 1
      %v1220 = vsel %vm1196, %v1218, %v1219
      %v1237 = vsel %vm1196, %v1198, 0.0
      %v1238 = vsel %vm1196, %v1201, 0.0
      %v1239 = vsel %vm1196, %v1204, 0.0
      %v1240 = vsel %vm1196, %v1207, 0.0
      %v1241 = vsel %vm1196, %v1210, 0.0
      %v1242 = vsel %vm1196, %v1213, 0.0
      %v1243 = vsel %vm1196, %v1216, 0.0
      %v1244 = vsel %vm1196, %v1219, 0.0
      %v1245 = vadd.f32 %v1019, %v1199
      %v1246 = vadd.f32 %v1020, %v1237
      %v1247 = vadd.f32 %v1021, %v1202
      %v1248 = vadd.f32 %v1022, %v1238
      %v1249 = vadd.f32 %v1023, %v1205
      %v1250 = vadd.f32 %v1024, %v1239
      %v1251 = vadd.f32 %v1025, %v1208
      %v1252 = vadd.f32 %v1026, %v1240
      %v1253 = vadd.f32 %v1027, %v1211
      %v1254 = vadd.f32 %v1028, %v1241
      %v1255 = vadd.f32 %v1029, %v1214
      %v1256 = vadd.f32 %v1030, %v1242
      %v1257 = vadd.f32 %v1031, %v1217
      %v1258 = vadd.f32 %v1032, %v1243
      %v1259 = vadd.f32 %v1033, %v1220
      %v1260 = vadd.f32 %v1034, %v1244
      %1261 = vst.msk [vmem:[%s341] sm:$0xff] %vm572, %v1245
      %1262 = vst.msk [vmem:[%s341 + $0x8] sm:$0xff] %vm572, %v1246
      %1263 = vst.msk [vmem:[%s341 + $0x10] sm:$0xff] %vm572, %v1247
      %1264 = vst.msk [vmem:[%s341 + $0x18] sm:$0xff] %vm572, %v1248
      %1265 = vst.msk [vmem:[%s341 + $0x20] sm:$0xff] %vm572, %v1249
      %1266 = vst.msk [vmem:[%s341 + $0x28] sm:$0xff] %vm572, %v1250
      %1267 = vst.msk [vmem:[%s341 + $0x30] sm:$0xff] %vm572, %v1251
      %1268 = vst.msk [vmem:[%s341 + $0x38] sm:$0xff] %vm572, %v1252
      %1269 = vst.msk [vmem:[%s341 + $0x40] sm:$0xff] %vm572, %v1253
      %1270 = vst.msk [vmem:[%s341 + $0x48] sm:$0xff] %vm572, %v1254
      %1271 = vst.msk [vmem:[%s341 + $0x50] sm:$0xff] %vm572, %v1255
      %1272 = vst.msk [vmem:[%s341 + $0x58] sm:$0xff] %vm572, %v1256
      %1273 = vst.msk [vmem:[%s341 + $0x60] sm:$0xff] %vm572, %v1257
      %1274 = vst.msk [vmem:[%s341 + $0x68] sm:$0xff] %vm572, %v1258
      %1275 = vst.msk [vmem:[%s341 + $0x70] sm:$0xff] %vm572, %v1259
      %1276 = vst.msk [vmem:[%s341 + $0x78] sm:$0xff] %vm572, %v1260
      %v1277 = vsel %vm572, %v1245, 0.0
      %v1278 = vsel %vm572, %v1246, 0.0
      %v1279 = vadd.f32 %v1277, %v1278
      %v1280 = vsel %vm572, %v1247, 0.0
      %v1281 = vadd.f32 %v1279, %v1280
      %v1282 = vsel %vm572, %v1248, 0.0
      %v1283 = vadd.f32 %v1281, %v1282
      %v1284 = vsel %vm572, %v1249, 0.0
      %v1285 = vadd.f32 %v1283, %v1284
      %v1286 = vsel %vm572, %v1250, 0.0
      %v1287 = vadd.f32 %v1285, %v1286
      %v1288 = vsel %vm572, %v1251, 0.0
      %v1289 = vadd.f32 %v1287, %v1288
      %v1290 = vsel %vm572, %v1252, 0.0
      %v1291 = vadd.f32 %v1289, %v1290
      %v1292 = vsel %vm572, %v1253, 0.0
      %v1293 = vadd.f32 %v1291, %v1292
      %v1294 = vsel %vm572, %v1254, 0.0
      %v1295 = vadd.f32 %v1293, %v1294
      %v1296 = vsel %vm572, %v1255, 0.0
      %v1297 = vadd.f32 %v1295, %v1296
      %v1298 = vsel %vm572, %v1256, 0.0
      %v1299 = vadd.f32 %v1297, %v1298
      %v1300 = vsel %vm572, %v1257, 0.0
      %v1301 = vadd.f32 %v1299, %v1300
      %v1302 = vsel %vm572, %v1258, 0.0
      %v1303 = vadd.f32 %v1301, %v1302
      %v1304 = vsel %vm572, %v1259, 0.0
      %v1305 = vadd.f32 %v1303, %v1304
      %v1306 = vsel %vm572, %v1260, 0.0
      %v1307 = vadd.f32 %v1305, %v1306
      %v1308 = vrot.slane %v1307, 4
      %v1309 = vadd.f32 %v1307, %v1308
      %v1310 = vrot.slane %v1309, 2
      %v1311 = vadd.f32 %v1309, %v1310
      %v1312 = vrot.slane %v1311, 1
      %v1313 = vadd.f32 %v1311, %v1312
      %v1314 = vmul.f32 %v1245, %v1245
      %v1315 = vmul.f32 %v1246, %v1246
      %v1316 = vmul.f32 %v1247, %v1247
      %v1317 = vmul.f32 %v1248, %v1248
      %v1318 = vmul.f32 %v1249, %v1249
      %v1319 = vmul.f32 %v1250, %v1250
      %v1320 = vmul.f32 %v1251, %v1251
      %v1321 = vmul.f32 %v1252, %v1252
      %v1322 = vmul.f32 %v1253, %v1253
      %v1323 = vmul.f32 %v1254, %v1254
      %v1324 = vmul.f32 %v1255, %v1255
      %v1325 = vmul.f32 %v1256, %v1256
      %v1326 = vmul.f32 %v1257, %v1257
      %v1327 = vmul.f32 %v1258, %v1258
      %v1328 = vmul.f32 %v1259, %v1259
      %v1329 = vmul.f32 %v1260, %v1260
      %v1330 = vsel %vm572, %v1314, 0.0
      %v1331 = vsel %vm572, %v1315, 0.0
      %v1332 = vadd.f32 %v1330, %v1331
      %v1333 = vsel %vm572, %v1316, 0.0
      %v1334 = vadd.f32 %v1332, %v1333
      %v1335 = vsel %vm572, %v1317, 0.0
      %v1336 = vadd.f32 %v1334, %v1335
      %v1337 = vsel %vm572, %v1318, 0.0
      %v1338 = vadd.f32 %v1336, %v1337
      %v1339 = vsel %vm572, %v1319, 0.0
      %v1340 = vadd.f32 %v1338, %v1339
      %v1341 = vsel %vm572, %v1320, 0.0
      %v1342 = vadd.f32 %v1340, %v1341
      %v1343 = vsel %vm572, %v1321, 0.0
      %v1344 = vadd.f32 %v1342, %v1343
      %v1345 = vsel %vm572, %v1322, 0.0
      %v1346 = vadd.f32 %v1344, %v1345
      %v1347 = vsel %vm572, %v1323, 0.0
      %v1348 = vadd.f32 %v1346, %v1347
      %v1349 = vsel %vm572, %v1324, 0.0
      %v1350 = vadd.f32 %v1348, %v1349
      %v1351 = vsel %vm572, %v1325, 0.0
      %v1352 = vadd.f32 %v1350, %v1351
      %v1353 = vsel %vm572, %v1326, 0.0
      %v1354 = vadd.f32 %v1352, %v1353
      %v1355 = vsel %vm572, %v1327, 0.0
      %v1356 = vadd.f32 %v1354, %v1355
      %v1357 = vsel %vm572, %v1328, 0.0
      %v1358 = vadd.f32 %v1356, %v1357
      %v1359 = vsel %vm572, %v1329, 0.0
      %v1360 = vadd.f32 %v1358, %v1359
      %v1361 = vrot.slane %v1360, 4
      %v1362 = vadd.f32 %v1360, %v1361
      %v1363 = vrot.slane %v1362, 2
      %v1364 = vadd.f32 %v1362, %v1363
      %v1365 = vrot.slane %v1364, 1
      %v1366 = vadd.f32 %v1364, %v1365
      %v1367 = vsel %vm970, %v1313, %v1366
      %vm1368 = vcmask 58368
      %1369 = vst.msk [vmem:[%s350] sm:$0x3] %vm1368, %v1367
      %s1370 = smul.u32 8, %s23
      %p1371 = scmp.lt.s32.totalorder %s22, 1
      %s1372 = scalar_select %p1371, %s22, 1
      %p1373 = scmp.lt.s32.totalorder %s1370, 15
      %s1374 = scalar_select %p1373, %s1370, 15
      %s1375 = smul.addr %s1374, 2
      %s1376 = smul.addr %s1372, 32
      %s1377 = sadd.s32 %s1375, %s1376
      %s1378 = smul.addr %s1377, 8
      %s1379 = scalar_lea.vmem %s5, %s1378
      %p1380 = scmp.lt.s32.totalorder %s22, 1
      %s1381 = scalar_select %p1380, %s22, 1
      %p1382 = scmp.lt.s32.totalorder %s23, 1
      %s1383 = scalar_select %p1382, %s23, 1
      %s1384 = smul.addr %s1381, 2
      %s1385 = sadd.s32 %s1383, %s1384
      %s1386 = smul.addr %s1385, 2
      %s1387 = scalar_lea.vmem %s6, %s1386
      // Predicated region
      $region41: #{double_conv.4} parent=39 // pred_check
        %p1388 = pneg %p169
      $region42: #{double_conv.4} parent=39 // pred_check_branch
        %1390 = sbr.rel (%p1388) target = $region44
      $region43: #{double_conv.4} parent=39 // pred_region
        %s1391 = smul.u32 8, %s23
      $region44: #{double_conv.4} parent=39 // pred_fallthru
        _
      // Predicated region
      $region45: #{double_conv.4} parent=39 // pred_check
        %p1392 = pneg %p197
      $region46: #{double_conv.4} parent=39 // pred_check_branch
        %1394 = sbr.rel (%p1392) target = $region48
      $region47: #{double_conv.4} parent=39 // pred_region
        _
      $region48: #{double_conv.4} parent=39 // pred_fallthru
        _
    $region40: #{double_conv.4} parent=5 // pred_fallthru
      _
    %p1395 = scmp.le.s32.totalorder 2, %s13
    // Predicated region
    $region49: #{double_conv.4} parent=5 // pred_check
      %p1396 = pneg %p1395
    $region50: #{double_conv.4} parent=5 // pred_check_branch
      %1398 = sbr.rel (%p1396) target = $region52
    $region51: #{double_conv.4} parent=5 // pred_region
      %s1399 = ssub.s32 %s13, 2
      // Predicated region
      $region53: #{double_conv.4} parent=51 // pred_check
        %p1400 = pneg %p175
      $region54: #{double_conv.4} parent=51 // pred_check_branch
        %1402 = sbr.rel (%p1400) target = $region56
      $region55: #{double_conv.4} parent=51 // pred_region
        %s1403 = smul.u32 8, %s25
        %p1404 = scmp.lt.s32.totalorder %s24, 1
        %s1405 = scalar_select %p1404, %s24, 1
        %p1406 = scmp.lt.s32.totalorder %s1403, 15
        %s1407 = scalar_select %p1406, %s1403, 15
        %s1408 = smul.addr %s1407, 2
        %s1409 = smul.addr %s1405, 32
        %s1410 = sadd.s32 %s1408, %s1409
        %s1411 = smul.addr %s1410, 8
        %s1412 = scalar_lea.vmem %s5, %s1411
      $region56: #{double_conv.4} parent=51 // pred_fallthru
        _
      // Predicated region
      $region57: #{double_conv.4} parent=51 // pred_check
        %p1413 = pneg %p203
      $region58: #{double_conv.4} parent=51 // pred_check_branch
        %1415 = sbr.rel (%p1413) target = $region60
      $region59: #{double_conv.4} parent=51 // pred_region
        %p1416 = scmp.lt.s32.totalorder %s24, 1
        %s1417 = scalar_select %p1416, %s24, 1
        %p1418 = scmp.lt.s32.totalorder %s25, 1
        %s1419 = scalar_select %p1418, %s25, 1
        %s1420 = smul.addr %s1417, 2
        %s1421 = sadd.s32 %s1419, %s1420
        %s1422 = smul.addr %s1421, 2
        %s1423 = scalar_lea.vmem %s6, %s1422
      $region60: #{double_conv.4} parent=51 // pred_fallthru
        _
    $region52: #{double_conv.4} parent=5 // pred_fallthru
      _
  $region6: #{double_conv.4} parent=0 // loop_footer
    %s17 = sadd.s32 1, %s13
  $region7: #{double_conv.4} parent=0 // loop_footer_branch
    %12 = sbr.rel target = $region3
  $region8: #{double_conv.4} parent=0 // loop_exit
    _

</llo_original>
